<compile_context>
chip_gen: v7x
topology: tpu7x:2x2x1
jax: 0.10.0
libtpu: 0.0.40
codegen_flags: <defaults>
</compile_context>

<pallas_src>
import jax
import jax.numpy as jnp
from jax.experimental import pallas as pl
from jax.experimental.pallas import tpu as pltpu


# --------------------------- Pallas kernels ---------------------------------

def _conv_relu_pool_kernel(p_ref, w_ref, b_ref, o_ref):
    # p_ref: (4, tp, K) bf16 -- im2col patches, one slab per 2x2 pool position
    # w_ref: (K, 128) bf16   -- conv weights, Cout zero-padded to 128 lanes
    # b_ref: (1, 128) f32
    # o_ref: (tp, 128) bf16  -- pooled + bias + ReLU output (lane-dense store)
    four, tp, K = p_ref.shape
    p = p_ref[...].reshape(four * tp, K)          # sublane-only reshape
    acc = jnp.dot(p, w_ref[...], preferred_element_type=jnp.float32)
    pooled = jnp.max(acc.reshape(four, tp, 128), axis=0)   # VPU max over 4 slabs
    # bias is identical across the 4 positions and ReLU is monotone, so
    # pool(relu(x+b)) == relu(pool(x)+b)
    o_ref[...] = jnp.maximum(pooled + b_ref[...], 0.0).astype(o_ref.dtype)


def _fc_fused_kernel(x_ref, w1_ref, b1_ref, w2_ref, b2_ref, o_ref, acc_ref):
    # K-tiled fc1 (MXU, bf16 in / f32 acc) + ReLU, then fc2 as a VPU multiply
    # + lane reduction (avoids a 1-lane-output MXU matmul).
    k = pl.program_id(0)

    @pl.when(k == 0)
    def _():
        acc_ref[...] = jnp.zeros_like(acc_ref)

    acc_ref[...] += jnp.dot(x_ref[...], w1_ref[...],
                            preferred_element_type=jnp.float32)

    @pl.when(k == pl.num_programs(0) - 1)
    def _():
        h = jnp.maximum(acc_ref[...] + b1_ref[...], 0.0)      # (M, 128) f32
        y = jnp.sum(h * w2_ref[...], axis=-1, keepdims=True)  # (M, 1)
        o_ref[...] = (y + b2_ref[...]).astype(o_ref.dtype)


# --------------------------- tiling helpers ----------------------------------

def _pick_tile(total, bytes_per_row, min_rows=64, target_steps=4,
               vmem_budget=8 << 20):
    """Row-tile choice: multiple of 8, divides `total`, double-buffered block
    stays inside a modest VMEM budget, and gives >= target_steps grid steps
    (>= 2 per v7x TensorCore) when possible, never dropping below ~min_rows
    (per-step overhead ~0.35us)."""
    cap = max(8, (vmem_budget // (2 * max(1, bytes_per_row))) // 8 * 8)
    divs = [t for t in range(8, min(total, cap) + 1, 8) if total % t == 0]
    if not divs:
        return total
    good = [t for t in divs if total // t >= target_steps and t >= min_rows]
    if good:
        return max(good)
    two = [t for t in divs if total // t >= 2]
    if two:
        pref = [t for t in two if t >= min_rows]
        return max(pref) if pref else max(two)
    return max(divs)


# --------------------------- wrappers ----------------------------------------

def _im2col_pool_windows(x_nhwc):
    """(N,H,W,Cin) -> (4, N*Ho*Wo, Cin*9) im2col patches, grouped so the 4
    conv-output positions of each 2x2 pooling window share a window index.
    K axis is ci-major / (ky,kx)-minor, matching w_oihw.reshape(Cout, Cin*9)."""
    N, H, W, Cin = x_nhwc.shape
    Ho, Wo = H // 2, W // 2
    K = Cin * 9
    xp = jnp.pad(x_nhwc, ((0, 0), (1, 1), (1, 1), (0, 0)))
    cols = [xp[:, ky:ky + H, kx:kx + W, :] for ky in range(3) for kx in range(3)]
    pat = jnp.stack(cols, axis=-1)                  # (N, H, W, Cin, 9)
    pat = pat.reshape(N, H, W, K)                   # K index = ci*9 + ky*3 + kx
    pat = pat.reshape(N, Ho, 2, Wo, 2, K)           # row = 2*ho+dy, col = 2*wo+dx
    pat = pat.transpose(2, 4, 0, 1, 3, 5)           # (2, 2, N, Ho, Wo, K)
    return pat.reshape(4, N * Ho * Wo, K)


def conv_relu_pool(x_nhwc, w_kc, b_1c):
    """Fused 3x3 'same' conv + bias + ReLU + 2x2 maxpool.
    x: (N,H,W,Cin), w_kc: (Cin*9, 128) bf16, b_1c: (1,128) f32
    -> (N,H/2,W/2,128) bf16 (real channels first, zero padding after)."""
    N, H, W, Cin = x_nhwc.shape
    Ho, Wo = H // 2, W // 2
    K = Cin * 9
    patches = _im2col_pool_windows(x_nhwc.astype(jnp.bfloat16))   # (4, P, K) bf16
    P = N * Ho * Wo
    bytes_per_row = 4 * K * 2 + 128 * 2        # bf16 patches + bf16 output
    tp = _pick_tile(P, bytes_per_row)
    out = pl.pallas_call(
        _conv_relu_pool_kernel,
        out_shape=jax.ShapeDtypeStruct((P, 128), jnp.bfloat16),
        grid=(P // tp,),
        in_specs=[
            pl.BlockSpec((4, tp, K), lambda i: (0, i, 0)),
            pl.BlockSpec((K, 128), lambda i: (0, 0)),
            pl.BlockSpec((1, 128), lambda i: (0, 0)),
        ],
        out_specs=pl.BlockSpec((tp, 128), lambda i: (i, 0)),
        compiler_params=pltpu.CompilerParams(
            dimension_semantics=("parallel",)),
    )(patches, w_kc, b_1c)
    return out.reshape(N, Ho, Wo, 128)


def fc_fused(x, w1, b1, w2, b2, *, tk_cap=1024):
    """y = (relu(x @ w1 + b1)) @ w2^T + b2 in a single pallas_call with a
    K-tiled contraction.  x: (M, D) bf16, w1: (D, 128) bf16, b1: (1,128),
    w2: (1,128), b2: (1,1) all f32 -> (M, 1) f32."""
    M, D = x.shape
    tk = D
    for cand in range(min(tk_cap, D), 127, -128):
        if D % cand == 0:
            tk = cand
            break
    return pl.pallas_call(
        _fc_fused_kernel,
        out_shape=jax.ShapeDtypeStruct((M, 1), jnp.float32),
        grid=(D // tk,),
        in_specs=[
            pl.BlockSpec((M, tk), lambda k: (0, k)),
            pl.BlockSpec((tk, 128), lambda k: (k, 0)),
            pl.BlockSpec((1, 128), lambda k: (0, 0)),
            pl.BlockSpec((1, 128), lambda k: (0, 0)),
            pl.BlockSpec((1, 1), lambda k: (0, 0)),
        ],
        out_specs=pl.BlockSpec((M, 1), lambda k: (0, 0)),
        scratch_shapes=[pltpu.VMEM((M, 128), jnp.float32)],
        compiler_params=pltpu.CompilerParams(
            dimension_semantics=("arbitrary",)),
    )(x, w1, b1, w2, b2)


# --------------------------- parameter preparation (one-time) ----------------

def prepare_params(p):
    """Rearrange torch-layout weights once, outside the per-step forward.
    Conv OUTPUT channels are zero-padded to 128 lanes (lane-dense stores);
    contraction (K) axes stay un-padded because the wrapper slices activations
    back to their real channel counts before the next layer."""
    C1, C2, CP = 32, 64, 128
    bf16, f32 = jnp.bfloat16, jnp.float32
    # conv1: (32,3,3,3) -> (27, 128) bf16, Cout zero-padded to 128
    w1 = p["conv1_w"].reshape(C1, 3 * 3 * 3).T                    # (27, 32)
    w1 = jnp.pad(w1, ((0, 0), (0, CP - C1))).astype(bf16)         # (27, 128)
    b1 = jnp.pad(p["conv1_b"], (0, CP - C1)).reshape(1, CP).astype(f32)
    # conv2: (64,32,3,3) -> (288, 128) bf16 (contraction over 32 REAL channels)
    w2 = p["conv2_w"].reshape(C2, C1 * 9).T                       # (288, 64)
    w2 = jnp.pad(w2, ((0, 0), (0, CP - C2))).astype(bf16)         # (288, 128)
    b2 = jnp.pad(p["conv2_b"], (0, CP - C2)).reshape(1, CP).astype(f32)
    # fc1: torch flattens conv2 output as (c,h,w) over (64,8,8); our
    # activations are flattened as (h,w,c) with c = 64 real channels
    wf1 = p["fc1_w"].reshape(CP, C2, 8, 8)                        # (out, c, h, w)
    wf1 = jnp.transpose(wf1, (2, 3, 1, 0))                        # (h, w, c, out)
    wf1 = wf1.reshape(8 * 8 * C2, CP).astype(bf16)                # (4096, 128)
    bf1 = p["fc1_b"].reshape(1, CP).astype(f32)
    wf2 = p["fc2_w"].reshape(1, CP).astype(f32)                   # (1, 128)
    bf2 = p["fc2_b"].reshape(1, 1).astype(f32)
    return {"conv1_w": w1, "conv1_b": b1, "conv2_w": w2, "conv2_b": b2,
            "fc1_w": wf1, "fc1_b": bf1, "fc2_w": wf2, "fc2_b": bf2}


# --------------------------- full forward -----------------------------------

def simple_cnn_forward(x_nchw, q):
    N = x_nchw.shape[0]
    x = jnp.transpose(x_nchw, (0, 2, 3, 1))                    # NCHW -> NHWC
    x = conv_relu_pool(x, q["conv1_w"], q["conv1_b"])          # (N,16,16,128)
    x = conv_relu_pool(x[..., :32], q["conv2_w"], q["conv2_b"])  # (N,8,8,128)
    x = x[..., :64].reshape(N, 8 * 8 * 64)                     # (N, 4096) bf16
    return fc_fused(x, q["fc1_w"], q["fc1_b"], q["fc2_w"], q["fc2_b"])  # (N,1)


# --------------------------- pure-JAX reference -----------------------------

def reference_forward(x_nchw, p):
    dn = ("NCHW", "OIHW", "NCHW")
    hi = jax.lax.Precision.HIGHEST
    y = jax.lax.conv_general_dilated(x_nchw, p["conv1_w"], (1, 1),
                                     ((1, 1), (1, 1)), dimension_numbers=dn,
                                     precision=hi)
    y = jax.nn.relu(y + p["conv1_b"][None, :, None, None])
    y = jax.lax.reduce_window(y, -jnp.inf, jax.lax.max,
                              (1, 1, 2, 2), (1, 1, 2, 2), "VALID")
    y = jax.lax.conv_general_dilated(y, p["conv2_w"], (1, 1),
                                     ((1, 1), (1, 1)), dimension_numbers=dn,
                                     precision=hi)
    y = jax.nn.relu(y + p["conv2_b"][None, :, None, None])
    y = jax.lax.reduce_window(y, -jnp.inf, jax.lax.max,
                              (1, 1, 2, 2), (1, 1, 2, 2), "VALID")
    y = y.reshape(y.shape[0], -1)
    y = jax.nn.relu(jnp.dot(y, p["fc1_w"].T, precision=hi) + p["fc1_b"])
    y = jnp.dot(y, p["fc2_w"].T, precision=hi) + p["fc2_b"]
    return y


# --------------------------- params & main -----------------------------------

def init_params(key):
    ks = jax.random.split(key, 8)
    f32 = jnp.float32
    return {
        "conv1_w": 0.10 * jax.random.normal(ks[0], (32, 3, 3, 3), f32),
        "conv1_b": 0.01 * jax.random.normal(ks[1], (32,), f32),
        "conv2_w": 0.05 * jax.random.normal(ks[2], (64, 32, 3, 3), f32),
        "conv2_b": 0.01 * jax.random.normal(ks[3], (64,), f32),
        "fc1_w": 0.02 * jax.random.normal(ks[4], (128, 64 * 8 * 8), f32),
        "fc1_b": 0.01 * jax.random.normal(ks[5], (128,), f32),
        "fc2_w": 0.05 * jax.random.normal(ks[6], (1, 128), f32),
        "fc2_b": 0.01 * jax.random.normal(ks[7], (1,), f32),
    }


if __name__ == "__main__":
    key = jax.random.PRNGKey(0)
    kx, kp = jax.random.split(key)
    # fc1 expects 64*8*8 after two 2x2 pools -> 32x32 spatial input, 3 channels
    x = jax.random.normal(kx, (2, 3, 32, 32), jnp.float32)
    params = init_params(kp)
    qparams = prepare_params(params)        # one-time weight relayout/cast

    fwd = jax.jit(simple_cnn_forward)
    out = jax.block_until_ready(fwd(x, qparams))
    ref = jax.block_until_ready(reference_forward(x, params))

    assert out.shape == (2, 1), out.shape
    assert jnp.allclose(out, ref, atol=1e-2, rtol=1e-2), (out, ref)
    print("KERNEL_OK")
</pallas_src>

<mosaic_0001>
module attributes {stable_mosaic.version = 11 : i64} {
  func.func @_conv_relu_pool_kernel(%arg0: i32, %arg1: memref<4x128x27xbf16, #tpu.memory_space<vmem>>, %arg2: memref<27x128xbf16, #tpu.memory_space<vmem>>, %arg3: memref<1x128xf32, #tpu.memory_space<vmem>>, %arg4: memref<128x128xbf16, #tpu.memory_space<vmem>>) attributes {dimension_semantics = [#tpu.dimension_semantics<parallel>], iteration_bounds = array<i64: 4>, scalar_prefetch = 0 : i64, scratch_operands = 0 : i64, tpu.core_type = #tpu.core_type<tc>, window_params = [{transform_indices = @transform_0, window_bounds = array<i64: 4, 128, 27>}, {pipeline_mode = #tpu.pipeline_mode<synchronous>, transform_indices = @transform_1, window_bounds = array<i64: 27, 128>}, {pipeline_mode = #tpu.pipeline_mode<synchronous>, transform_indices = @transform_2, window_bounds = array<i64: 1, 128>}, {transform_indices = @transform_3, window_bounds = array<i64: 128, 128>}]} {
    %c0 = arith.constant 0 : index
    %c0_0 = arith.constant 0 : index
    %c0_1 = arith.constant 0 : index
    %0 = vector.load %arg1[%c0, %c0_0, %c0_1] : memref<4x128x27xbf16, #tpu.memory_space<vmem>>, vector<4x128x27xbf16>
    %1 = vector.shape_cast %0 : vector<4x128x27xbf16> to vector<512x27xbf16>
    %c0_2 = arith.constant 0 : index
    %c0_3 = arith.constant 0 : index
    %2 = vector.load %arg2[%c0_2, %c0_3] : memref<27x128xbf16, #tpu.memory_space<vmem>>, vector<27x128xbf16>
    %cst = arith.constant dense<0.000000e+00> : vector<512x128xf32>
    %3 = tpu.matmul %1, %2, %cst {dimension_numbers = #tpu.dot_dimension_numbers<[1], [0], [0], [1], [0, 0, 1, 1], [], []>} : vector<512x27xbf16>, vector<27x128xbf16>, vector<512x128xf32> -> vector<512x128xf32>
    %4 = vector.shape_cast %3 : vector<512x128xf32> to vector<4x128x128xf32>
    %cst_4 = arith.constant dense<0xFF800000> : vector<128x128xf32>
    %5 = vector.multi_reduction <maximumf>, %4, %cst_4 [0] : vector<4x128x128xf32> to vector<128x128xf32>
    %c0_5 = arith.constant 0 : index
    %c0_6 = arith.constant 0 : index
    %6 = vector.load %arg3[%c0_5, %c0_6] : memref<1x128xf32, #tpu.memory_space<vmem>>, vector<1x128xf32>
    %7 = vector.broadcast %6 : vector<1x128xf32> to vector<128x128xf32>
    %8 = arith.addf %5, %7 : vector<128x128xf32>
    %cst_7 = arith.constant 0.000000e+00 : f32
    %9 = vector.broadcast %cst_7 : f32 to vector<128x128xf32>
    %10 = arith.maximumf %8, %9 : vector<128x128xf32>
    %11 = arith.truncf %10 : vector<128x128xf32> to vector<128x128xbf16>
    %c0_8 = arith.constant 0 : index
    %c0_9 = arith.constant 0 : index
    %12 = vector.load %arg4[%c0_8, %c0_9] : memref<128x128xbf16, #tpu.memory_space<vmem>>, vector<128x128xbf16>
    tpu.vector_store %arg4[%c0_8, %c0_9], %11 {strides = array<i32>} : memref<128x128xbf16, #tpu.memory_space<vmem>>, vector<128x128xbf16>,
    return
  }
  func.func @transform_0(%arg0: i32) -> (i32, i32, i32) {
    %c0_i32 = arith.constant 0 : i32
    %c0_i32_0 = arith.constant 0 : i32
    %c0_i32_1 = arith.constant 0 : i32
    return %c0_i32, %arg0, %c0_i32_0 : i32, i32, i32
  }
  func.func @transform_1(%arg0: i32) -> (i32, i32) {
    %c0_i32 = arith.constant 0 : i32
    %c0_i32_0 = arith.constant 0 : i32
    %c0_i32_1 = arith.constant 0 : i32
    return %c0_i32, %c0_i32_0 : i32, i32
  }
  func.func @transform_2(%arg0: i32) -> (i32, i32) {
    %c0_i32 = arith.constant 0 : i32
    %c0_i32_0 = arith.constant 0 : i32
    %c0_i32_1 = arith.constant 0 : i32
    return %c0_i32, %c0_i32_0 : i32, i32
  }
  func.func @transform_3(%arg0: i32) -> (i32, i32) {
    %c0_i32 = arith.constant 0 : i32
    %c0_i32_0 = arith.constant 0 : i32
    return %arg0, %c0_i32 : i32, i32
  }
}

module attributes {stable_mosaic.version = 11 : i64} {
  func.func @_conv_relu_pool_kernel(%arg0: i32, %arg1: memref<4x64x288xbf16, #tpu.memory_space<vmem>>, %arg2: memref<288x128xbf16, #tpu.memory_space<vmem>>, %arg3: memref<1x128xf32, #tpu.memory_space<vmem>>, %arg4: memref<64x128xbf16, #tpu.memory_space<vmem>>) attributes {dimension_semantics = [#tpu.dimension_semantics<parallel>], iteration_bounds = array<i64: 2>, scalar_prefetch = 0 : i64, scratch_operands = 0 : i64, tpu.core_type = #tpu.core_type<tc>, window_params = [{transform_indices = @transform_0, window_bounds = array<i64: 4, 64, 288>}, {pipeline_mode = #tpu.pipeline_mode<synchronous>, transform_indices = @transform_1, window_bounds = array<i64: 288, 128>}, {pipeline_mode = #tpu.pipeline_mode<synchronous>, transform_indices = @transform_2, window_bounds = array<i64: 1, 128>}, {transform_indices = @transform_3, window_bounds = array<i64: 64, 128>}]} {
    %c0 = arith.constant 0 : index
    %c0_0 = arith.constant 0 : index
    %c0_1 = arith.constant 0 : index
    %0 = vector.load %arg1[%c0, %c0_0, %c0_1] : memref<4x64x288xbf16, #tpu.memory_space<vmem>>, vector<4x64x288xbf16>
    %1 = vector.shape_cast %0 : vector<4x64x288xbf16> to vector<256x288xbf16>
    %c0_2 = arith.constant 0 : index
    %c0_3 = arith.constant 0 : index
    %2 = vector.load %arg2[%c0_2, %c0_3] : memref<288x128xbf16, #tpu.memory_space<vmem>>, vector<288x128xbf16>
    %cst = arith.constant dense<0.000000e+00> : vector<256x128xf32>
    %3 = tpu.matmul %1, %2, %cst {dimension_numbers = #tpu.dot_dimension_numbers<[1], [0], [0], [1], [0, 0, 1, 1], [], []>} : vector<256x288xbf16>, vector<288x128xbf16>, vector<256x128xf32> -> vector<256x128xf32>
    %4 = vector.shape_cast %3 : vector<256x128xf32> to vector<4x64x128xf32>
    %cst_4 = arith.constant dense<0xFF800000> : vector<64x128xf32>
    %5 = vector.multi_reduction <maximumf>, %4, %cst_4 [0] : vector<4x64x128xf32> to vector<64x128xf32>
    %c0_5 = arith.constant 0 : index
    %c0_6 = arith.constant 0 : index
    %6 = vector.load %arg3[%c0_5, %c0_6] : memref<1x128xf32, #tpu.memory_space<vmem>>, vector<1x128xf32>
    %7 = vector.broadcast %6 : vector<1x128xf32> to vector<64x128xf32>
    %8 = arith.addf %5, %7 : vector<64x128xf32>
    %cst_7 = arith.constant 0.000000e+00 : f32
    %9 = vector.broadcast %cst_7 : f32 to vector<64x128xf32>
    %10 = arith.maximumf %8, %9 : vector<64x128xf32>
    %11 = arith.truncf %10 : vector<64x128xf32> to vector<64x128xbf16>
    %c0_8 = arith.constant 0 : index
    %c0_9 = arith.constant 0 : index
    %12 = vector.load %arg4[%c0_8, %c0_9] : memref<64x128xbf16, #tpu.memory_space<vmem>>, vector<64x128xbf16>
    tpu.vector_store %arg4[%c0_8, %c0_9], %11 {strides = array<i32>} : memref<64x128xbf16, #tpu.memory_space<vmem>>, vector<64x128xbf16>,
    return
  }
  func.func @transform_0(%arg0: i32) -> (i32, i32, i32) {
    %c0_i32 = arith.constant 0 : i32
    %c0_i32_0 = arith.constant 0 : i32
    %c0_i32_1 = arith.constant 0 : i32
    return %c0_i32, %arg0, %c0_i32_0 : i32, i32, i32
  }
  func.func @transform_1(%arg0: i32) -> (i32, i32) {
    %c0_i32 = arith.constant 0 : i32
    %c0_i32_0 = arith.constant 0 : i32
    %c0_i32_1 = arith.constant 0 : i32
    return %c0_i32, %c0_i32_0 : i32, i32
  }
  func.func @transform_2(%arg0: i32) -> (i32, i32) {
    %c0_i32 = arith.constant 0 : i32
    %c0_i32_0 = arith.constant 0 : i32
    %c0_i32_1 = arith.constant 0 : i32
    return %c0_i32, %c0_i32_0 : i32, i32
  }
  func.func @transform_3(%arg0: i32) -> (i32, i32) {
    %c0_i32 = arith.constant 0 : i32
    %c0_i32_0 = arith.constant 0 : i32
    return %arg0, %c0_i32 : i32, i32
  }
}

module attributes {stable_mosaic.version = 11 : i64} {
  func.func @_fc_fused_kernel(%arg0: i32, %arg1: memref<2x1024xbf16, #tpu.memory_space<vmem>>, %arg2: memref<1024x128xbf16, #tpu.memory_space<vmem>>, %arg3: memref<1x128xf32, #tpu.memory_space<vmem>>, %arg4: memref<1x128xf32, #tpu.memory_space<vmem>>, %arg5: memref<1x1xf32, #tpu.memory_space<vmem>>, %arg6: memref<2x1xf32, #tpu.memory_space<vmem>>, %arg7: memref<2x128xf32, #tpu.memory_space<vmem>>) attributes {dimension_semantics = [#tpu.dimension_semantics<arbitrary>], iteration_bounds = array<i64: 4>, scalar_prefetch = 0 : i64, scratch_operands = 1 : i64, tpu.core_type = #tpu.core_type<tc>, window_params = [{transform_indices = @transform_0, window_bounds = array<i64: 2, 1024>}, {transform_indices = @transform_1, window_bounds = array<i64: 1024, 128>}, {pipeline_mode = #tpu.pipeline_mode<synchronous>, transform_indices = @transform_2, window_bounds = array<i64: 1, 128>}, {pipeline_mode = #tpu.pipeline_mode<synchronous>, transform_indices = @transform_3, window_bounds = array<i64: 1, 128>}, {pipeline_mode = #tpu.pipeline_mode<synchronous>, transform_indices = @transform_4, window_bounds = array<i64: 1, 1>}, {pipeline_mode = #tpu.pipeline_mode<synchronous>, transform_indices = @transform_5, window_bounds = array<i64: 2, 1>}]} {
    %c0_i32 = arith.constant 0 : i32
    %0 = arith.cmpi eq, %arg0, %c0_i32 : i32
    %1 = arith.extui %0 : i1 to i32
    %c0_i32_0 = arith.constant 0 : i32
    %2 = arith.cmpi ne, %1, %c0_i32_0 : i32
    scf.if %2 {
      %cst_9 = arith.constant 0.000000e+00 : f32
      %12 = vector.broadcast %cst_9 : f32 to vector<2x128xf32>
      %c0_10 = arith.constant 0 : index
      %c0_11 = arith.constant 0 : index
      %13 = vector.load %arg7[%c0_10, %c0_11] : memref<2x128xf32, #tpu.memory_space<vmem>>, vector<2x128xf32>
      tpu.vector_store %arg7[%c0_10, %c0_11], %12 {strides = array<i32>} : memref<2x128xf32, #tpu.memory_space<vmem>>, vector<2x128xf32>,
    } else {
    }
    %c0 = arith.constant 0 : index
    %c0_1 = arith.constant 0 : index
    %3 = vector.load %arg7[%c0, %c0_1] : memref<2x128xf32, #tpu.memory_space<vmem>>, vector<2x128xf32>
    %c0_2 = arith.constant 0 : index
    %c0_3 = arith.constant 0 : index
    %4 = vector.load %arg1[%c0_2, %c0_3] : memref<2x1024xbf16, #tpu.memory_space<vmem>>, vector<2x1024xbf16>
    %c0_4 = arith.constant 0 : index
    %c0_5 = arith.constant 0 : index
    %5 = vector.load %arg2[%c0_4, %c0_5] : memref<1024x128xbf16, #tpu.memory_space<vmem>>, vector<1024x128xbf16>
    %cst = arith.constant dense<0.000000e+00> : vector<2x128xf32>
    %6 = tpu.matmul %4, %5, %cst {dimension_numbers = #tpu.dot_dimension_numbers<[1], [0], [0], [1], [0, 0, 1, 1], [], []>} : vector<2x1024xbf16>, vector<1024x128xbf16>, vector<2x128xf32> -> vector<2x128xf32>
    %7 = arith.addf %3, %6 : vector<2x128xf32>
    %c0_6 = arith.constant 0 : index
    %c0_7 = arith.constant 0 : index
    %8 = vector.load %arg7[%c0_6, %c0_7] : memref<2x128xf32, #tpu.memory_space<vmem>>, vector<2x128xf32>
    tpu.vector_store %arg7[%c0_6, %c0_7], %7 {strides = array<i32>} : memref<2x128xf32, #tpu.memory_space<vmem>>, vector<2x128xf32>,
    %c3_i32 = arith.constant 3 : i32
    %9 = arith.cmpi eq, %arg0, %c3_i32 : i32
    %10 = arith.extui %9 : i1 to i32
    %c0_i32_8 = arith.constant 0 : i32
    %11 = arith.cmpi ne, %10, %c0_i32_8 : i32
    scf.if %11 {
      %c0_9 = arith.constant 0 : index
      %c0_10 = arith.constant 0 : index
      %12 = vector.load %arg7[%c0_9, %c0_10] : memref<2x128xf32, #tpu.memory_space<vmem>>, vector<2x128xf32>
      %c0_11 = arith.constant 0 : index
      %c0_12 = arith.constant 0 : index
      %13 = vector.load %arg3[%c0_11, %c0_12] : memref<1x128xf32, #tpu.memory_space<vmem>>, vector<1x128xf32>
      %14 = vector.broadcast %13 : vector<1x128xf32> to vector<2x128xf32>
      %15 = arith.addf %12, %14 : vector<2x128xf32>
      %cst_13 = arith.constant 0.000000e+00 : f32
      %16 = vector.broadcast %cst_13 : f32 to vector<2x128xf32>
      %17 = arith.maximumf %15, %16 : vector<2x128xf32>
      %c0_14 = arith.constant 0 : index
      %c0_15 = arith.constant 0 : index
      %18 = vector.load %arg4[%c0_14, %c0_15] : memref<1x128xf32, #tpu.memory_space<vmem>>, vector<1x128xf32>
      %19 = vector.broadcast %18 : vector<1x128xf32> to vector<2x128xf32>
      %20 = arith.mulf %17, %19 : vector<2x128xf32>
      %cst_16 = arith.constant dense<0.000000e+00> : vector<2xf32>
      %21 = vector.multi_reduction <add>, %20, %cst_16 [1] : vector<2x128xf32> to vector<2xf32>
      %22 = vector.shape_cast %21 : vector<2xf32> to vector<2x1xf32>
      %c0_17 = arith.constant 0 : index
      %c0_18 = arith.constant 0 : index
      %23 = vector.load %arg5[%c0_17, %c0_18] : memref<1x1xf32, #tpu.memory_space<vmem>>, vector<1x1xf32>
      %24 = vector.broadcast %23 : vector<1x1xf32> to vector<2x1xf32>
      %25 = arith.addf %22, %24 : vector<2x1xf32>
      %c0_19 = arith.constant 0 : index
      %c0_20 = arith.constant 0 : index
      %26 = vector.load %arg6[%c0_19, %c0_20] : memref<2x1xf32, #tpu.memory_space<vmem>>, vector<2x1xf32>
      tpu.vector_store %arg6[%c0_19, %c0_20], %25 {strides = array<i32>} : memref<2x1xf32, #tpu.memory_space<vmem>>, vector<2x1xf32>,
    } else {
    }
    return
  }
  func.func @transform_0(%arg0: i32) -> (i32, i32) {
    %c0_i32 = arith.constant 0 : i32
    %c0_i32_0 = arith.constant 0 : i32
    return %c0_i32, %arg0 : i32, i32
  }
  func.func @transform_1(%arg0: i32) -> (i32, i32) {
    %c0_i32 = arith.constant 0 : i32
    %c0_i32_0 = arith.constant 0 : i32
    return %arg0, %c0_i32 : i32, i32
  }
  func.func @transform_2(%arg0: i32) -> (i32, i32) {
    %c0_i32 = arith.constant 0 : i32
    %c0_i32_0 = arith.constant 0 : i32
    %c0_i32_1 = arith.constant 0 : i32
    return %c0_i32, %c0_i32_0 : i32, i32
  }
  func.func @transform_3(%arg0: i32) -> (i32, i32) {
    %c0_i32 = arith.constant 0 : i32
    %c0_i32_0 = arith.constant 0 : i32
    %c0_i32_1 = arith.constant 0 : i32
    return %c0_i32, %c0_i32_0 : i32, i32
  }
  func.func @transform_4(%arg0: i32) -> (i32, i32) {
    %c0_i32 = arith.constant 0 : i32
    %c0_i32_0 = arith.constant 0 : i32
    %c0_i32_1 = arith.constant 0 : i32
    return %c0_i32, %c0_i32_0 : i32, i32
  }
  func.func @transform_5(%arg0: i32) -> (i32, i32) {
    %c0_i32 = arith.constant 0 : i32
    %c0_i32_0 = arith.constant 0 : i32
    %c0_i32_1 = arith.constant 0 : i32
    return %c0_i32, %c0_i32_0 : i32, i32
  }
}

</mosaic_0001>

<llo_original>
// kernel: simple_cnn_forward.3
$region0: #{simple_cnn_forward.3}
  #allocation0 [shape = 'u32[]', space=smem, size = 0x4, offset = 0x4, fixed_abs, tag = 'smem constant byte address 0x4 - core index']
  #allocation1 [shape = 'u32[144,128]{1,0:T(1,128)}', space=vmem, size = 0x12000, scoped, tag = 'internal scratch']
  %s0 = inlined_call_operand.vmem [shape: bf16[4,512,27], index: 0, kind: input, shape index: {}]
  %s1 = inlined_call_operand.vmem [shape: bf16[27,128], index: 1, kind: input, shape index: {}]
  %s2 = inlined_call_operand.vmem [shape: f32[1,128], index: 2, kind: input, shape index: {}]
  %s3 = inlined_call_operand.vmem [shape: bf16[512,128], index: 3, kind: output, shape index: {}]
  %s4 = sld [smem:[#allocation0]]
  $region86: #{simple_cnn_forward.3} parent=0
    _
  %s6 = ssub.s32 1, %s4
  %s7 = scalar_select 0, %s6, %s4
  $region1: #{simple_cnn_forward.3} parent=0
    #allocation2 [shape = 'u8[262144]{0}', space=vmem, size = 0x40000, scoped, tag = 'input window, operand 0']
    loop: start=0, step=1, limit=6
    $region2: #{simple_cnn_forward.3} parent=1 // loop_pre_header
      _
    $region3: #{simple_cnn_forward.3} parent=1 // loop_header
      %s9 = sphi 0, %s13
      %p10 = scmp.ge.s32.totalorder %s9, 6
      %s19 = sphi 0, %s21
      %s22 = sphi 0, %s19
      %s23 = sphi 0, %s22
      %s39 = sphi 0, %s23
      %s43 = sphi 0, %s43
      %s45 = sphi 0, %s43
      %s46 = sphi 0, %s45
      %s60 = sphi 0, %s46
      %s64 = sphi 0, %s64
      %s66 = sphi 0, %s64
      %s67 = sphi 0, %s66
      %s81 = sphi 0, %s67
      %s87 = sphi 0, %s89
      %s90 = sphi 0, %s87
      %s91 = sphi 0, %s90
      %s107 = sphi 0, %s91
    $region4: #{simple_cnn_forward.3} parent=1 // loop_header_branch
      %12 = sbr.rel (%p10) target = $region8
    $region5: #{simple_cnn_forward.3} parent=1 // loop_body
      %s14 = ssub.s32 %s9, 1
      %s15 = ssub.s32 %s9, 2
      %s16 = sadd.s32 %s9, 1
      %s17 = ssub.s32 %s9, %s16
      %p18 = scmp.eq.s32.totalorder %s17, 0
      %s20 = sadd.s32 %s19, 1
      %s21 = scalar_select %p18, %s19, %s20
      %p24 = pneg %p18
      %p25 = scmp.eq.s32.totalorder %s9, 3
      %p26 = por %p24, %p25
      %p27 = scmp.ne.s32.totalorder %s19, %s22
      %p28 = scmp.eq.s32.totalorder %s9, 0
      %p29 = por %p27, %p28
      %p30 = scmp.ne.s32.totalorder %s19, %s22
      %p31 = scmp.eq.s32.totalorder %s14, 3
      %p32 = por %p30, %p31
      %p33 = scmp.ne.s32.totalorder %s22, %s23
      %p34 = scmp.eq.s32.totalorder %s14, 0
      %p35 = por %p33, %p34
      %p36 = scmp.ne.s32.totalorder %s22, %s23
      %p37 = scmp.eq.s32.totalorder %s15, 3
      %p38 = por %p36, %p37
      %p40 = scmp.ne.s32.totalorder %s23, %s39
      %p41 = scmp.eq.s32.totalorder %s15, 0
      %p42 = por %p40, %p41
      %s44 = sadd.s32 %s43, 1
      %p47 = scmp.eq.s32.totalorder %s9, 3
      %p48 = scmp.ne.s32.totalorder %s43, %s45
      %p49 = scmp.eq.s32.totalorder %s9, 0
      %p50 = por %p48, %p49
      %p51 = scmp.ne.s32.totalorder %s43, %s45
      %p52 = scmp.eq.s32.totalorder %s14, 3
      %p53 = por %p51, %p52
      %p54 = scmp.ne.s32.totalorder %s45, %s46
      %p55 = scmp.eq.s32.totalorder %s14, 0
      %p56 = por %p54, %p55
      %p57 = scmp.ne.s32.totalorder %s45, %s46
      %p58 = scmp.eq.s32.totalorder %s15, 3
      %p59 = por %p57, %p58
      %p61 = scmp.ne.s32.totalorder %s46, %s60
      %p62 = scmp.eq.s32.totalorder %s15, 0
      %p63 = por %p61, %p62
      %s65 = sadd.s32 %s64, 1
      %p68 = scmp.eq.s32.totalorder %s9, 3
      %p69 = scmp.ne.s32.totalorder %s64, %s66
      %p70 = scmp.eq.s32.totalorder %s9, 0
      %p71 = por %p69, %p70
      %p72 = scmp.ne.s32.totalorder %s64, %s66
      %p73 = scmp.eq.s32.totalorder %s14, 3
      %p74 = por %p72, %p73
      %p75 = scmp.ne.s32.totalorder %s66, %s67
      %p76 = scmp.eq.s32.totalorder %s14, 0
      %p77 = por %p75, %p76
      %p78 = scmp.ne.s32.totalorder %s66, %s67
      %p79 = scmp.eq.s32.totalorder %s15, 3
      %p80 = por %p78, %p79
      %p82 = scmp.ne.s32.totalorder %s67, %s81
      %p83 = scmp.eq.s32.totalorder %s15, 0
      %p84 = por %p82, %p83
      %s85 = ssub.s32 %s9, %s16
      %p86 = scmp.eq.s32.totalorder %s85, 0
      %s88 = sadd.s32 %s87, 1
      %s89 = scalar_select %p86, %s87, %s88
      %p92 = pneg %p86
      %p93 = scmp.eq.s32.totalorder %s9, 3
      %p94 = por %p92, %p93
      %p95 = scmp.ne.s32.totalorder %s87, %s90
      %p96 = scmp.eq.s32.totalorder %s9, 0
      %p97 = por %p95, %p96
      %p98 = scmp.ne.s32.totalorder %s87, %s90
      %p99 = scmp.eq.s32.totalorder %s14, 3
      %p100 = por %p98, %p99
      %p101 = scmp.ne.s32.totalorder %s90, %s91
      %p102 = scmp.eq.s32.totalorder %s14, 0
      %p103 = por %p101, %p102
      %p104 = scmp.ne.s32.totalorder %s90, %s91
      %p105 = scmp.eq.s32.totalorder %s15, 3
      %p106 = por %p104, %p105
      %p108 = scmp.ne.s32.totalorder %s91, %s107
      %p109 = scmp.eq.s32.totalorder %s15, 0
      %p110 = por %p108, %p109
      %p111 = scmp.le.s32.totalorder 1, %s9
      %p112 = scmp.lt.s32.totalorder %s9, 5
      %p113 = pnand %p111, %p112
      %p114 = pneg %p113
      // Predicated region
      $region9: #{simple_cnn_forward.3} parent=5 // pred_check
        _
      $region10: #{simple_cnn_forward.3} parent=5 // pred_check_branch
        %116 = sbr.rel (%p113) target = $region12
      $region11: #{simple_cnn_forward.3} parent=5 // pred_region
        %s117 = ssub.s32 %s9, 1
        // Predicated region
        $region13: #{simple_cnn_forward.3} parent=11 // pred_check
          %p118 = pneg %p56
        $region14: #{simple_cnn_forward.3} parent=11 // pred_check_branch
          %120 = sbr.rel (%p118) target = $region16
        $region15: #{simple_cnn_forward.3} parent=11 // pred_region
          _
        $region16: #{simple_cnn_forward.3} parent=11 // pred_fallthru
          _
        // Predicated region
        $region17: #{simple_cnn_forward.3} parent=11 // pred_check
          %p121 = pneg %p77
        $region18: #{simple_cnn_forward.3} parent=11 // pred_check_branch
          %123 = sbr.rel (%p121) target = $region20
        $region19: #{simple_cnn_forward.3} parent=11 // pred_region
          _
        $region20: #{simple_cnn_forward.3} parent=11 // pred_fallthru
          _
      $region12: #{simple_cnn_forward.3} parent=5 // pred_fallthru
        _
      %p124 = scmp.lt.s32.totalorder %s9, 4
      // Predicated region
      $region21: #{simple_cnn_forward.3} parent=5 // pred_check
        %p125 = pneg %p124
      $region22: #{simple_cnn_forward.3} parent=5 // pred_check_branch
        %127 = sbr.rel (%p125) target = $region24
      $region23: #{simple_cnn_forward.3} parent=5 // pred_region
        // Predicated region
        $region25: #{simple_cnn_forward.3} parent=23 // pred_check
          %p128 = pneg %p29
        $region26: #{simple_cnn_forward.3} parent=23 // pred_check_branch
          %130 = sbr.rel (%p128) target = $region28
        $region27: #{simple_cnn_forward.3} parent=23 // pred_region
          %s131 = sand.u32 %s19, 1
          %s132 = sand.u32 %s19, 1
          %s133 = smul.addr %s132, 256
          %s134 = scalar_lea.vmem [#allocation2], %s133
          %s135 = smul.u32 16, %s9
          %s136 = smul.addr %s135, 4
          %s137 = scalar_lea.vmem %s0, %s136
          // Predicated region
          $region29: #{simple_cnn_forward.3} parent=27 // pred_check
            _
          $region30: #{simple_cnn_forward.3} parent=27 // pred_check_branch
            %139 = sbr.rel (0) target = $region32
          $region31: #{simple_cnn_forward.3} parent=27 // pred_region
            // Predicated region
            $region33: #{simple_cnn_forward.3} parent=31 // pred_check
              _
            $region34: #{simple_cnn_forward.3} parent=31 // pred_check_branch
              %141 = sbr.rel target = $region36
            $region35: #{simple_cnn_forward.3} parent=31 // pred_region
              // Predicated region
              $region48: #{simple_cnn_forward.3} parent=35 // pred_check
                _
              $region49: #{simple_cnn_forward.3} parent=35 // pred_check_branch
                %282 = sbr.rel (0) target = $region51
              $region50: #{simple_cnn_forward.3} parent=35 // pred_region
                loop: start=0, step=1, limit=1
                $region52: #{simple_cnn_forward.3} parent=50 // loop_pre_header
                  _
                $region53: #{simple_cnn_forward.3} parent=50 // loop_header
                  %s284 = sphi 0, %s288
                  %p285 = scmp.ge.s32.totalorder %s284, 1
                  %s289 = sphi %s137, %s137
                  %s290 = sphi %s134, %s134
                $region54: #{simple_cnn_forward.3} parent=50 // loop_header_branch
                  %287 = sbr.rel (%p285) target = $region58
                $region55: #{simple_cnn_forward.3} parent=50 // loop_body
                  _
                $region56: #{simple_cnn_forward.3} parent=50 // loop_footer
                  %s288 = sadd.s32 1, %s284
                $region57: #{simple_cnn_forward.3} parent=50 // loop_footer_branch
                  %283 = sbr.rel target = $region53
                $region58: #{simple_cnn_forward.3} parent=50 // loop_exit
                  _
                loop: start=0, step=1, limit=1
                $region59: #{simple_cnn_forward.3} parent=50 // loop_pre_header
                  _
                $region60: #{simple_cnn_forward.3} parent=50 // loop_header
                  %s293 = sphi 0, %s297
                  %p294 = scmp.ge.s32.totalorder %s293, 1
                  %s298 = sphi %s137, %s137
                  %s299 = sphi %s134, %s134
                $region61: #{simple_cnn_forward.3} parent=50 // loop_header_branch
                  %296 = sbr.rel (%p294) target = $region65
                $region62: #{simple_cnn_forward.3} parent=50 // loop_body
                  %v300 = vld [vmem:[%s298] sm:$0xf]
                  %301 = vst [vmem:[%s299] sm:$0xf] %v300
                  %v302 = vld [vmem:[%s298 + $0x4] sm:$0xf]
                  %303 = vst [vmem:[%s299 + $0x4] sm:$0xf] %v302
                  %v304 = vld [vmem:[%s298 + $0x8] sm:$0xf]
                  %305 = vst [vmem:[%s299 + $0x8] sm:$0xf] %v304
                  %v306 = vld [vmem:[%s298 + $0xc] sm:$0xf]
                  %307 = vst [vmem:[%s299 + $0xc] sm:$0xf] %v306
                  %v308 = vld [vmem:[%s298 + $0x10] sm:$0xf]
                  %309 = vst [vmem:[%s299 + $0x10] sm:$0xf] %v308
                  %v310 = vld [vmem:[%s298 + $0x14] sm:$0xf]
                  %311 = vst [vmem:[%s299 + $0x14] sm:$0xf] %v310
                  %v312 = vld [vmem:[%s298 + $0x18] sm:$0xf]
                  %313 = vst [vmem:[%s299 + $0x18] sm:$0xf] %v312
                  %v314 = vld [vmem:[%s298 + $0x1c] sm:$0xf]
                  %315 = vst [vmem:[%s299 + $0x1c] sm:$0xf] %v314
                  %v316 = vld [vmem:[%s298 + $0x20] sm:$0xf]
                  %317 = vst [vmem:[%s299 + $0x20] sm:$0xf] %v316
                  %v318 = vld [vmem:[%s298 + $0x24] sm:$0xf]
                  %319 = vst [vmem:[%s299 + $0x24] sm:$0xf] %v318
                  %v320 = vld [vmem:[%s298 + $0x28] sm:$0xf]
                  %321 = vst [vmem:[%s299 + $0x28] sm:$0xf] %v320
                  %v322 = vld [vmem:[%s298 + $0x2c] sm:$0xf]
                  %323 = vst [vmem:[%s299 + $0x2c] sm:$0xf] %v322
                  %v324 = vld [vmem:[%s298 + $0x30] sm:$0xf]
                  %325 = vst [vmem:[%s299 + $0x30] sm:$0xf] %v324
                  %v326 = vld [vmem:[%s298 + $0x34] sm:$0xf]
                  %327 = vst [vmem:[%s299 + $0x34] sm:$0xf] %v326
                  %v328 = vld [vmem:[%s298 + $0x38] sm:$0xf]
                  %329 = vst [vmem:[%s299 + $0x38] sm:$0xf] %v328
                  %v330 = vld [vmem:[%s298 + $0x3c] sm:$0xf]
                  %331 = vst [vmem:[%s299 + $0x3c] sm:$0xf] %v330
                  %v332 = vld [vmem:[%s298 + $0x100] sm:$0xf]
                  %333 = vst [vmem:[%s299 + $0x40] sm:$0xf] %v332
                  %v334 = vld [vmem:[%s298 + $0x104] sm:$0xf]
                  %335 = vst [vmem:[%s299 + $0x44] sm:$0xf] %v334
                  %v336 = vld [vmem:[%s298 + $0x108] sm:$0xf]
                  %337 = vst [vmem:[%s299 + $0x48] sm:$0xf] %v336
                  %v338 = vld [vmem:[%s298 + $0x10c] sm:$0xf]
                  %339 = vst [vmem:[%s299 + $0x4c] sm:$0xf] %v338
                  %v340 = vld [vmem:[%s298 + $0x110] sm:$0xf]
                  %341 = vst [vmem:[%s299 + $0x50] sm:$0xf] %v340
                  %v342 = vld [vmem:[%s298 + $0x114] sm:$0xf]
                  %343 = vst [vmem:[%s299 + $0x54] sm:$0xf] %v342
                  %v344 = vld [vmem:[%s298 + $0x118] sm:$0xf]
                  %345 = vst [vmem:[%s299 + $0x58] sm:$0xf] %v344
                  %v346 = vld [vmem:[%s298 + $0x11c] sm:$0xf]
                  %347 = vst [vmem:[%s299 + $0x5c] sm:$0xf] %v346
                  %v348 = vld [vmem:[%s298 + $0x120] sm:$0xf]
                  %349 = vst [vmem:[%s299 + $0x60] sm:$0xf] %v348
                  %v350 = vld [vmem:[%s298 + $0x124] sm:$0xf]
                  %351 = vst [vmem:[%s299 + $0x64] sm:$0xf] %v350
                  %v352 = vld [vmem:[%s298 + $0x128] sm:$0xf]
                  %353 = vst [vmem:[%s299 + $0x68] sm:$0xf] %v352
                  %v354 = vld [vmem:[%s298 + $0x12c] sm:$0xf]
                  %355 = vst [vmem:[%s299 + $0x6c] sm:$0xf] %v354
                  %v356 = vld [vmem:[%s298 + $0x130] sm:$0xf]
                  %357 = vst [vmem:[%s299 + $0x70] sm:$0xf] %v356
                  %v358 = vld [vmem:[%s298 + $0x134] sm:$0xf]
                  %359 = vst [vmem:[%s299 + $0x74] sm:$0xf] %v358
                  %v360 = vld [vmem:[%s298 + $0x138] sm:$0xf]
                  %361 = vst [vmem:[%s299 + $0x78] sm:$0xf] %v360
                  %v362 = vld [vmem:[%s298 + $0x13c] sm:$0xf]
                  %363 = vst [vmem:[%s299 + $0x7c] sm:$0xf] %v362
                  %v364 = vld [vmem:[%s298 + $0x200] sm:$0xf]
                  %365 = vst [vmem:[%s299 + $0x80] sm:$0xf] %v364
                  %v366 = vld [vmem:[%s298 + $0x204] sm:$0xf]
                  %367 = vst [vmem:[%s299 + $0x84] sm:$0xf] %v366
                  %v368 = vld [vmem:[%s298 + $0x208] sm:$0xf]
                  %369 = vst [vmem:[%s299 + $0x88] sm:$0xf] %v368
                  %v370 = vld [vmem:[%s298 + $0x20c] sm:$0xf]
                  %371 = vst [vmem:[%s299 + $0x8c] sm:$0xf] %v370
                  %v372 = vld [vmem:[%s298 + $0x210] sm:$0xf]
                  %373 = vst [vmem:[%s299 + $0x90] sm:$0xf] %v372
                  %v374 = vld [vmem:[%s298 + $0x214] sm:$0xf]
                  %375 = vst [vmem:[%s299 + $0x94] sm:$0xf] %v374
                  %v376 = vld [vmem:[%s298 + $0x218] sm:$0xf]
                  %377 = vst [vmem:[%s299 + $0x98] sm:$0xf] %v376
                  %v378 = vld [vmem:[%s298 + $0x21c] sm:$0xf]
                  %379 = vst [vmem:[%s299 + $0x9c] sm:$0xf] %v378
                  %v380 = vld [vmem:[%s298 + $0x220] sm:$0xf]
                  %381 = vst [vmem:[%s299 + $0xa0] sm:$0xf] %v380
                  %v382 = vld [vmem:[%s298 + $0x224] sm:$0xf]
                  %383 = vst [vmem:[%s299 + $0xa4] sm:$0xf] %v382
                  %v384 = vld [vmem:[%s298 + $0x228] sm:$0xf]
                  %385 = vst [vmem:[%s299 + $0xa8] sm:$0xf] %v384
                  %v386 = vld [vmem:[%s298 + $0x22c] sm:$0xf]
                  %387 = vst [vmem:[%s299 + $0xac] sm:$0xf] %v386
                  %v388 = vld [vmem:[%s298 + $0x230] sm:$0xf]
                  %389 = vst [vmem:[%s299 + $0xb0] sm:$0xf] %v388
                  %v390 = vld [vmem:[%s298 + $0x234] sm:$0xf]
                  %391 = vst [vmem:[%s299 + $0xb4] sm:$0xf] %v390
                  %v392 = vld [vmem:[%s298 + $0x238] sm:$0xf]
                  %393 = vst [vmem:[%s299 + $0xb8] sm:$0xf] %v392
                  %v394 = vld [vmem:[%s298 + $0x23c] sm:$0xf]
                  %395 = vst [vmem:[%s299 + $0xbc] sm:$0xf] %v394
                  %v396 = vld [vmem:[%s298 + $0x300] sm:$0xf]
                  %397 = vst [vmem:[%s299 + $0xc0] sm:$0xf] %v396
                  %v398 = vld [vmem:[%s298 + $0x304] sm:$0xf]
                  %399 = vst [vmem:[%s299 + $0xc4] sm:$0xf] %v398
                  %v400 = vld [vmem:[%s298 + $0x308] sm:$0xf]
                  %401 = vst [vmem:[%s299 + $0xc8] sm:$0xf] %v400
                  %v402 = vld [vmem:[%s298 + $0x30c] sm:$0xf]
                  %403 = vst [vmem:[%s299 + $0xcc] sm:$0xf] %v402
                  %v404 = vld [vmem:[%s298 + $0x310] sm:$0xf]
                  %405 = vst [vmem:[%s299 + $0xd0] sm:$0xf] %v404
                  %v406 = vld [vmem:[%s298 + $0x314] sm:$0xf]
                  %407 = vst [vmem:[%s299 + $0xd4] sm:$0xf] %v406
                  %v408 = vld [vmem:[%s298 + $0x318] sm:$0xf]
                  %409 = vst [vmem:[%s299 + $0xd8] sm:$0xf] %v408
                  %v410 = vld [vmem:[%s298 + $0x31c] sm:$0xf]
                  %411 = vst [vmem:[%s299 + $0xdc] sm:$0xf] %v410
                  %v412 = vld [vmem:[%s298 + $0x320] sm:$0xf]
                  %413 = vst [vmem:[%s299 + $0xe0] sm:$0xf] %v412
                  %v414 = vld [vmem:[%s298 + $0x324] sm:$0xf]
                  %415 = vst [vmem:[%s299 + $0xe4] sm:$0xf] %v414
                  %v416 = vld [vmem:[%s298 + $0x328] sm:$0xf]
                  %417 = vst [vmem:[%s299 + $0xe8] sm:$0xf] %v416
                  %v418 = vld [vmem:[%s298 + $0x32c] sm:$0xf]
                  %419 = vst [vmem:[%s299 + $0xec] sm:$0xf] %v418
                  %v420 = vld [vmem:[%s298 + $0x330] sm:$0xf]
                  %421 = vst [vmem:[%s299 + $0xf0] sm:$0xf] %v420
                  %v422 = vld [vmem:[%s298 + $0x334] sm:$0xf]
                  %423 = vst [vmem:[%s299 + $0xf4] sm:$0xf] %v422
                  %v424 = vld [vmem:[%s298 + $0x338] sm:$0xf]
                  %425 = vst [vmem:[%s299 + $0xf8] sm:$0xf] %v424
                  %v426 = vld [vmem:[%s298 + $0x33c] sm:$0xf]
                  %427 = vst [vmem:[%s299 + $0xfc] sm:$0xf] %v426
                $region63: #{simple_cnn_forward.3} parent=50 // loop_footer
                  %s297 = sadd.s32 1, %s293
                $region64: #{simple_cnn_forward.3} parent=50 // loop_footer_branch
                  %292 = sbr.rel target = $region60
                $region65: #{simple_cnn_forward.3} parent=50 // loop_exit
                  _
              $region51: #{simple_cnn_forward.3} parent=35 // pred_fallthru
                _
            $region36: #{simple_cnn_forward.3} parent=31 // pred_fallthru
              _
            // Predicated region
            $region37: #{simple_cnn_forward.3} parent=31 // pred_check
              _
            $region38: #{simple_cnn_forward.3} parent=31 // pred_check_branch
              %143 = sbr.rel (0) target = $region40
            $region39: #{simple_cnn_forward.3} parent=31 // pred_region
              loop: start=0, step=1, limit=1
              $region41: #{simple_cnn_forward.3} parent=39 // loop_pre_header
                _
              $region42: #{simple_cnn_forward.3} parent=39 // loop_header
                %s146 = sphi 0, %s150
                %p147 = scmp.ge.s32.totalorder %s146, 1
                %s151 = sphi %s137, %s137
                %s152 = sphi %s134, %s134
              $region43: #{simple_cnn_forward.3} parent=39 // loop_header_branch
                %149 = sbr.rel (%p147) target = $region47
              $region44: #{simple_cnn_forward.3} parent=39 // loop_body
                %v153 = vld [vmem:[%s151] sm:$0xf]
                %154 = vst [vmem:[%s152] sm:$0xf] %v153
                %v155 = vld [vmem:[%s151 + $0x4] sm:$0xf]
                %156 = vst [vmem:[%s152 + $0x4] sm:$0xf] %v155
                %v157 = vld [vmem:[%s151 + $0x8] sm:$0xf]
                %158 = vst [vmem:[%s152 + $0x8] sm:$0xf] %v157
                %v159 = vld [vmem:[%s151 + $0xc] sm:$0xf]
                %160 = vst [vmem:[%s152 + $0xc] sm:$0xf] %v159
                %v161 = vld [vmem:[%s151 + $0x10] sm:$0xf]
                %162 = vst [vmem:[%s152 + $0x10] sm:$0xf] %v161
                %v163 = vld [vmem:[%s151 + $0x14] sm:$0xf]
                %164 = vst [vmem:[%s152 + $0x14] sm:$0xf] %v163
                %v165 = vld [vmem:[%s151 + $0x18] sm:$0xf]
                %166 = vst [vmem:[%s152 + $0x18] sm:$0xf] %v165
                %v167 = vld [vmem:[%s151 + $0x1c] sm:$0xf]
                %168 = vst [vmem:[%s152 + $0x1c] sm:$0xf] %v167
                %v169 = vld [vmem:[%s151 + $0x20] sm:$0xf]
                %170 = vst [vmem:[%s152 + $0x20] sm:$0xf] %v169
                %v171 = vld [vmem:[%s151 + $0x24] sm:$0xf]
                %172 = vst [vmem:[%s152 + $0x24] sm:$0xf] %v171
                %v173 = vld [vmem:[%s151 + $0x28] sm:$0xf]
                %174 = vst [vmem:[%s152 + $0x28] sm:$0xf] %v173
                %v175 = vld [vmem:[%s151 + $0x2c] sm:$0xf]
                %176 = vst [vmem:[%s152 + $0x2c] sm:$0xf] %v175
                %v177 = vld [vmem:[%s151 + $0x30] sm:$0xf]
                %178 = vst [vmem:[%s152 + $0x30] sm:$0xf] %v177
                %v179 = vld [vmem:[%s151 + $0x34] sm:$0xf]
                %180 = vst [vmem:[%s152 + $0x34] sm:$0xf] %v179
                %v181 = vld [vmem:[%s151 + $0x38] sm:$0xf]
                %182 = vst [vmem:[%s152 + $0x38] sm:$0xf] %v181
                %v183 = vld [vmem:[%s151 + $0x3c] sm:$0xf]
                %184 = vst [vmem:[%s152 + $0x3c] sm:$0xf] %v183
                %v185 = vld [vmem:[%s151 + $0x100] sm:$0xf]
                %186 = vst [vmem:[%s152 + $0x40] sm:$0xf] %v185
                %v187 = vld [vmem:[%s151 + $0x104] sm:$0xf]
                %188 = vst [vmem:[%s152 + $0x44] sm:$0xf] %v187
                %v189 = vld [vmem:[%s151 + $0x108] sm:$0xf]
                %190 = vst [vmem:[%s152 + $0x48] sm:$0xf] %v189
                %v191 = vld [vmem:[%s151 + $0x10c] sm:$0xf]
                %192 = vst [vmem:[%s152 + $0x4c] sm:$0xf] %v191
                %v193 = vld [vmem:[%s151 + $0x110] sm:$0xf]
                %194 = vst [vmem:[%s152 + $0x50] sm:$0xf] %v193
                %v195 = vld [vmem:[%s151 + $0x114] sm:$0xf]
                %196 = vst [vmem:[%s152 + $0x54] sm:$0xf] %v195
                %v197 = vld [vmem:[%s151 + $0x118] sm:$0xf]
                %198 = vst [vmem:[%s152 + $0x58] sm:$0xf] %v197
                %v199 = vld [vmem:[%s151 + $0x11c] sm:$0xf]
                %200 = vst [vmem:[%s152 + $0x5c] sm:$0xf] %v199
                %v201 = vld [vmem:[%s151 + $0x120] sm:$0xf]
                %202 = vst [vmem:[%s152 + $0x60] sm:$0xf] %v201
                %v203 = vld [vmem:[%s151 + $0x124] sm:$0xf]
                %204 = vst [vmem:[%s152 + $0x64] sm:$0xf] %v203
                %v205 = vld [vmem:[%s151 + $0x128] sm:$0xf]
                %206 = vst [vmem:[%s152 + $0x68] sm:$0xf] %v205
                %v207 = vld [vmem:[%s151 + $0x12c] sm:$0xf]
                %208 = vst [vmem:[%s152 + $0x6c] sm:$0xf] %v207
                %v209 = vld [vmem:[%s151 + $0x130] sm:$0xf]
                %210 = vst [vmem:[%s152 + $0x70] sm:$0xf] %v209
                %v211 = vld [vmem:[%s151 + $0x134] sm:$0xf]
                %212 = vst [vmem:[%s152 + $0x74] sm:$0xf] %v211
                %v213 = vld [vmem:[%s151 + $0x138] sm:$0xf]
                %214 = vst [vmem:[%s152 + $0x78] sm:$0xf] %v213
                %v215 = vld [vmem:[%s151 + $0x13c] sm:$0xf]
                %216 = vst [vmem:[%s152 + $0x7c] sm:$0xf] %v215
                %v217 = vld [vmem:[%s151 + $0x200] sm:$0xf]
                %218 = vst [vmem:[%s152 + $0x80] sm:$0xf] %v217
                %v219 = vld [vmem:[%s151 + $0x204] sm:$0xf]
                %220 = vst [vmem:[%s152 + $0x84] sm:$0xf] %v219
                %v221 = vld [vmem:[%s151 + $0x208] sm:$0xf]
                %222 = vst [vmem:[%s152 + $0x88] sm:$0xf] %v221
                %v223 = vld [vmem:[%s151 + $0x20c] sm:$0xf]
                %224 = vst [vmem:[%s152 + $0x8c] sm:$0xf] %v223
                %v225 = vld [vmem:[%s151 + $0x210] sm:$0xf]
                %226 = vst [vmem:[%s152 + $0x90] sm:$0xf] %v225
                %v227 = vld [vmem:[%s151 + $0x214] sm:$0xf]
                %228 = vst [vmem:[%s152 + $0x94] sm:$0xf] %v227
                %v229 = vld [vmem:[%s151 + $0x218] sm:$0xf]
                %230 = vst [vmem:[%s152 + $0x98] sm:$0xf] %v229
                %v231 = vld [vmem:[%s151 + $0x21c] sm:$0xf]
                %232 = vst [vmem:[%s152 + $0x9c] sm:$0xf] %v231
                %v233 = vld [vmem:[%s151 + $0x220] sm:$0xf]
                %234 = vst [vmem:[%s152 + $0xa0] sm:$0xf] %v233
                %v235 = vld [vmem:[%s151 + $0x224] sm:$0xf]
                %236 = vst [vmem:[%s152 + $0xa4] sm:$0xf] %v235
                %v237 = vld [vmem:[%s151 + $0x228] sm:$0xf]
                %238 = vst [vmem:[%s152 + $0xa8] sm:$0xf] %v237
                %v239 = vld [vmem:[%s151 + $0x22c] sm:$0xf]
                %240 = vst [vmem:[%s152 + $0xac] sm:$0xf] %v239
                %v241 = vld [vmem:[%s151 + $0x230] sm:$0xf]
                %242 = vst [vmem:[%s152 + $0xb0] sm:$0xf] %v241
                %v243 = vld [vmem:[%s151 + $0x234] sm:$0xf]
                %244 = vst [vmem:[%s152 + $0xb4] sm:$0xf] %v243
                %v245 = vld [vmem:[%s151 + $0x238] sm:$0xf]
                %246 = vst [vmem:[%s152 + $0xb8] sm:$0xf] %v245
                %v247 = vld [vmem:[%s151 + $0x23c] sm:$0xf]
                %248 = vst [vmem:[%s152 + $0xbc] sm:$0xf] %v247
                %v249 = vld [vmem:[%s151 + $0x300] sm:$0xf]
                %250 = vst [vmem:[%s152 + $0xc0] sm:$0xf] %v249
                %v251 = vld [vmem:[%s151 + $0x304] sm:$0xf]
                %252 = vst [vmem:[%s152 + $0xc4] sm:$0xf] %v251
                %v253 = vld [vmem:[%s151 + $0x308] sm:$0xf]
                %254 = vst [vmem:[%s152 + $0xc8] sm:$0xf] %v253
                %v255 = vld [vmem:[%s151 + $0x30c] sm:$0xf]
                %256 = vst [vmem:[%s152 + $0xcc] sm:$0xf] %v255
                %v257 = vld [vmem:[%s151 + $0x310] sm:$0xf]
                %258 = vst [vmem:[%s152 + $0xd0] sm:$0xf] %v257
                %v259 = vld [vmem:[%s151 + $0x314] sm:$0xf]
                %260 = vst [vmem:[%s152 + $0xd4] sm:$0xf] %v259
                %v261 = vld [vmem:[%s151 + $0x318] sm:$0xf]
                %262 = vst [vmem:[%s152 + $0xd8] sm:$0xf] %v261
                %v263 = vld [vmem:[%s151 + $0x31c] sm:$0xf]
                %264 = vst [vmem:[%s152 + $0xdc] sm:$0xf] %v263
                %v265 = vld [vmem:[%s151 + $0x320] sm:$0xf]
                %266 = vst [vmem:[%s152 + $0xe0] sm:$0xf] %v265
                %v267 = vld [vmem:[%s151 + $0x324] sm:$0xf]
                %268 = vst [vmem:[%s152 + $0xe4] sm:$0xf] %v267
                %v269 = vld [vmem:[%s151 + $0x328] sm:$0xf]
                %270 = vst [vmem:[%s152 + $0xe8] sm:$0xf] %v269
                %v271 = vld [vmem:[%s151 + $0x32c] sm:$0xf]
                %272 = vst [vmem:[%s152 + $0xec] sm:$0xf] %v271
                %v273 = vld [vmem:[%s151 + $0x330] sm:$0xf]
                %274 = vst [vmem:[%s152 + $0xf0] sm:$0xf] %v273
                %v275 = vld [vmem:[%s151 + $0x334] sm:$0xf]
                %276 = vst [vmem:[%s152 + $0xf4] sm:$0xf] %v275
                %v277 = vld [vmem:[%s151 + $0x338] sm:$0xf]
                %278 = vst [vmem:[%s152 + $0xf8] sm:$0xf] %v277
                %v279 = vld [vmem:[%s151 + $0x33c] sm:$0xf]
                %280 = vst [vmem:[%s152 + $0xfc] sm:$0xf] %v279
              $region45: #{simple_cnn_forward.3} parent=39 // loop_footer
                %s150 = sadd.s32 1, %s146
              $region46: #{simple_cnn_forward.3} parent=39 // loop_footer_branch
                %145 = sbr.rel target = $region42
              $region47: #{simple_cnn_forward.3} parent=39 // loop_exit
                _
            $region40: #{simple_cnn_forward.3} parent=31 // pred_fallthru
              _
          $region32: #{simple_cnn_forward.3} parent=27 // pred_fallthru
            _
          %428 = vnop
        $region28: #{simple_cnn_forward.3} parent=23 // pred_fallthru
          _
      $region24: #{simple_cnn_forward.3} parent=5 // pred_fallthru
        _
      %p429 = scmp.le.s32.totalorder 1, %s9
      %p430 = scmp.lt.s32.totalorder %s9, 5
      %p431 = pnand %p429, %p430
      %p432 = pneg %p431
      // Predicated region
      $region66: #{simple_cnn_forward.3} parent=5 // pred_check
        _
      $region67: #{simple_cnn_forward.3} parent=5 // pred_check_branch
        %434 = sbr.rel (%p431) target = $region69
      $region68: #{simple_cnn_forward.3} parent=5 // pred_region
        %s435 = ssub.s32 %s9, 1
        %s436 = sand.u32 %s22, 1
        %s437 = sand.u32 %s22, 1
        %s438 = smul.addr %s437, 256
        %s439 = scalar_lea.vmem [#allocation2], %s438
        // Predicated region
        $region70: #{simple_cnn_forward.3} parent=68 // pred_check
          %p440 = pneg %p35
        $region71: #{simple_cnn_forward.3} parent=68 // pred_check_branch
          %442 = sbr.rel (%p440) target = $region73
        $region72: #{simple_cnn_forward.3} parent=68 // pred_region
          _
        $region73: #{simple_cnn_forward.3} parent=68 // pred_fallthru
          _
        %s443 = sand.u32 %s22, 1
        %s444 = sand.u32 %s22, 1
        %s445 = smul.addr %s444, 256
        %s446 = scalar_lea.vmem [#allocation2], %s445
        %p447 = pneg %p35
        %p448 = pneg %p32
        %p449 = pneg %p56
        %p450 = pneg %p53
        %p451 = pneg %p77
        %p452 = pneg %p74
        %p453 = pneg %p103
        %p454 = pneg %p100
        %s455 = smul.u32 16, %s14
        %p456 = scmp.lt.s32.totalorder %s455, 63
        %s457 = scalar_select %p456, %s455, 63
        %s458 = smul.addr %s457, 4
        %s459 = scalar_lea.vmem %s3, %s458
        %s460 = smul.u32 16, %s14
        %s461 = smul.u32 16, %s14
        %p462 = scmp.lt.s32.totalorder %s461, 63
        %s463 = scalar_select %p462, %s461, 63
        %s464 = smul.addr %s463, 4
        %s465 = scalar_lea.vmem %s3, %s464
        %s466 = smul.u32 16, %s14
        %v468 = vld [vmem:[%s439] sm:$0xf]
        %v469 = vld [vmem:[%s439 + $0x4] sm:$0xf]
        %v470 = vld [vmem:[%s439 + $0x8] sm:$0xf]
        %v471 = vld [vmem:[%s439 + $0xc] sm:$0xf]
        %v472 = vld [vmem:[%s439 + $0x10] sm:$0xf]
        %v473 = vld [vmem:[%s439 + $0x14] sm:$0xf]
        %v474 = vld [vmem:[%s439 + $0x18] sm:$0xf]
        %v475 = vld [vmem:[%s439 + $0x1c] sm:$0xf]
        %v476 = vld [vmem:[%s439 + $0x20] sm:$0xf]
        %v477 = vld [vmem:[%s439 + $0x24] sm:$0xf]
        %v478 = vld [vmem:[%s439 + $0x28] sm:$0xf]
        %v479 = vld [vmem:[%s439 + $0x2c] sm:$0xf]
        %v480 = vld [vmem:[%s439 + $0x30] sm:$0xf]
        %v481 = vld [vmem:[%s439 + $0x34] sm:$0xf]
        %v482 = vld [vmem:[%s439 + $0x38] sm:$0xf]
        %v483 = vld [vmem:[%s439 + $0x3c] sm:$0xf]
        %v484 = vld [vmem:[%s439 + $0x40] sm:$0xf]
        %v485 = vld [vmem:[%s439 + $0x44] sm:$0xf]
        %v486 = vld [vmem:[%s439 + $0x48] sm:$0xf]
        %v487 = vld [vmem:[%s439 + $0x4c] sm:$0xf]
        %v488 = vld [vmem:[%s439 + $0x50] sm:$0xf]
        %v489 = vld [vmem:[%s439 + $0x54] sm:$0xf]
        %v490 = vld [vmem:[%s439 + $0x58] sm:$0xf]
        %v491 = vld [vmem:[%s439 + $0x5c] sm:$0xf]
        %v492 = vld [vmem:[%s439 + $0x60] sm:$0xf]
        %v493 = vld [vmem:[%s439 + $0x64] sm:$0xf]
        %v494 = vld [vmem:[%s439 + $0x68] sm:$0xf]
        %v495 = vld [vmem:[%s439 + $0x6c] sm:$0xf]
        %v496 = vld [vmem:[%s439 + $0x70] sm:$0xf]
        %v497 = vld [vmem:[%s439 + $0x74] sm:$0xf]
        %v498 = vld [vmem:[%s439 + $0x78] sm:$0xf]
        %v499 = vld [vmem:[%s439 + $0x7c] sm:$0xf]
        %v500 = vld [vmem:[%s439 + $0x80] sm:$0xf]
        %v501 = vld [vmem:[%s439 + $0x84] sm:$0xf]
        %v502 = vld [vmem:[%s439 + $0x88] sm:$0xf]
        %v503 = vld [vmem:[%s439 + $0x8c] sm:$0xf]
        %v504 = vld [vmem:[%s439 + $0x90] sm:$0xf]
        %v505 = vld [vmem:[%s439 + $0x94] sm:$0xf]
        %v506 = vld [vmem:[%s439 + $0x98] sm:$0xf]
        %v507 = vld [vmem:[%s439 + $0x9c] sm:$0xf]
        %v508 = vld [vmem:[%s439 + $0xa0] sm:$0xf]
        %v509 = vld [vmem:[%s439 + $0xa4] sm:$0xf]
        %v510 = vld [vmem:[%s439 + $0xa8] sm:$0xf]
        %v511 = vld [vmem:[%s439 + $0xac] sm:$0xf]
        %v512 = vld [vmem:[%s439 + $0xb0] sm:$0xf]
        %v513 = vld [vmem:[%s439 + $0xb4] sm:$0xf]
        %v514 = vld [vmem:[%s439 + $0xb8] sm:$0xf]
        %v515 = vld [vmem:[%s439 + $0xbc] sm:$0xf]
        %v516 = vld [vmem:[%s439 + $0xc0] sm:$0xf]
        %v517 = vld [vmem:[%s439 + $0xc4] sm:$0xf]
        %v518 = vld [vmem:[%s439 + $0xc8] sm:$0xf]
        %v519 = vld [vmem:[%s439 + $0xcc] sm:$0xf]
        %v520 = vld [vmem:[%s439 + $0xd0] sm:$0xf]
        %v521 = vld [vmem:[%s439 + $0xd4] sm:$0xf]
        %v522 = vld [vmem:[%s439 + $0xd8] sm:$0xf]
        %v523 = vld [vmem:[%s439 + $0xdc] sm:$0xf]
        %v524 = vld [vmem:[%s439 + $0xe0] sm:$0xf]
        %v525 = vld [vmem:[%s439 + $0xe4] sm:$0xf]
        %v526 = vld [vmem:[%s439 + $0xe8] sm:$0xf]
        %v527 = vld [vmem:[%s439 + $0xec] sm:$0xf]
        %v528 = vld [vmem:[%s439 + $0xf0] sm:$0xf]
        %v529 = vld [vmem:[%s439 + $0xf4] sm:$0xf]
        %v530 = vld [vmem:[%s439 + $0xf8] sm:$0xf]
        %v531 = vld [vmem:[%s439 + $0xfc] sm:$0xf]
        %v532 = vld [vmem:[%s1] sm:$0xf]
        %v533 = vld [vmem:[%s1 + $0x4] sm:$0xf]
        %v534 = vld [vmem:[%s1 + $0x8] sm:$0xf]
        %v535 = vld [vmem:[%s1 + $0xc] sm:$0x3]
        %v600 = vunpack.c.l.b16 %v468
        %v601 = vunpack.c.l.b16 %v469
        %v602 = vunpack.c.l.b16 %v470
        %v603 = vunpack.c.l.b16 %v471
        %v604 = vunpack.c.l.b16 %v472
        %v605 = vunpack.c.l.b16 %v473
        %v606 = vunpack.c.l.b16 %v474
        %v607 = vunpack.c.l.b16 %v475
        %v608 = vunpack.c.l.b16 %v476
        %v609 = vunpack.c.l.b16 %v477
        %v610 = vunpack.c.l.b16 %v478
        %v611 = vunpack.c.l.b16 %v479
        %v612 = vunpack.c.l.b16 %v480
        %v613 = vunpack.c.l.b16 %v481
        %v614 = vunpack.c.l.b16 %v482
        %v615 = vunpack.c.l.b16 %v483
        %v616 = vunpack.c.l.b16 %v484
        %v617 = vunpack.c.l.b16 %v485
        %v618 = vunpack.c.l.b16 %v486
        %v619 = vunpack.c.l.b16 %v487
        %v620 = vunpack.c.l.b16 %v488
        %v621 = vunpack.c.l.b16 %v489
        %v622 = vunpack.c.l.b16 %v490
        %v623 = vunpack.c.l.b16 %v491
        %v624 = vunpack.c.l.b16 %v492
        %v625 = vunpack.c.l.b16 %v493
        %v626 = vunpack.c.l.b16 %v494
        %v627 = vunpack.c.l.b16 %v495
        %v628 = vunpack.c.l.b16 %v496
        %v629 = vunpack.c.l.b16 %v497
        %v630 = vunpack.c.l.b16 %v498
        %v631 = vunpack.c.l.b16 %v499
        %v632 = vunpack.c.l.b16 %v500
        %v633 = vunpack.c.l.b16 %v501
        %v634 = vunpack.c.l.b16 %v502
        %v635 = vunpack.c.l.b16 %v503
        %v636 = vunpack.c.l.b16 %v504
        %v637 = vunpack.c.l.b16 %v505
        %v638 = vunpack.c.l.b16 %v506
        %v639 = vunpack.c.l.b16 %v507
        %v640 = vunpack.c.l.b16 %v508
        %v641 = vunpack.c.l.b16 %v509
        %v642 = vunpack.c.l.b16 %v510
        %v643 = vunpack.c.l.b16 %v511
        %v644 = vunpack.c.l.b16 %v512
        %v645 = vunpack.c.l.b16 %v513
        %v646 = vunpack.c.l.b16 %v514
        %v647 = vunpack.c.l.b16 %v515
        %v648 = vunpack.c.l.b16 %v516
        %v649 = vunpack.c.l.b16 %v517
        %v650 = vunpack.c.l.b16 %v518
        %v651 = vunpack.c.l.b16 %v519
        %v652 = vunpack.c.l.b16 %v520
        %v653 = vunpack.c.l.b16 %v521
        %v654 = vunpack.c.l.b16 %v522
        %v655 = vunpack.c.l.b16 %v523
        %v656 = vunpack.c.l.b16 %v524
        %v657 = vunpack.c.l.b16 %v525
        %v658 = vunpack.c.l.b16 %v526
        %v659 = vunpack.c.l.b16 %v527
        %v660 = vunpack.c.l.b16 %v528
        %v661 = vunpack.c.l.b16 %v529
        %v662 = vunpack.c.l.b16 %v530
        %v663 = vunpack.c.l.b16 %v531
        %v664 = vpack.c.b16 %v601, %v600
        %v665 = vpack.c.b16 %v603, %v602
        %v666 = vpack.c.b16 %v605, %v604
        %v667 = vpack.c.b16 %v607, %v606
        %v668 = vpack.c.b16 %v609, %v608
        %v669 = vpack.c.b16 %v611, %v610
        %v670 = vpack.c.b16 %v613, %v612
        %v671 = vpack.c.b16 %v615, %v614
        %v672 = vpack.c.b16 %v617, %v616
        %v673 = vpack.c.b16 %v619, %v618
        %v674 = vpack.c.b16 %v621, %v620
        %v675 = vpack.c.b16 %v623, %v622
        %v676 = vpack.c.b16 %v625, %v624
        %v677 = vpack.c.b16 %v627, %v626
        %v678 = vpack.c.b16 %v629, %v628
        %v679 = vpack.c.b16 %v631, %v630
        %v680 = vpack.c.b16 %v633, %v632
        %v681 = vpack.c.b16 %v635, %v634
        %v682 = vpack.c.b16 %v637, %v636
        %v683 = vpack.c.b16 %v639, %v638
        %v684 = vpack.c.b16 %v641, %v640
        %v685 = vpack.c.b16 %v643, %v642
        %v686 = vpack.c.b16 %v645, %v644
        %v687 = vpack.c.b16 %v647, %v646
        %v688 = vpack.c.b16 %v649, %v648
        %v689 = vpack.c.b16 %v651, %v650
        %v690 = vpack.c.b16 %v653, %v652
        %v691 = vpack.c.b16 %v655, %v654
        %v692 = vpack.c.b16 %v657, %v656
        %v693 = vpack.c.b16 %v659, %v658
        %v694 = vpack.c.b16 %v661, %v660
        %v695 = vpack.c.b16 %v663, %v662
        %v700 = vunpack.c.l.b16 %v532
        %v701 = vunpack.c.l.b16 %v533
        %v702 = vunpack.c.l.b16 %v534
        %v703 = vunpack.c.l.b16 %v535
        %v704 = vpack.c.b16 %v701, %v700
        %v705 = vpack.c.b16 %v703, %v702
        %vm707 = vcmask 220160
        %v709 = vsel %vm707, %v664, 0
        %v712 = vsel %vm707, %v665, 0
        %v715 = vsel %vm707, %v666, 0
        %v718 = vsel %vm707, %v667, 0
        %v721 = vsel %vm707, %v668, 0
        %v724 = vsel %vm707, %v669, 0
        %v727 = vsel %vm707, %v670, 0
        %v730 = vsel %vm707, %v671, 0
        %v733 = vsel %vm707, %v672, 0
        %v736 = vsel %vm707, %v673, 0
        %v739 = vsel %vm707, %v674, 0
        %v742 = vsel %vm707, %v675, 0
        %v745 = vsel %vm707, %v676, 0
        %v748 = vsel %vm707, %v677, 0
        %v751 = vsel %vm707, %v678, 0
        %v754 = vsel %vm707, %v679, 0
        %v757 = vsel %vm707, %v680, 0
        %v760 = vsel %vm707, %v681, 0
        %v763 = vsel %vm707, %v682, 0
        %v766 = vsel %vm707, %v683, 0
        %v769 = vsel %vm707, %v684, 0
        %v772 = vsel %vm707, %v685, 0
        %v775 = vsel %vm707, %v686, 0
        %v778 = vsel %vm707, %v687, 0
        %v781 = vsel %vm707, %v688, 0
        %v784 = vsel %vm707, %v689, 0
        %v787 = vsel %vm707, %v690, 0
        %v790 = vsel %vm707, %v691, 0
        %v793 = vsel %vm707, %v692, 0
        %v796 = vsel %vm707, %v693, 0
        %v799 = vsel %vm707, %v694, 0
        %v802 = vsel %vm707, %v695, 0
        %vm804 = vcmask 1044480
        %vm805 = vcmask 1045504
        %v806 = vsel %vm804, 4294967295, 65535
        %v807 = vsel %vm805, %v806, 0
        %v809 = vand.u32 %v705, %v807
        %811 = vmatprep.subr.bf16.mxu0 0
        %812 = vmatpush1.bf16.msra.mxu0 %v704
        %813 = vmatprep.subr.bf16.mxu0 0
        %814 = vmatpush1.bf16.msra.mxu0 %v809
        %815 = vmatprep.subr.bf16.mxu0 0
        %816 = vmatpush1.bf16.msra.mxu0 0
        %817 = vmatprep.subr.bf16.mxu0 0
        %818 = vmatpush1.bf16.msra.mxu0 0
        %819 = vmatprep.subr.bf16.mxu0 0
        %820 = vmatpush1.bf16.msra.mxu0 0
        %821 = vmatprep.subr.bf16.mxu0 0
        %822 = vmatpush1.bf16.msra.mxu0 0
        %823 = vmatprep.subr.bf16.mxu0 0
        %824 = vmatpush1.bf16.msra.mxu0 0
        %825 = vmatprep.subr.bf16.mxu0 0
        %826 = vmatpush1.bf16.msra.mxu0 0
        %827 = vmatprep.subr.bf16.mxu0 0
        %828 = vmatpush1.bf16.msra.mxu0 0
        %829 = vmatprep.subr.bf16.mxu0 0
        %830 = vmatpush1.bf16.msra.mxu0 0
        %831 = vmatprep.subr.bf16.mxu0 0
        %832 = vmatpush1.bf16.msra.mxu0 0
        %833 = vmatprep.subr.bf16.mxu0 0
        %834 = vmatpush1.bf16.msra.mxu0 0
        %835 = vmatprep.subr.bf16.mxu0 0
        %836 = vmatpush1.bf16.msra.mxu0 0
        %837 = vmatprep.subr.bf16.mxu0 0
        %838 = vmatpush1.bf16.msra.mxu0 0
        %839 = vmatprep.subr.bf16.mxu0 0
        %840 = vmatpush1.bf16.msra.mxu0 0
        %841 = vmatprep.subr.bf16.mxu0 0
        %842 = vmatpush1.bf16.msra.mxu0 0
        %843 = vmatprep.mubr.bf16.mxu0 0
        %844 = vmatmul.mubr.bf16.gmra.mrb[0].mxu0 %v709
        %v845 = vpop.f32.mrb[0].mxu0
        %v846 = vadd.f32 0.0, %v845
        %v847 = vpop.f32.mrb[0].mxu0
        %v848 = vpop.f32.mrb[0].mxu0
        %v849 = vadd.f32 0.0, %v848
        %v850 = vpop.f32.mrb[0].mxu0
        %851 = vmatprep.mubr.bf16.mxu0 0
        %852 = vmatmul.mubr.bf16.gmra.mrb[0].mxu0 %v712
        %v853 = vpop.f32.mrb[0].mxu0
        %v854 = vadd.f32 0.0, %v853
        %v855 = vpop.f32.mrb[0].mxu0
        %v856 = vpop.f32.mrb[0].mxu0
        %v857 = vadd.f32 0.0, %v856
        %v858 = vpop.f32.mrb[0].mxu0
        %859 = vmatprep.mubr.bf16.mxu0 0
        %860 = vmatmul.mubr.bf16.gmra.mrb[0].mxu0 %v715
        %v861 = vpop.f32.mrb[0].mxu0
        %v862 = vadd.f32 0.0, %v861
        %v863 = vpop.f32.mrb[0].mxu0
        %v864 = vpop.f32.mrb[0].mxu0
        %v865 = vadd.f32 0.0, %v864
        %v866 = vpop.f32.mrb[0].mxu0
        %867 = vmatprep.mubr.bf16.mxu0 0
        %868 = vmatmul.mubr.bf16.gmra.mrb[0].mxu0 %v718
        %v869 = vpop.f32.mrb[0].mxu0
        %v870 = vadd.f32 0.0, %v869
        %v871 = vpop.f32.mrb[0].mxu0
        %v872 = vpop.f32.mrb[0].mxu0
        %v873 = vadd.f32 0.0, %v872
        %v874 = vpop.f32.mrb[0].mxu0
        %875 = vmatprep.mubr.bf16.mxu0 0
        %876 = vmatmul.mubr.bf16.gmra.mrb[0].mxu0 %v721
        %v877 = vpop.f32.mrb[0].mxu0
        %v878 = vadd.f32 0.0, %v877
        %v879 = vpop.f32.mrb[0].mxu0
        %v880 = vpop.f32.mrb[0].mxu0
        %v881 = vadd.f32 0.0, %v880
        %v882 = vpop.f32.mrb[0].mxu0
        %883 = vmatprep.mubr.bf16.mxu0 0
        %884 = vmatmul.mubr.bf16.gmra.mrb[0].mxu0 %v724
        %v885 = vpop.f32.mrb[0].mxu0
        %v886 = vadd.f32 0.0, %v885
        %v887 = vpop.f32.mrb[0].mxu0
        %v888 = vpop.f32.mrb[0].mxu0
        %v889 = vadd.f32 0.0, %v888
        %v890 = vpop.f32.mrb[0].mxu0
        %891 = vmatprep.mubr.bf16.mxu0 0
        %892 = vmatmul.mubr.bf16.gmra.mrb[0].mxu0 %v727
        %v893 = vpop.f32.mrb[0].mxu0
        %v894 = vadd.f32 0.0, %v893
        %v895 = vpop.f32.mrb[0].mxu0
        %v896 = vpop.f32.mrb[0].mxu0
        %v897 = vadd.f32 0.0, %v896
        %v898 = vpop.f32.mrb[0].mxu0
        %899 = vmatprep.mubr.bf16.mxu0 0
        %900 = vmatmul.mubr.bf16.gmra.mrb[0].mxu0 %v730
        %v901 = vpop.f32.mrb[0].mxu0
        %v902 = vadd.f32 0.0, %v901
        %v903 = vpop.f32.mrb[0].mxu0
        %v904 = vpop.f32.mrb[0].mxu0
        %v905 = vadd.f32 0.0, %v904
        %v906 = vpop.f32.mrb[0].mxu0
        %907 = vmatprep.mubr.bf16.mxu0 0
        %908 = vmatmul.mubr.bf16.gmra.mrb[0].mxu0 %v733
        %v909 = vpop.f32.mrb[0].mxu0
        %v910 = vadd.f32 0.0, %v909
        %v911 = vpop.f32.mrb[0].mxu0
        %v912 = vpop.f32.mrb[0].mxu0
        %v913 = vadd.f32 0.0, %v912
        %v914 = vpop.f32.mrb[0].mxu0
        %915 = vmatprep.mubr.bf16.mxu0 0
        %916 = vmatmul.mubr.bf16.gmra.mrb[0].mxu0 %v736
        %v917 = vpop.f32.mrb[0].mxu0
        %v918 = vadd.f32 0.0, %v917
        %v919 = vpop.f32.mrb[0].mxu0
        %v920 = vpop.f32.mrb[0].mxu0
        %v921 = vadd.f32 0.0, %v920
        %v922 = vpop.f32.mrb[0].mxu0
        %923 = vmatprep.mubr.bf16.mxu0 0
        %924 = vmatmul.mubr.bf16.gmra.mrb[0].mxu0 %v739
        %v925 = vpop.f32.mrb[0].mxu0
        %v926 = vadd.f32 0.0, %v925
        %v927 = vpop.f32.mrb[0].mxu0
        %v928 = vpop.f32.mrb[0].mxu0
        %v929 = vadd.f32 0.0, %v928
        %v930 = vpop.f32.mrb[0].mxu0
        %931 = vmatprep.mubr.bf16.mxu0 0
        %932 = vmatmul.mubr.bf16.gmra.mrb[0].mxu0 %v742
        %v933 = vpop.f32.mrb[0].mxu0
        %v934 = vadd.f32 0.0, %v933
        %v935 = vpop.f32.mrb[0].mxu0
        %v936 = vpop.f32.mrb[0].mxu0
        %v937 = vadd.f32 0.0, %v936
        %v938 = vpop.f32.mrb[0].mxu0
        %939 = vmatprep.mubr.bf16.mxu0 0
        %940 = vmatmul.mubr.bf16.gmra.mrb[0].mxu0 %v745
        %v941 = vpop.f32.mrb[0].mxu0
        %v942 = vadd.f32 0.0, %v941
        %v943 = vpop.f32.mrb[0].mxu0
        %v944 = vpop.f32.mrb[0].mxu0
        %v945 = vadd.f32 0.0, %v944
        %v946 = vpop.f32.mrb[0].mxu0
        %947 = vmatprep.mubr.bf16.mxu0 0
        %948 = vmatmul.mubr.bf16.gmra.mrb[0].mxu0 %v748
        %v949 = vpop.f32.mrb[0].mxu0
        %v950 = vadd.f32 0.0, %v949
        %v951 = vpop.f32.mrb[0].mxu0
        %v952 = vpop.f32.mrb[0].mxu0
        %v953 = vadd.f32 0.0, %v952
        %v954 = vpop.f32.mrb[0].mxu0
        %955 = vmatprep.mubr.bf16.mxu0 0
        %956 = vmatmul.mubr.bf16.gmra.mrb[0].mxu0 %v751
        %v957 = vpop.f32.mrb[0].mxu0
        %v958 = vadd.f32 0.0, %v957
        %v959 = vpop.f32.mrb[0].mxu0
        %v960 = vpop.f32.mrb[0].mxu0
        %v961 = vadd.f32 0.0, %v960
        %v962 = vpop.f32.mrb[0].mxu0
        %963 = vmatprep.mubr.bf16.mxu0 0
        %964 = vmatmul.mubr.bf16.gmra.mrb[0].mxu0 %v754
        %v965 = vpop.f32.mrb[0].mxu0
        %v966 = vadd.f32 0.0, %v965
        %v967 = vpop.f32.mrb[0].mxu0
        %v968 = vpop.f32.mrb[0].mxu0
        %v969 = vadd.f32 0.0, %v968
        %v970 = vpop.f32.mrb[0].mxu0
        %971 = vmatprep.mubr.bf16.mxu0 0
        %972 = vmatmul.mubr.bf16.gmra.mrb[0].mxu0 %v757
        %v973 = vpop.f32.mrb[0].mxu0
        %v974 = vadd.f32 0.0, %v973
        %v975 = vpop.f32.mrb[0].mxu0
        %v976 = vpop.f32.mrb[0].mxu0
        %v977 = vadd.f32 0.0, %v976
        %v978 = vpop.f32.mrb[0].mxu0
        %979 = vmatprep.mubr.bf16.mxu0 0
        %980 = vmatmul.mubr.bf16.gmra.mrb[0].mxu0 %v760
        %v981 = vpop.f32.mrb[0].mxu0
        %v982 = vadd.f32 0.0, %v981
        %v983 = vpop.f32.mrb[0].mxu0
        %v984 = vpop.f32.mrb[0].mxu0
        %v985 = vadd.f32 0.0, %v984
        %v986 = vpop.f32.mrb[0].mxu0
        %987 = vmatprep.mubr.bf16.mxu0 0
        %988 = vmatmul.mubr.bf16.gmra.mrb[0].mxu0 %v763
        %v989 = vpop.f32.mrb[0].mxu0
        %v990 = vadd.f32 0.0, %v989
        %v991 = vpop.f32.mrb[0].mxu0
        %v992 = vpop.f32.mrb[0].mxu0
        %v993 = vadd.f32 0.0, %v992
        %v994 = vpop.f32.mrb[0].mxu0
        %995 = vmatprep.mubr.bf16.mxu0 0
        %996 = vmatmul.mubr.bf16.gmra.mrb[0].mxu0 %v766
        %v997 = vpop.f32.mrb[0].mxu0
        %v998 = vadd.f32 0.0, %v997
        %v999 = vpop.f32.mrb[0].mxu0
        %v1000 = vpop.f32.mrb[0].mxu0
        %v1001 = vadd.f32 0.0, %v1000
        %v1002 = vpop.f32.mrb[0].mxu0
        %1003 = vmatprep.mubr.bf16.mxu0 0
        %1004 = vmatmul.mubr.bf16.gmra.mrb[0].mxu0 %v769
        %v1005 = vpop.f32.mrb[0].mxu0
        %v1006 = vadd.f32 0.0, %v1005
        %v1007 = vpop.f32.mrb[0].mxu0
        %v1008 = vpop.f32.mrb[0].mxu0
        %v1009 = vadd.f32 0.0, %v1008
        %v1010 = vpop.f32.mrb[0].mxu0
        %1011 = vmatprep.mubr.bf16.mxu0 0
        %1012 = vmatmul.mubr.bf16.gmra.mrb[0].mxu0 %v772
        %v1013 = vpop.f32.mrb[0].mxu0
        %v1014 = vadd.f32 0.0, %v1013
        %v1015 = vpop.f32.mrb[0].mxu0
        %v1016 = vpop.f32.mrb[0].mxu0
        %v1017 = vadd.f32 0.0, %v1016
        %v1018 = vpop.f32.mrb[0].mxu0
        %1019 = vmatprep.mubr.bf16.mxu0 0
        %1020 = vmatmul.mubr.bf16.gmra.mrb[0].mxu0 %v775
        %v1021 = vpop.f32.mrb[0].mxu0
        %v1022 = vadd.f32 0.0, %v1021
        %v1023 = vpop.f32.mrb[0].mxu0
        %v1024 = vpop.f32.mrb[0].mxu0
        %v1025 = vadd.f32 0.0, %v1024
        %v1026 = vpop.f32.mrb[0].mxu0
        %1027 = vmatprep.mubr.bf16.mxu0 0
        %1028 = vmatmul.mubr.bf16.gmra.mrb[0].mxu0 %v778
        %v1029 = vpop.f32.mrb[0].mxu0
        %v1030 = vadd.f32 0.0, %v1029
        %v1031 = vpop.f32.mrb[0].mxu0
        %v1032 = vpop.f32.mrb[0].mxu0
        %v1033 = vadd.f32 0.0, %v1032
        %v1034 = vpop.f32.mrb[0].mxu0
        %1035 = vmatprep.mubr.bf16.mxu0 0
        %1036 = vmatmul.mubr.bf16.gmra.mrb[0].mxu0 %v781
        %v1037 = vpop.f32.mrb[0].mxu0
        %v1038 = vadd.f32 0.0, %v1037
        %v1039 = vpop.f32.mrb[0].mxu0
        %v1040 = vpop.f32.mrb[0].mxu0
        %v1041 = vadd.f32 0.0, %v1040
        %v1042 = vpop.f32.mrb[0].mxu0
        %1043 = vmatprep.mubr.bf16.mxu0 0
        %1044 = vmatmul.mubr.bf16.gmra.mrb[0].mxu0 %v784
        %v1045 = vpop.f32.mrb[0].mxu0
        %v1046 = vadd.f32 0.0, %v1045
        %v1047 = vpop.f32.mrb[0].mxu0
        %v1048 = vpop.f32.mrb[0].mxu0
        %v1049 = vadd.f32 0.0, %v1048
        %v1050 = vpop.f32.mrb[0].mxu0
        %1051 = vmatprep.mubr.bf16.mxu0 0
        %1052 = vmatmul.mubr.bf16.gmra.mrb[0].mxu0 %v787
        %v1053 = vpop.f32.mrb[0].mxu0
        %v1054 = vadd.f32 0.0, %v1053
        %v1055 = vpop.f32.mrb[0].mxu0
        %v1056 = vpop.f32.mrb[0].mxu0
        %v1057 = vadd.f32 0.0, %v1056
        %v1058 = vpop.f32.mrb[0].mxu0
        %1059 = vmatprep.mubr.bf16.mxu0 0
        %1060 = vmatmul.mubr.bf16.gmra.mrb[0].mxu0 %v790
        %v1061 = vpop.f32.mrb[0].mxu0
        %v1062 = vadd.f32 0.0, %v1061
        %v1063 = vpop.f32.mrb[0].mxu0
        %v1064 = vpop.f32.mrb[0].mxu0
        %v1065 = vadd.f32 0.0, %v1064
        %v1066 = vpop.f32.mrb[0].mxu0
        %1067 = vmatprep.mubr.bf16.mxu0 0
        %1068 = vmatmul.mubr.bf16.gmra.mrb[0].mxu0 %v793
        %v1069 = vpop.f32.mrb[0].mxu0
        %v1070 = vadd.f32 0.0, %v1069
        %v1071 = vpop.f32.mrb[0].mxu0
        %v1072 = vpop.f32.mrb[0].mxu0
        %v1073 = vadd.f32 0.0, %v1072
        %v1074 = vpop.f32.mrb[0].mxu0
        %1075 = vmatprep.mubr.bf16.mxu0 0
        %1076 = vmatmul.mubr.bf16.gmra.mrb[0].mxu0 %v796
        %v1077 = vpop.f32.mrb[0].mxu0
        %v1078 = vadd.f32 0.0, %v1077
        %v1079 = vpop.f32.mrb[0].mxu0
        %v1080 = vpop.f32.mrb[0].mxu0
        %v1081 = vadd.f32 0.0, %v1080
        %v1082 = vpop.f32.mrb[0].mxu0
        %1083 = vmatprep.mubr.bf16.mxu0 0
        %1084 = vmatmul.mubr.bf16.gmra.mrb[0].mxu0 %v799
        %v1085 = vpop.f32.mrb[0].mxu0
        %v1086 = vadd.f32 0.0, %v1085
        %v1087 = vpop.f32.mrb[0].mxu0
        %v1088 = vpop.f32.mrb[0].mxu0
        %v1089 = vadd.f32 0.0, %v1088
        %v1090 = vpop.f32.mrb[0].mxu0
        %1091 = vmatprep.mubr.bf16.mxu0 0
        %1092 = vmatmul.mubr.bf16.gmra.mrb[0].mxu0 %v802
        %v1093 = vpop.f32.mrb[0].mxu0
        %v1094 = vadd.f32 0.0, %v1093
        %v1095 = vpop.f32.mrb[0].mxu0
        %v1096 = vpop.f32.mrb[0].mxu0
        %v1097 = vadd.f32 0.0, %v1096
        %v1098 = vpop.f32.mrb[0].mxu0
        %1099 = vdwg.mxu0
        %v1100 = vmax.f32 %v846, %v910
        %v1101 = vmax.f32 %v1100, %v974
        %v1102 = vmax.f32 %v1101, %v1038
        %v1103 = vmax.f32 %v849, %v913
        %v1104 = vmax.f32 %v1103, %v977
        %v1105 = vmax.f32 %v1104, %v1041
        %v1106 = vmax.f32 %v854, %v918
        %v1107 = vmax.f32 %v1106, %v982
        %v1108 = vmax.f32 %v1107, %v1046
        %v1109 = vmax.f32 %v857, %v921
        %v1110 = vmax.f32 %v1109, %v985
        %v1111 = vmax.f32 %v1110, %v1049
        %v1112 = vmax.f32 %v862, %v926
        %v1113 = vmax.f32 %v1112, %v990
        %v1114 = vmax.f32 %v1113, %v1054
        %v1115 = vmax.f32 %v865, %v929
        %v1116 = vmax.f32 %v1115, %v993
        %v1117 = vmax.f32 %v1116, %v1057
        %v1118 = vmax.f32 %v870, %v934
        %v1119 = vmax.f32 %v1118, %v998
        %v1120 = vmax.f32 %v1119, %v1062
        %v1121 = vmax.f32 %v873, %v937
        %v1122 = vmax.f32 %v1121, %v1001
        %v1123 = vmax.f32 %v1122, %v1065
        %v1124 = vmax.f32 %v878, %v942
        %v1125 = vmax.f32 %v1124, %v1006
        %v1126 = vmax.f32 %v1125, %v1070
        %v1127 = vmax.f32 %v881, %v945
        %v1128 = vmax.f32 %v1127, %v1009
        %v1129 = vmax.f32 %v1128, %v1073
        %v1130 = vmax.f32 %v886, %v950
        %v1131 = vmax.f32 %v1130, %v1014
        %v1132 = vmax.f32 %v1131, %v1078
        %v1133 = vmax.f32 %v889, %v953
        %v1134 = vmax.f32 %v1133, %v1017
        %v1135 = vmax.f32 %v1134, %v1081
        %v1136 = vmax.f32 %v894, %v958
        %v1137 = vmax.f32 %v1136, %v1022
        %v1138 = vmax.f32 %v1137, %v1086
        %v1139 = vmax.f32 %v897, %v961
        %v1140 = vmax.f32 %v1139, %v1025
        %v1141 = vmax.f32 %v1140, %v1089
        %v1142 = vmax.f32 %v902, %v966
        %v1143 = vmax.f32 %v1142, %v1030
        %v1144 = vmax.f32 %v1143, %v1094
        %v1145 = vmax.f32 %v905, %v969
        %v1146 = vmax.f32 %v1145, %v1033
        %v1147 = vmax.f32 %v1146, %v1097
        %v1148 = vld [vmem:[%s2] sm:$0x1]
        %v1150 = vlaneseq
        %v1151 = vshrl.u32 %v1150, 7
        %v1152 = vsub.s32 0, %v1151
        %v1153 = vrot.slane %v1148, %v1152
        %v1155 = vadd.f32 %v1102, %v1153
        %v1156 = vadd.f32 %v1105, %v1153
        %v1157 = vadd.f32 %v1108, %v1153
        %v1158 = vadd.f32 %v1111, %v1153
        %v1159 = vadd.f32 %v1114, %v1153
        %v1160 = vadd.f32 %v1117, %v1153
        %v1161 = vadd.f32 %v1120, %v1153
        %v1162 = vadd.f32 %v1123, %v1153
        %v1163 = vadd.f32 %v1126, %v1153
        %v1164 = vadd.f32 %v1129, %v1153
        %v1165 = vadd.f32 %v1132, %v1153
        %v1166 = vadd.f32 %v1135, %v1153
        %v1167 = vadd.f32 %v1138, %v1153
        %v1168 = vadd.f32 %v1141, %v1153
        %v1169 = vadd.f32 %v1144, %v1153
        %v1170 = vadd.f32 %v1147, %v1153
        %v1171 = vmax.f32 %v1155, 0.0
        %v1172 = vmax.f32 %v1156, 0.0
        %v1173 = vmax.f32 %v1157, 0.0
        %v1174 = vmax.f32 %v1158, 0.0
        %v1175 = vmax.f32 %v1159, 0.0
        %v1176 = vmax.f32 %v1160, 0.0
        %v1177 = vmax.f32 %v1161, 0.0
        %v1178 = vmax.f32 %v1162, 0.0
        %v1179 = vmax.f32 %v1163, 0.0
        %v1180 = vmax.f32 %v1164, 0.0
        %v1181 = vmax.f32 %v1165, 0.0
        %v1182 = vmax.f32 %v1166, 0.0
        %v1183 = vmax.f32 %v1167, 0.0
        %v1184 = vmax.f32 %v1168, 0.0
        %v1185 = vmax.f32 %v1169, 0.0
        %v1186 = vmax.f32 %v1170, 0.0
        %v1187 = vpack.c.bf16 %v1172, %v1171
        %v1188 = vpack.c.bf16 %v1174, %v1173
        %v1189 = vpack.c.bf16 %v1176, %v1175
        %v1190 = vpack.c.bf16 %v1178, %v1177
        %v1191 = vpack.c.bf16 %v1180, %v1179
        %v1192 = vpack.c.bf16 %v1182, %v1181
        %v1193 = vpack.c.bf16 %v1184, %v1183
        %v1194 = vpack.c.bf16 %v1186, %v1185
        %v1203 = vunpack.c.l.b16 %v1187
        %v1204 = vunpack.c.h.b16 %v1187
        %v1205 = vunpack.c.l.b16 %v1188
        %v1206 = vunpack.c.h.b16 %v1188
        %v1207 = vunpack.c.l.b16 %v1189
        %v1208 = vunpack.c.h.b16 %v1189
        %v1209 = vunpack.c.l.b16 %v1190
        %v1210 = vunpack.c.h.b16 %v1190
        %v1211 = vunpack.c.l.b16 %v1191
        %v1212 = vunpack.c.h.b16 %v1191
        %v1213 = vunpack.c.l.b16 %v1192
        %v1214 = vunpack.c.h.b16 %v1192
        %v1215 = vunpack.c.l.b16 %v1193
        %v1216 = vunpack.c.h.b16 %v1193
        %v1217 = vunpack.c.l.b16 %v1194
        %v1218 = vunpack.c.h.b16 %v1194
        %v1219 = vpack.c.b16 %v1203, %v1203
        %v1220 = vpack.c.b16 %v1204, %v1204
        %v1221 = vpack.c.b16 %v1205, %v1205
        %v1222 = vpack.c.b16 %v1206, %v1206
        %v1223 = vpack.c.b16 %v1207, %v1207
        %v1224 = vpack.c.b16 %v1208, %v1208
        %v1225 = vpack.c.b16 %v1209, %v1209
        %v1226 = vpack.c.b16 %v1210, %v1210
        %v1227 = vpack.c.b16 %v1211, %v1211
        %v1228 = vpack.c.b16 %v1212, %v1212
        %v1229 = vpack.c.b16 %v1213, %v1213
        %v1230 = vpack.c.b16 %v1214, %v1214
        %v1231 = vpack.c.b16 %v1215, %v1215
        %v1232 = vpack.c.b16 %v1216, %v1216
        %v1233 = vpack.c.b16 %v1217, %v1217
        %v1234 = vpack.c.b16 %v1218, %v1218
        %1251 = vst [vmem:[%s465] sm:$0xf] %v1219
        %1252 = vst [vmem:[%s465 + $0x4] sm:$0xf] %v1220
        %1253 = vst [vmem:[%s465 + $0x8] sm:$0xf] %v1221
        %1254 = vst [vmem:[%s465 + $0xc] sm:$0xf] %v1222
        %1255 = vst [vmem:[%s465 + $0x10] sm:$0xf] %v1223
        %1256 = vst [vmem:[%s465 + $0x14] sm:$0xf] %v1224
        %1257 = vst [vmem:[%s465 + $0x18] sm:$0xf] %v1225
        %1258 = vst [vmem:[%s465 + $0x1c] sm:$0xf] %v1226
        %1259 = vst [vmem:[%s465 + $0x20] sm:$0xf] %v1227
        %1260 = vst [vmem:[%s465 + $0x24] sm:$0xf] %v1228
        %1261 = vst [vmem:[%s465 + $0x28] sm:$0xf] %v1229
        %1262 = vst [vmem:[%s465 + $0x2c] sm:$0xf] %v1230
        %1263 = vst [vmem:[%s465 + $0x30] sm:$0xf] %v1231
        %1264 = vst [vmem:[%s465 + $0x34] sm:$0xf] %v1232
        %1265 = vst [vmem:[%s465 + $0x38] sm:$0xf] %v1233
        %1266 = vst [vmem:[%s465 + $0x3c] sm:$0xf] %v1234
        %s1267 = smul.u32 16, %s14
        %p1268 = scmp.lt.s32.totalorder %s1267, 63
        %s1269 = scalar_select %p1268, %s1267, 63
        %s1270 = smul.addr %s1269, 4
        %s1271 = scalar_lea.vmem %s3, %s1270
        // Predicated region
        $region74: #{simple_cnn_forward.3} parent=68 // pred_check
          %p1272 = pneg %p100
        $region75: #{simple_cnn_forward.3} parent=68 // pred_check_branch
          %1274 = sbr.rel (%p1272) target = $region77
        $region76: #{simple_cnn_forward.3} parent=68 // pred_region
          %s1275 = smul.u32 16, %s14
        $region77: #{simple_cnn_forward.3} parent=68 // pred_fallthru
          _
      $region69: #{simple_cnn_forward.3} parent=5 // pred_fallthru
        _
      %p1276 = scmp.le.s32.totalorder 2, %s9
      // Predicated region
      $region78: #{simple_cnn_forward.3} parent=5 // pred_check
        %p1277 = pneg %p1276
      $region79: #{simple_cnn_forward.3} parent=5 // pred_check_branch
        %1279 = sbr.rel (%p1277) target = $region81
      $region80: #{simple_cnn_forward.3} parent=5 // pred_region
        %s1280 = ssub.s32 %s9, 2
        // Predicated region
        $region82: #{simple_cnn_forward.3} parent=80 // pred_check
          %p1281 = pneg %p106
        $region83: #{simple_cnn_forward.3} parent=80 // pred_check_branch
          %1283 = sbr.rel (%p1281) target = $region85
        $region84: #{simple_cnn_forward.3} parent=80 // pred_region
          %s1284 = smul.u32 16, %s15
          %p1285 = scmp.lt.s32.totalorder %s1284, 63
          %s1286 = scalar_select %p1285, %s1284, 63
          %s1287 = smul.addr %s1286, 4
          %s1288 = scalar_lea.vmem %s3, %s1287
        $region85: #{simple_cnn_forward.3} parent=80 // pred_fallthru
          _
      $region81: #{simple_cnn_forward.3} parent=5 // pred_fallthru
        _
    $region6: #{simple_cnn_forward.3} parent=1 // loop_footer
      %s13 = sadd.s32 1, %s9
    $region7: #{simple_cnn_forward.3} parent=1 // loop_footer_branch
      %8 = sbr.rel target = $region3
    $region8: #{simple_cnn_forward.3} parent=1 // loop_exit
      _

// kernel: simple_cnn_forward.4
$region0: #{simple_cnn_forward.4}
  #allocation0 [shape = 'u32[]', space=smem, size = 0x4, offset = 0x4, fixed_abs, tag = 'smem constant byte address 0x4 - core index']
  #allocation1 [shape = 'u32[144,128]{1,0:T(1,128)}', space=vmem, size = 0x12000, scoped, tag = 'internal scratch']
  %s0 = inlined_call_operand.vmem [shape: bf16[4,128,288], index: 0, kind: input, shape index: {}]
  %s1 = inlined_call_operand.vmem [shape: bf16[288,128], index: 1, kind: input, shape index: {}]
  %s2 = inlined_call_operand.vmem [shape: f32[1,128], index: 2, kind: input, shape index: {}]
  %s3 = inlined_call_operand.vmem [shape: bf16[128,128], index: 3, kind: output, shape index: {}]
  %s4 = sld [smem:[#allocation0]]
  $region71: #{simple_cnn_forward.4} parent=0
    _
  %s6 = ssub.s32 1, %s4
  %s7 = scalar_select 0, %s6, %s4
  $region1: #{simple_cnn_forward.4} parent=0
    #allocation2 [shape = 'u8[393216]{0}', space=vmem, size = 0x60000, scoped, tag = 'input window, operand 0']
    loop: start=0, step=1, limit=4
    $region2: #{simple_cnn_forward.4} parent=1 // loop_pre_header
      _
    $region3: #{simple_cnn_forward.4} parent=1 // loop_header
      %s9 = sphi 0, %s13
      %p10 = scmp.ge.s32.totalorder %s9, 4
      %s19 = sphi 0, %s21
      %s22 = sphi 0, %s19
      %s23 = sphi 0, %s22
      %s39 = sphi 0, %s23
      %s43 = sphi 0, %s43
      %s45 = sphi 0, %s43
      %s46 = sphi 0, %s45
      %s60 = sphi 0, %s46
      %s64 = sphi 0, %s64
      %s66 = sphi 0, %s64
      %s67 = sphi 0, %s66
      %s81 = sphi 0, %s67
      %s87 = sphi 0, %s89
      %s90 = sphi 0, %s87
      %s91 = sphi 0, %s90
      %s107 = sphi 0, %s91
    $region4: #{simple_cnn_forward.4} parent=1 // loop_header_branch
      %12 = sbr.rel (%p10) target = $region8
    $region5: #{simple_cnn_forward.4} parent=1 // loop_body
      %s14 = ssub.s32 %s9, 1
      %s15 = ssub.s32 %s9, 2
      %s16 = sadd.s32 %s9, 1
      %s17 = ssub.s32 %s9, %s16
      %p18 = scmp.eq.s32.totalorder %s17, 0
      %s20 = sadd.s32 %s19, 1
      %s21 = scalar_select %p18, %s19, %s20
      %p24 = pneg %p18
      %p25 = scmp.eq.s32.totalorder %s9, 1
      %p26 = por %p24, %p25
      %p27 = scmp.ne.s32.totalorder %s19, %s22
      %p28 = scmp.eq.s32.totalorder %s9, 0
      %p29 = por %p27, %p28
      %p30 = scmp.ne.s32.totalorder %s19, %s22
      %p31 = scmp.eq.s32.totalorder %s14, 1
      %p32 = por %p30, %p31
      %p33 = scmp.ne.s32.totalorder %s22, %s23
      %p34 = scmp.eq.s32.totalorder %s14, 0
      %p35 = por %p33, %p34
      %p36 = scmp.ne.s32.totalorder %s22, %s23
      %p37 = scmp.eq.s32.totalorder %s15, 1
      %p38 = por %p36, %p37
      %p40 = scmp.ne.s32.totalorder %s23, %s39
      %p41 = scmp.eq.s32.totalorder %s15, 0
      %p42 = por %p40, %p41
      %s44 = sadd.s32 %s43, 1
      %p47 = scmp.eq.s32.totalorder %s9, 1
      %p48 = scmp.ne.s32.totalorder %s43, %s45
      %p49 = scmp.eq.s32.totalorder %s9, 0
      %p50 = por %p48, %p49
      %p51 = scmp.ne.s32.totalorder %s43, %s45
      %p52 = scmp.eq.s32.totalorder %s14, 1
      %p53 = por %p51, %p52
      %p54 = scmp.ne.s32.totalorder %s45, %s46
      %p55 = scmp.eq.s32.totalorder %s14, 0
      %p56 = por %p54, %p55
      %p57 = scmp.ne.s32.totalorder %s45, %s46
      %p58 = scmp.eq.s32.totalorder %s15, 1
      %p59 = por %p57, %p58
      %p61 = scmp.ne.s32.totalorder %s46, %s60
      %p62 = scmp.eq.s32.totalorder %s15, 0
      %p63 = por %p61, %p62
      %s65 = sadd.s32 %s64, 1
      %p68 = scmp.eq.s32.totalorder %s9, 1
      %p69 = scmp.ne.s32.totalorder %s64, %s66
      %p70 = scmp.eq.s32.totalorder %s9, 0
      %p71 = por %p69, %p70
      %p72 = scmp.ne.s32.totalorder %s64, %s66
      %p73 = scmp.eq.s32.totalorder %s14, 1
      %p74 = por %p72, %p73
      %p75 = scmp.ne.s32.totalorder %s66, %s67
      %p76 = scmp.eq.s32.totalorder %s14, 0
      %p77 = por %p75, %p76
      %p78 = scmp.ne.s32.totalorder %s66, %s67
      %p79 = scmp.eq.s32.totalorder %s15, 1
      %p80 = por %p78, %p79
      %p82 = scmp.ne.s32.totalorder %s67, %s81
      %p83 = scmp.eq.s32.totalorder %s15, 0
      %p84 = por %p82, %p83
      %s85 = ssub.s32 %s9, %s16
      %p86 = scmp.eq.s32.totalorder %s85, 0
      %s88 = sadd.s32 %s87, 1
      %s89 = scalar_select %p86, %s87, %s88
      %p92 = pneg %p86
      %p93 = scmp.eq.s32.totalorder %s9, 1
      %p94 = por %p92, %p93
      %p95 = scmp.ne.s32.totalorder %s87, %s90
      %p96 = scmp.eq.s32.totalorder %s9, 0
      %p97 = por %p95, %p96
      %p98 = scmp.ne.s32.totalorder %s87, %s90
      %p99 = scmp.eq.s32.totalorder %s14, 1
      %p100 = por %p98, %p99
      %p101 = scmp.ne.s32.totalorder %s90, %s91
      %p102 = scmp.eq.s32.totalorder %s14, 0
      %p103 = por %p101, %p102
      %p104 = scmp.ne.s32.totalorder %s90, %s91
      %p105 = scmp.eq.s32.totalorder %s15, 1
      %p106 = por %p104, %p105
      %p108 = scmp.ne.s32.totalorder %s91, %s107
      %p109 = scmp.eq.s32.totalorder %s15, 0
      %p110 = por %p108, %p109
      %p111 = scmp.le.s32.totalorder 1, %s9
      %p112 = scmp.lt.s32.totalorder %s9, 3
      %p113 = pnand %p111, %p112
      %p114 = pneg %p113
      // Predicated region
      $region9: #{simple_cnn_forward.4} parent=5 // pred_check
        _
      $region10: #{simple_cnn_forward.4} parent=5 // pred_check_branch
        %116 = sbr.rel (%p113) target = $region12
      $region11: #{simple_cnn_forward.4} parent=5 // pred_region
        %s117 = ssub.s32 %s9, 1
        // Predicated region
        $region13: #{simple_cnn_forward.4} parent=11 // pred_check
          %p118 = pneg %p56
        $region14: #{simple_cnn_forward.4} parent=11 // pred_check_branch
          %120 = sbr.rel (%p118) target = $region16
        $region15: #{simple_cnn_forward.4} parent=11 // pred_region
          _
        $region16: #{simple_cnn_forward.4} parent=11 // pred_fallthru
          _
        // Predicated region
        $region17: #{simple_cnn_forward.4} parent=11 // pred_check
          %p121 = pneg %p77
        $region18: #{simple_cnn_forward.4} parent=11 // pred_check_branch
          %123 = sbr.rel (%p121) target = $region20
        $region19: #{simple_cnn_forward.4} parent=11 // pred_region
          _
        $region20: #{simple_cnn_forward.4} parent=11 // pred_fallthru
          _
      $region12: #{simple_cnn_forward.4} parent=5 // pred_fallthru
        _
      %p124 = scmp.lt.s32.totalorder %s9, 2
      // Predicated region
      $region21: #{simple_cnn_forward.4} parent=5 // pred_check
        %p125 = pneg %p124
      $region22: #{simple_cnn_forward.4} parent=5 // pred_check_branch
        %127 = sbr.rel (%p125) target = $region24
      $region23: #{simple_cnn_forward.4} parent=5 // pred_region
        // Predicated region
        $region25: #{simple_cnn_forward.4} parent=23 // pred_check
          %p128 = pneg %p29
        $region26: #{simple_cnn_forward.4} parent=23 // pred_check_branch
          %130 = sbr.rel (%p128) target = $region28
        $region27: #{simple_cnn_forward.4} parent=23 // pred_region
          %s131 = sand.u32 %s19, 1
          %s132 = sand.u32 %s19, 1
          %s133 = smul.addr %s132, 384
          %s134 = scalar_lea.vmem [#allocation2], %s133
          %s135 = smul.u32 8, %s9
          %s136 = smul.addr %s135, 3
          %s137 = smul.addr %s136, 4
          %s138 = scalar_lea.vmem %s0, %s137
          // Predicated region
          $region29: #{simple_cnn_forward.4} parent=27 // pred_check
            _
          $region30: #{simple_cnn_forward.4} parent=27 // pred_check_branch
            %140 = sbr.rel (0) target = $region32
          $region31: #{simple_cnn_forward.4} parent=27 // pred_region
            // Predicated region
            $region33: #{simple_cnn_forward.4} parent=31 // pred_check
              _
            $region34: #{simple_cnn_forward.4} parent=31 // pred_check_branch
              %142 = sbr.rel (0) target = $region36
            $region35: #{simple_cnn_forward.4} parent=31 // pred_region
              %s143 = scalar_lea.vmem %s138, 8
              %s144 = scalar_lea.vmem %s134, 8 [#allocation2]
              loop: start=0, step=1, limit=1
              $region37: #{simple_cnn_forward.4} parent=35 // loop_pre_header
                _
              $region38: #{simple_cnn_forward.4} parent=35 // loop_header
                %s146 = sphi 0, %s150
                %p147 = scmp.ge.s32.totalorder %s146, 1
                %s151 = sphi %s138, %s138
                %s152 = sphi %s134, %s134
              $region39: #{simple_cnn_forward.4} parent=35 // loop_header_branch
                %149 = sbr.rel (%p147) target = $region43
              $region40: #{simple_cnn_forward.4} parent=35 // loop_body
                %v153 = vld [vmem:[%s151] sm:$0xff]
                %154 = vst [vmem:[%s152] sm:$0xff] %v153
                %v155 = vld [vmem:[%s151 + $0xc] sm:$0xff]
                %156 = vst [vmem:[%s152 + $0xc] sm:$0xff] %v155
                %v157 = vld [vmem:[%s151 + $0x18] sm:$0xff]
                %158 = vst [vmem:[%s152 + $0x18] sm:$0xff] %v157
                %v159 = vld [vmem:[%s151 + $0x24] sm:$0xff]
                %160 = vst [vmem:[%s152 + $0x24] sm:$0xff] %v159
                %v161 = vld [vmem:[%s151 + $0x30] sm:$0xff]
                %162 = vst [vmem:[%s152 + $0x30] sm:$0xff] %v161
                %v163 = vld [vmem:[%s151 + $0x3c] sm:$0xff]
                %164 = vst [vmem:[%s152 + $0x3c] sm:$0xff] %v163
                %v165 = vld [vmem:[%s151 + $0x48] sm:$0xff]
                %166 = vst [vmem:[%s152 + $0x48] sm:$0xff] %v165
                %v167 = vld [vmem:[%s151 + $0x54] sm:$0xff]
                %168 = vst [vmem:[%s152 + $0x54] sm:$0xff] %v167
                %v169 = vld [vmem:[%s151 + $0xc0] sm:$0xff]
                %170 = vst [vmem:[%s152 + $0x60] sm:$0xff] %v169
                %v171 = vld [vmem:[%s151 + $0xcc] sm:$0xff]
                %172 = vst [vmem:[%s152 + $0x6c] sm:$0xff] %v171
                %v173 = vld [vmem:[%s151 + $0xd8] sm:$0xff]
                %174 = vst [vmem:[%s152 + $0x78] sm:$0xff] %v173
                %v175 = vld [vmem:[%s151 + $0xe4] sm:$0xff]
                %176 = vst [vmem:[%s152 + $0x84] sm:$0xff] %v175
                %v177 = vld [vmem:[%s151 + $0xf0] sm:$0xff]
                %178 = vst [vmem:[%s152 + $0x90] sm:$0xff] %v177
                %v179 = vld [vmem:[%s151 + $0xfc] sm:$0xff]
                %180 = vst [vmem:[%s152 + $0x9c] sm:$0xff] %v179
                %v181 = vld [vmem:[%s151 + $0x108] sm:$0xff]
                %182 = vst [vmem:[%s152 + $0xa8] sm:$0xff] %v181
                %v183 = vld [vmem:[%s151 + $0x114] sm:$0xff]
                %184 = vst [vmem:[%s152 + $0xb4] sm:$0xff] %v183
                %v185 = vld [vmem:[%s151 + $0x180] sm:$0xff]
                %186 = vst [vmem:[%s152 + $0xc0] sm:$0xff] %v185
                %v187 = vld [vmem:[%s151 + $0x18c] sm:$0xff]
                %188 = vst [vmem:[%s152 + $0xcc] sm:$0xff] %v187
                %v189 = vld [vmem:[%s151 + $0x198] sm:$0xff]
                %190 = vst [vmem:[%s152 + $0xd8] sm:$0xff] %v189
                %v191 = vld [vmem:[%s151 + $0x1a4] sm:$0xff]
                %192 = vst [vmem:[%s152 + $0xe4] sm:$0xff] %v191
                %v193 = vld [vmem:[%s151 + $0x1b0] sm:$0xff]
                %194 = vst [vmem:[%s152 + $0xf0] sm:$0xff] %v193
                %v195 = vld [vmem:[%s151 + $0x1bc] sm:$0xff]
                %196 = vst [vmem:[%s152 + $0xfc] sm:$0xff] %v195
                %v197 = vld [vmem:[%s151 + $0x1c8] sm:$0xff]
                %198 = vst [vmem:[%s152 + $0x108] sm:$0xff] %v197
                %v199 = vld [vmem:[%s151 + $0x1d4] sm:$0xff]
                %200 = vst [vmem:[%s152 + $0x114] sm:$0xff] %v199
                %v201 = vld [vmem:[%s151 + $0x240] sm:$0xff]
                %202 = vst [vmem:[%s152 + $0x120] sm:$0xff] %v201
                %v203 = vld [vmem:[%s151 + $0x24c] sm:$0xff]
                %204 = vst [vmem:[%s152 + $0x12c] sm:$0xff] %v203
                %v205 = vld [vmem:[%s151 + $0x258] sm:$0xff]
                %206 = vst [vmem:[%s152 + $0x138] sm:$0xff] %v205
                %v207 = vld [vmem:[%s151 + $0x264] sm:$0xff]
                %208 = vst [vmem:[%s152 + $0x144] sm:$0xff] %v207
                %v209 = vld [vmem:[%s151 + $0x270] sm:$0xff]
                %210 = vst [vmem:[%s152 + $0x150] sm:$0xff] %v209
                %v211 = vld [vmem:[%s151 + $0x27c] sm:$0xff]
                %212 = vst [vmem:[%s152 + $0x15c] sm:$0xff] %v211
                %v213 = vld [vmem:[%s151 + $0x288] sm:$0xff]
                %214 = vst [vmem:[%s152 + $0x168] sm:$0xff] %v213
                %v215 = vld [vmem:[%s151 + $0x294] sm:$0xff]
                %216 = vst [vmem:[%s152 + $0x174] sm:$0xff] %v215
              $region41: #{simple_cnn_forward.4} parent=35 // loop_footer
                %s150 = sadd.s32 1, %s146
              $region42: #{simple_cnn_forward.4} parent=35 // loop_footer_branch
                %145 = sbr.rel target = $region38
              $region43: #{simple_cnn_forward.4} parent=35 // loop_exit
                _
              loop: start=0, step=1, limit=1
              $region44: #{simple_cnn_forward.4} parent=35 // loop_pre_header
                _
              $region45: #{simple_cnn_forward.4} parent=35 // loop_header
                %s219 = sphi 0, %s223
                %p220 = scmp.ge.s32.totalorder %s219, 1
                %s224 = sphi %s143, %s143
                %s225 = sphi %s144, %s144
              $region46: #{simple_cnn_forward.4} parent=35 // loop_header_branch
                %222 = sbr.rel (%p220) target = $region50
              $region47: #{simple_cnn_forward.4} parent=35 // loop_body
                %v226 = vld [vmem:[%s224] sm:$0xf]
                %227 = vst [vmem:[%s225] sm:$0xf] %v226
                %v228 = vld [vmem:[%s224 + $0xc] sm:$0xf]
                %229 = vst [vmem:[%s225 + $0xc] sm:$0xf] %v228
                %v230 = vld [vmem:[%s224 + $0x18] sm:$0xf]
                %231 = vst [vmem:[%s225 + $0x18] sm:$0xf] %v230
                %v232 = vld [vmem:[%s224 + $0x24] sm:$0xf]
                %233 = vst [vmem:[%s225 + $0x24] sm:$0xf] %v232
                %v234 = vld [vmem:[%s224 + $0x30] sm:$0xf]
                %235 = vst [vmem:[%s225 + $0x30] sm:$0xf] %v234
                %v236 = vld [vmem:[%s224 + $0x3c] sm:$0xf]
                %237 = vst [vmem:[%s225 + $0x3c] sm:$0xf] %v236
                %v238 = vld [vmem:[%s224 + $0x48] sm:$0xf]
                %239 = vst [vmem:[%s225 + $0x48] sm:$0xf] %v238
                %v240 = vld [vmem:[%s224 + $0x54] sm:$0xf]
                %241 = vst [vmem:[%s225 + $0x54] sm:$0xf] %v240
                %v242 = vld [vmem:[%s224 + $0xc0] sm:$0xf]
                %243 = vst [vmem:[%s225 + $0x60] sm:$0xf] %v242
                %v244 = vld [vmem:[%s224 + $0xcc] sm:$0xf]
                %245 = vst [vmem:[%s225 + $0x6c] sm:$0xf] %v244
                %v246 = vld [vmem:[%s224 + $0xd8] sm:$0xf]
                %247 = vst [vmem:[%s225 + $0x78] sm:$0xf] %v246
                %v248 = vld [vmem:[%s224 + $0xe4] sm:$0xf]
                %249 = vst [vmem:[%s225 + $0x84] sm:$0xf] %v248
                %v250 = vld [vmem:[%s224 + $0xf0] sm:$0xf]
                %251 = vst [vmem:[%s225 + $0x90] sm:$0xf] %v250
                %v252 = vld [vmem:[%s224 + $0xfc] sm:$0xf]
                %253 = vst [vmem:[%s225 + $0x9c] sm:$0xf] %v252
                %v254 = vld [vmem:[%s224 + $0x108] sm:$0xf]
                %255 = vst [vmem:[%s225 + $0xa8] sm:$0xf] %v254
                %v256 = vld [vmem:[%s224 + $0x114] sm:$0xf]
                %257 = vst [vmem:[%s225 + $0xb4] sm:$0xf] %v256
                %v258 = vld [vmem:[%s224 + $0x180] sm:$0xf]
                %259 = vst [vmem:[%s225 + $0xc0] sm:$0xf] %v258
                %v260 = vld [vmem:[%s224 + $0x18c] sm:$0xf]
                %261 = vst [vmem:[%s225 + $0xcc] sm:$0xf] %v260
                %v262 = vld [vmem:[%s224 + $0x198] sm:$0xf]
                %263 = vst [vmem:[%s225 + $0xd8] sm:$0xf] %v262
                %v264 = vld [vmem:[%s224 + $0x1a4] sm:$0xf]
                %265 = vst [vmem:[%s225 + $0xe4] sm:$0xf] %v264
                %v266 = vld [vmem:[%s224 + $0x1b0] sm:$0xf]
                %267 = vst [vmem:[%s225 + $0xf0] sm:$0xf] %v266
                %v268 = vld [vmem:[%s224 + $0x1bc] sm:$0xf]
                %269 = vst [vmem:[%s225 + $0xfc] sm:$0xf] %v268
                %v270 = vld [vmem:[%s224 + $0x1c8] sm:$0xf]
                %271 = vst [vmem:[%s225 + $0x108] sm:$0xf] %v270
                %v272 = vld [vmem:[%s224 + $0x1d4] sm:$0xf]
                %273 = vst [vmem:[%s225 + $0x114] sm:$0xf] %v272
                %v274 = vld [vmem:[%s224 + $0x240] sm:$0xf]
                %275 = vst [vmem:[%s225 + $0x120] sm:$0xf] %v274
                %v276 = vld [vmem:[%s224 + $0x24c] sm:$0xf]
                %277 = vst [vmem:[%s225 + $0x12c] sm:$0xf] %v276
                %v278 = vld [vmem:[%s224 + $0x258] sm:$0xf]
                %279 = vst [vmem:[%s225 + $0x138] sm:$0xf] %v278
                %v280 = vld [vmem:[%s224 + $0x264] sm:$0xf]
                %281 = vst [vmem:[%s225 + $0x144] sm:$0xf] %v280
                %v282 = vld [vmem:[%s224 + $0x270] sm:$0xf]
                %283 = vst [vmem:[%s225 + $0x150] sm:$0xf] %v282
                %v284 = vld [vmem:[%s224 + $0x27c] sm:$0xf]
                %285 = vst [vmem:[%s225 + $0x15c] sm:$0xf] %v284
                %v286 = vld [vmem:[%s224 + $0x288] sm:$0xf]
                %287 = vst [vmem:[%s225 + $0x168] sm:$0xf] %v286
                %v288 = vld [vmem:[%s224 + $0x294] sm:$0xf]
                %289 = vst [vmem:[%s225 + $0x174] sm:$0xf] %v288
              $region48: #{simple_cnn_forward.4} parent=35 // loop_footer
                %s223 = sadd.s32 1, %s219
              $region49: #{simple_cnn_forward.4} parent=35 // loop_footer_branch
                %218 = sbr.rel target = $region45
              $region50: #{simple_cnn_forward.4} parent=35 // loop_exit
                _
            $region36: #{simple_cnn_forward.4} parent=31 // pred_fallthru
              _
          $region32: #{simple_cnn_forward.4} parent=27 // pred_fallthru
            _
          %290 = vnop
        $region28: #{simple_cnn_forward.4} parent=23 // pred_fallthru
          _
      $region24: #{simple_cnn_forward.4} parent=5 // pred_fallthru
        _
      %p291 = scmp.le.s32.totalorder 1, %s9
      %p292 = scmp.lt.s32.totalorder %s9, 3
      %p293 = pnand %p291, %p292
      %p294 = pneg %p293
      // Predicated region
      $region51: #{simple_cnn_forward.4} parent=5 // pred_check
        _
      $region52: #{simple_cnn_forward.4} parent=5 // pred_check_branch
        %296 = sbr.rel (%p293) target = $region54
      $region53: #{simple_cnn_forward.4} parent=5 // pred_region
        %s297 = ssub.s32 %s9, 1
        %s298 = sand.u32 %s22, 1
        %s299 = sand.u32 %s22, 1
        %s300 = smul.addr %s299, 384
        %s301 = scalar_lea.vmem [#allocation2], %s300
        // Predicated region
        $region55: #{simple_cnn_forward.4} parent=53 // pred_check
          %p302 = pneg %p35
        $region56: #{simple_cnn_forward.4} parent=53 // pred_check_branch
          %304 = sbr.rel (%p302) target = $region58
        $region57: #{simple_cnn_forward.4} parent=53 // pred_region
          _
        $region58: #{simple_cnn_forward.4} parent=53 // pred_fallthru
          _
        %s305 = sand.u32 %s22, 1
        %s306 = sand.u32 %s22, 1
        %s307 = smul.addr %s306, 384
        %s308 = scalar_lea.vmem [#allocation2], %s307
        %p309 = pneg %p35
        %p310 = pneg %p32
        %p311 = pneg %p56
        %p312 = pneg %p53
        %p313 = pneg %p77
        %p314 = pneg %p74
        %p315 = pneg %p103
        %p316 = pneg %p100
        %s317 = smul.u32 8, %s14
        %p318 = scmp.lt.s32.totalorder %s317, 15
        %s319 = scalar_select %p318, %s317, 15
        %s320 = smul.addr %s319, 4
        %s321 = scalar_lea.vmem %s3, %s320
        %s322 = smul.u32 8, %s14
        %s323 = smul.u32 8, %s14
        %p324 = scmp.lt.s32.totalorder %s323, 15
        %s325 = scalar_select %p324, %s323, 15
        %s326 = smul.addr %s325, 4
        %s327 = scalar_lea.vmem %s3, %s326
        %s328 = smul.u32 8, %s14
        %v330 = vld [vmem:[%s301] sm:$0xff]
        %v331 = vld [vmem:[%s301 + $0x8] sm:$0xf]
        %v332 = vld [vmem:[%s301 + $0xc] sm:$0xff]
        %v333 = vld [vmem:[%s301 + $0x14] sm:$0xf]
        %v334 = vld [vmem:[%s301 + $0x18] sm:$0xff]
        %v335 = vld [vmem:[%s301 + $0x20] sm:$0xf]
        %v336 = vld [vmem:[%s301 + $0x24] sm:$0xff]
        %v337 = vld [vmem:[%s301 + $0x2c] sm:$0xf]
        %v338 = vld [vmem:[%s301 + $0x30] sm:$0xff]
        %v339 = vld [vmem:[%s301 + $0x38] sm:$0xf]
        %v340 = vld [vmem:[%s301 + $0x3c] sm:$0xff]
        %v341 = vld [vmem:[%s301 + $0x44] sm:$0xf]
        %v342 = vld [vmem:[%s301 + $0x48] sm:$0xff]
        %v343 = vld [vmem:[%s301 + $0x50] sm:$0xf]
        %v344 = vld [vmem:[%s301 + $0x54] sm:$0xff]
        %v345 = vld [vmem:[%s301 + $0x5c] sm:$0xf]
        %v346 = vld [vmem:[%s301 + $0x60] sm:$0xff]
        %v347 = vld [vmem:[%s301 + $0x68] sm:$0xf]
        %v348 = vld [vmem:[%s301 + $0x6c] sm:$0xff]
        %v349 = vld [vmem:[%s301 + $0x74] sm:$0xf]
        %v350 = vld [vmem:[%s301 + $0x78] sm:$0xff]
        %v351 = vld [vmem:[%s301 + $0x80] sm:$0xf]
        %v352 = vld [vmem:[%s301 + $0x84] sm:$0xff]
        %v353 = vld [vmem:[%s301 + $0x8c] sm:$0xf]
        %v354 = vld [vmem:[%s301 + $0x90] sm:$0xff]
        %v355 = vld [vmem:[%s301 + $0x98] sm:$0xf]
        %v356 = vld [vmem:[%s301 + $0x9c] sm:$0xff]
        %v357 = vld [vmem:[%s301 + $0xa4] sm:$0xf]
        %v358 = vld [vmem:[%s301 + $0xa8] sm:$0xff]
        %v359 = vld [vmem:[%s301 + $0xb0] sm:$0xf]
        %v360 = vld [vmem:[%s301 + $0xb4] sm:$0xff]
        %v361 = vld [vmem:[%s301 + $0xbc] sm:$0xf]
        %v362 = vld [vmem:[%s301 + $0xc0] sm:$0xff]
        %v363 = vld [vmem:[%s301 + $0xc8] sm:$0xf]
        %v364 = vld [vmem:[%s301 + $0xcc] sm:$0xff]
        %v365 = vld [vmem:[%s301 + $0xd4] sm:$0xf]
        %v366 = vld [vmem:[%s301 + $0xd8] sm:$0xff]
        %v367 = vld [vmem:[%s301 + $0xe0] sm:$0xf]
        %v368 = vld [vmem:[%s301 + $0xe4] sm:$0xff]
        %v369 = vld [vmem:[%s301 + $0xec] sm:$0xf]
        %v370 = vld [vmem:[%s301 + $0xf0] sm:$0xff]
        %v371 = vld [vmem:[%s301 + $0xf8] sm:$0xf]
        %v372 = vld [vmem:[%s301 + $0xfc] sm:$0xff]
        %v373 = vld [vmem:[%s301 + $0x104] sm:$0xf]
        %v374 = vld [vmem:[%s301 + $0x108] sm:$0xff]
        %v375 = vld [vmem:[%s301 + $0x110] sm:$0xf]
        %v376 = vld [vmem:[%s301 + $0x114] sm:$0xff]
        %v377 = vld [vmem:[%s301 + $0x11c] sm:$0xf]
        %v378 = vld [vmem:[%s301 + $0x120] sm:$0xff]
        %v379 = vld [vmem:[%s301 + $0x128] sm:$0xf]
        %v380 = vld [vmem:[%s301 + $0x12c] sm:$0xff]
        %v381 = vld [vmem:[%s301 + $0x134] sm:$0xf]
        %v382 = vld [vmem:[%s301 + $0x138] sm:$0xff]
        %v383 = vld [vmem:[%s301 + $0x140] sm:$0xf]
        %v384 = vld [vmem:[%s301 + $0x144] sm:$0xff]
        %v385 = vld [vmem:[%s301 + $0x14c] sm:$0xf]
        %v386 = vld [vmem:[%s301 + $0x150] sm:$0xff]
        %v387 = vld [vmem:[%s301 + $0x158] sm:$0xf]
        %v388 = vld [vmem:[%s301 + $0x15c] sm:$0xff]
        %v389 = vld [vmem:[%s301 + $0x164] sm:$0xf]
        %v390 = vld [vmem:[%s301 + $0x168] sm:$0xff]
        %v391 = vld [vmem:[%s301 + $0x170] sm:$0xf]
        %v392 = vld [vmem:[%s301 + $0x174] sm:$0xff]
        %v393 = vld [vmem:[%s301 + $0x17c] sm:$0xf]
        %v394 = vld [vmem:[%s1] sm:$0xf]
        %v395 = vld [vmem:[%s1 + $0x4] sm:$0xf]
        %v396 = vld [vmem:[%s1 + $0x8] sm:$0xf]
        %v397 = vld [vmem:[%s1 + $0xc] sm:$0xf]
        %v398 = vld [vmem:[%s1 + $0x10] sm:$0xf]
        %v399 = vld [vmem:[%s1 + $0x14] sm:$0xf]
        %v400 = vld [vmem:[%s1 + $0x18] sm:$0xf]
        %v401 = vld [vmem:[%s1 + $0x1c] sm:$0xf]
        %v402 = vld [vmem:[%s1 + $0x20] sm:$0xf]
        %v403 = vld [vmem:[%s1 + $0x24] sm:$0xf]
        %v404 = vld [vmem:[%s1 + $0x28] sm:$0xf]
        %v405 = vld [vmem:[%s1 + $0x2c] sm:$0xf]
        %v406 = vld [vmem:[%s1 + $0x30] sm:$0xf]
        %v407 = vld [vmem:[%s1 + $0x34] sm:$0xf]
        %v408 = vld [vmem:[%s1 + $0x38] sm:$0xf]
        %v409 = vld [vmem:[%s1 + $0x3c] sm:$0xf]
        %v410 = vld [vmem:[%s1 + $0x40] sm:$0xf]
        %v411 = vld [vmem:[%s1 + $0x44] sm:$0xf]
        %v412 = vld [vmem:[%s1 + $0x48] sm:$0xf]
        %v413 = vld [vmem:[%s1 + $0x4c] sm:$0xf]
        %v414 = vld [vmem:[%s1 + $0x50] sm:$0xf]
        %v415 = vld [vmem:[%s1 + $0x54] sm:$0xf]
        %v416 = vld [vmem:[%s1 + $0x58] sm:$0xf]
        %v417 = vld [vmem:[%s1 + $0x5c] sm:$0xf]
        %v418 = vld [vmem:[%s1 + $0x60] sm:$0xf]
        %v419 = vld [vmem:[%s1 + $0x64] sm:$0xf]
        %v420 = vld [vmem:[%s1 + $0x68] sm:$0xf]
        %v421 = vld [vmem:[%s1 + $0x6c] sm:$0xf]
        %v422 = vld [vmem:[%s1 + $0x70] sm:$0xf]
        %v423 = vld [vmem:[%s1 + $0x74] sm:$0xf]
        %v424 = vld [vmem:[%s1 + $0x78] sm:$0xf]
        %v425 = vld [vmem:[%s1 + $0x7c] sm:$0xf]
        %v426 = vld [vmem:[%s1 + $0x80] sm:$0xf]
        %v427 = vld [vmem:[%s1 + $0x84] sm:$0xf]
        %v428 = vld [vmem:[%s1 + $0x88] sm:$0xf]
        %v429 = vld [vmem:[%s1 + $0x8c] sm:$0xf]
        %v494 = vunpack.c.l.b16 %v330
        %v495 = vunpack.c.h.b16 %v330
        %v496 = vunpack.c.l.b16 %v331
        %v497 = vunpack.c.l.b16 %v332
        %v498 = vunpack.c.h.b16 %v332
        %v499 = vunpack.c.l.b16 %v333
        %v500 = vunpack.c.l.b16 %v334
        %v501 = vunpack.c.h.b16 %v334
        %v502 = vunpack.c.l.b16 %v335
        %v503 = vunpack.c.l.b16 %v336
        %v504 = vunpack.c.h.b16 %v336
        %v505 = vunpack.c.l.b16 %v337
        %v506 = vunpack.c.l.b16 %v338
        %v507 = vunpack.c.h.b16 %v338
        %v508 = vunpack.c.l.b16 %v339
        %v509 = vunpack.c.l.b16 %v340
        %v510 = vunpack.c.h.b16 %v340
        %v511 = vunpack.c.l.b16 %v341
        %v512 = vunpack.c.l.b16 %v342
        %v513 = vunpack.c.h.b16 %v342
        %v514 = vunpack.c.l.b16 %v343
        %v515 = vunpack.c.l.b16 %v344
        %v516 = vunpack.c.h.b16 %v344
        %v517 = vunpack.c.l.b16 %v345
        %v518 = vunpack.c.l.b16 %v346
        %v519 = vunpack.c.h.b16 %v346
        %v520 = vunpack.c.l.b16 %v347
        %v521 = vunpack.c.l.b16 %v348
        %v522 = vunpack.c.h.b16 %v348
        %v523 = vunpack.c.l.b16 %v349
        %v524 = vunpack.c.l.b16 %v350
        %v525 = vunpack.c.h.b16 %v350
        %v526 = vunpack.c.l.b16 %v351
        %v527 = vunpack.c.l.b16 %v352
        %v528 = vunpack.c.h.b16 %v352
        %v529 = vunpack.c.l.b16 %v353
        %v530 = vunpack.c.l.b16 %v354
        %v531 = vunpack.c.h.b16 %v354
        %v532 = vunpack.c.l.b16 %v355
        %v533 = vunpack.c.l.b16 %v356
        %v534 = vunpack.c.h.b16 %v356
        %v535 = vunpack.c.l.b16 %v357
        %v536 = vunpack.c.l.b16 %v358
        %v537 = vunpack.c.h.b16 %v358
        %v538 = vunpack.c.l.b16 %v359
        %v539 = vunpack.c.l.b16 %v360
        %v540 = vunpack.c.h.b16 %v360
        %v541 = vunpack.c.l.b16 %v361
        %v542 = vunpack.c.l.b16 %v362
        %v543 = vunpack.c.h.b16 %v362
        %v544 = vunpack.c.l.b16 %v363
        %v545 = vunpack.c.l.b16 %v364
        %v546 = vunpack.c.h.b16 %v364
        %v547 = vunpack.c.l.b16 %v365
        %v548 = vunpack.c.l.b16 %v366
        %v549 = vunpack.c.h.b16 %v366
        %v550 = vunpack.c.l.b16 %v367
        %v551 = vunpack.c.l.b16 %v368
        %v552 = vunpack.c.h.b16 %v368
        %v553 = vunpack.c.l.b16 %v369
        %v554 = vunpack.c.l.b16 %v370
        %v555 = vunpack.c.h.b16 %v370
        %v556 = vunpack.c.l.b16 %v371
        %v557 = vunpack.c.l.b16 %v372
        %v558 = vunpack.c.h.b16 %v372
        %v559 = vunpack.c.l.b16 %v373
        %v560 = vunpack.c.l.b16 %v374
        %v561 = vunpack.c.h.b16 %v374
        %v562 = vunpack.c.l.b16 %v375
        %v563 = vunpack.c.l.b16 %v376
        %v564 = vunpack.c.h.b16 %v376
        %v565 = vunpack.c.l.b16 %v377
        %v566 = vunpack.c.l.b16 %v378
        %v567 = vunpack.c.h.b16 %v378
        %v568 = vunpack.c.l.b16 %v379
        %v569 = vunpack.c.l.b16 %v380
        %v570 = vunpack.c.h.b16 %v380
        %v571 = vunpack.c.l.b16 %v381
        %v572 = vunpack.c.l.b16 %v382
        %v573 = vunpack.c.h.b16 %v382
        %v574 = vunpack.c.l.b16 %v383
        %v575 = vunpack.c.l.b16 %v384
        %v576 = vunpack.c.h.b16 %v384
        %v577 = vunpack.c.l.b16 %v385
        %v578 = vunpack.c.l.b16 %v386
        %v579 = vunpack.c.h.b16 %v386
        %v580 = vunpack.c.l.b16 %v387
        %v581 = vunpack.c.l.b16 %v388
        %v582 = vunpack.c.h.b16 %v388
        %v583 = vunpack.c.l.b16 %v389
        %v584 = vunpack.c.l.b16 %v390
        %v585 = vunpack.c.h.b16 %v390
        %v586 = vunpack.c.l.b16 %v391
        %v587 = vunpack.c.l.b16 %v392
        %v588 = vunpack.c.h.b16 %v392
        %v589 = vunpack.c.l.b16 %v393
        %v590 = vpack.c.b16 %v497, %v494
        %v591 = vpack.c.b16 %v498, %v495
        %v592 = vpack.c.b16 %v499, %v496
        %v593 = vpack.c.b16 %v503, %v500
        %v594 = vpack.c.b16 %v504, %v501
        %v595 = vpack.c.b16 %v505, %v502
        %v596 = vpack.c.b16 %v509, %v506
        %v597 = vpack.c.b16 %v510, %v507
        %v598 = vpack.c.b16 %v511, %v508
        %v599 = vpack.c.b16 %v515, %v512
        %v600 = vpack.c.b16 %v516, %v513
        %v601 = vpack.c.b16 %v517, %v514
        %v602 = vpack.c.b16 %v521, %v518
        %v603 = vpack.c.b16 %v522, %v519
        %v604 = vpack.c.b16 %v523, %v520
        %v605 = vpack.c.b16 %v527, %v524
        %v606 = vpack.c.b16 %v528, %v525
        %v607 = vpack.c.b16 %v529, %v526
        %v608 = vpack.c.b16 %v533, %v530
        %v609 = vpack.c.b16 %v534, %v531
        %v610 = vpack.c.b16 %v535, %v532
        %v611 = vpack.c.b16 %v539, %v536
        %v612 = vpack.c.b16 %v540, %v537
        %v613 = vpack.c.b16 %v541, %v538
        %v614 = vpack.c.b16 %v545, %v542
        %v615 = vpack.c.b16 %v546, %v543
        %v616 = vpack.c.b16 %v547, %v544
        %v617 = vpack.c.b16 %v551, %v548
        %v618 = vpack.c.b16 %v552, %v549
        %v619 = vpack.c.b16 %v553, %v550
        %v620 = vpack.c.b16 %v557, %v554
        %v621 = vpack.c.b16 %v558, %v555
        %v622 = vpack.c.b16 %v559, %v556
        %v623 = vpack.c.b16 %v563, %v560
        %v624 = vpack.c.b16 %v564, %v561
        %v625 = vpack.c.b16 %v565, %v562
        %v626 = vpack.c.b16 %v569, %v566
        %v627 = vpack.c.b16 %v570, %v567
        %v628 = vpack.c.b16 %v571, %v568
        %v629 = vpack.c.b16 %v575, %v572
        %v630 = vpack.c.b16 %v576, %v573
        %v631 = vpack.c.b16 %v577, %v574
        %v632 = vpack.c.b16 %v581, %v578
        %v633 = vpack.c.b16 %v582, %v579
        %v634 = vpack.c.b16 %v583, %v580
        %v635 = vpack.c.b16 %v587, %v584
        %v636 = vpack.c.b16 %v588, %v585
        %v637 = vpack.c.b16 %v589, %v586
        %v706 = vunpack.c.l.b16 %v394
        %v707 = vunpack.c.l.b16 %v395
        %v708 = vunpack.c.l.b16 %v396
        %v709 = vunpack.c.l.b16 %v397
        %v710 = vunpack.c.l.b16 %v398
        %v711 = vunpack.c.l.b16 %v399
        %v712 = vunpack.c.l.b16 %v400
        %v713 = vunpack.c.l.b16 %v401
        %v714 = vunpack.c.l.b16 %v402
        %v715 = vunpack.c.l.b16 %v403
        %v716 = vunpack.c.l.b16 %v404
        %v717 = vunpack.c.l.b16 %v405
        %v718 = vunpack.c.l.b16 %v406
        %v719 = vunpack.c.l.b16 %v407
        %v720 = vunpack.c.l.b16 %v408
        %v721 = vunpack.c.l.b16 %v409
        %v722 = vunpack.c.l.b16 %v410
        %v723 = vunpack.c.l.b16 %v411
        %v724 = vunpack.c.l.b16 %v412
        %v725 = vunpack.c.l.b16 %v413
        %v726 = vunpack.c.l.b16 %v414
        %v727 = vunpack.c.l.b16 %v415
        %v728 = vunpack.c.l.b16 %v416
        %v729 = vunpack.c.l.b16 %v417
        %v730 = vunpack.c.l.b16 %v418
        %v731 = vunpack.c.l.b16 %v419
        %v732 = vunpack.c.l.b16 %v420
        %v733 = vunpack.c.l.b16 %v421
        %v734 = vunpack.c.l.b16 %v422
        %v735 = vunpack.c.l.b16 %v423
        %v736 = vunpack.c.l.b16 %v424
        %v737 = vunpack.c.l.b16 %v425
        %v738 = vunpack.c.l.b16 %v426
        %v739 = vunpack.c.l.b16 %v427
        %v740 = vunpack.c.l.b16 %v428
        %v741 = vunpack.c.l.b16 %v429
        %v742 = vpack.c.b16 %v707, %v706
        %v743 = vpack.c.b16 %v709, %v708
        %v744 = vpack.c.b16 %v711, %v710
        %v745 = vpack.c.b16 %v713, %v712
        %v746 = vpack.c.b16 %v715, %v714
        %v747 = vpack.c.b16 %v717, %v716
        %v748 = vpack.c.b16 %v719, %v718
        %v749 = vpack.c.b16 %v721, %v720
        %v750 = vpack.c.b16 %v723, %v722
        %v751 = vpack.c.b16 %v725, %v724
        %v752 = vpack.c.b16 %v727, %v726
        %v753 = vpack.c.b16 %v729, %v728
        %v754 = vpack.c.b16 %v731, %v730
        %v755 = vpack.c.b16 %v733, %v732
        %v756 = vpack.c.b16 %v735, %v734
        %v757 = vpack.c.b16 %v737, %v736
        %v758 = vpack.c.b16 %v739, %v738
        %v759 = vpack.c.b16 %v741, %v740
        %vm778 = vcmask 261120
        %v780 = vsel %vm778, %v592, 0
        %v783 = vsel %vm778, %v595, 0
        %v786 = vsel %vm778, %v598, 0
        %v789 = vsel %vm778, %v601, 0
        %v792 = vsel %vm778, %v604, 0
        %v795 = vsel %vm778, %v607, 0
        %v798 = vsel %vm778, %v610, 0
        %v801 = vsel %vm778, %v613, 0
        %v804 = vsel %vm778, %v616, 0
        %v807 = vsel %vm778, %v619, 0
        %v810 = vsel %vm778, %v622, 0
        %v813 = vsel %vm778, %v625, 0
        %v816 = vsel %vm778, %v628, 0
        %v819 = vsel %vm778, %v631, 0
        %v822 = vsel %vm778, %v634, 0
        %v825 = vsel %vm778, %v637, 0
        %827 = vmatprep.subr.bf16.mxu0 0
        %828 = vmatpush1.bf16.msra.mxu0 %v742
        %829 = vmatprep.subr.bf16.mxu0 0
        %830 = vmatpush1.bf16.msra.mxu0 %v743
        %831 = vmatprep.subr.bf16.mxu0 0
        %832 = vmatpush1.bf16.msra.mxu0 %v744
        %833 = vmatprep.subr.bf16.mxu0 0
        %834 = vmatpush1.bf16.msra.mxu0 %v745
        %835 = vmatprep.subr.bf16.mxu0 0
        %836 = vmatpush1.bf16.msra.mxu0 %v746
        %837 = vmatprep.subr.bf16.mxu0 0
        %838 = vmatpush1.bf16.msra.mxu0 %v747
        %839 = vmatprep.subr.bf16.mxu0 0
        %840 = vmatpush1.bf16.msra.mxu0 %v748
        %841 = vmatprep.subr.bf16.mxu0 0
        %842 = vmatpush1.bf16.msra.mxu0 %v749
        %843 = vmatprep.subr.bf16.mxu0 0
        %844 = vmatpush1.bf16.msra.mxu0 %v750
        %845 = vmatprep.subr.bf16.mxu0 0
        %846 = vmatpush1.bf16.msra.mxu0 %v751
        %847 = vmatprep.subr.bf16.mxu0 0
        %848 = vmatpush1.bf16.msra.mxu0 %v752
        %849 = vmatprep.subr.bf16.mxu0 0
        %850 = vmatpush1.bf16.msra.mxu0 %v753
        %851 = vmatprep.subr.bf16.mxu0 0
        %852 = vmatpush1.bf16.msra.mxu0 %v754
        %853 = vmatprep.subr.bf16.mxu0 0
        %854 = vmatpush1.bf16.msra.mxu0 %v755
        %855 = vmatprep.subr.bf16.mxu0 0
        %856 = vmatpush1.bf16.msra.mxu0 %v756
        %857 = vmatprep.subr.bf16.mxu0 0
        %858 = vmatpush1.bf16.msra.mxu0 %v757
        %859 = vmatprep.mubr.bf16.mxu0 %v591
        %860 = vmatmul.mubr.bf16.gmra.mrb[0].mxu0 %v590
        %v861 = vpop.f32.mrb[0].mxu0
        %v862 = vadd.f32 0.0, %v861
        %v863 = vpop.f32.mrb[0].mxu0
        %v864 = vpop.f32.mrb[0].mxu0
        %v865 = vadd.f32 0.0, %v864
        %v866 = vpop.f32.mrb[0].mxu0
        %867 = vmatprep.mubr.bf16.mxu0 %v594
        %868 = vmatmul.mubr.bf16.gmra.mrb[0].mxu0 %v593
        %v869 = vpop.f32.mrb[0].mxu0
        %v870 = vadd.f32 0.0, %v869
        %v871 = vpop.f32.mrb[0].mxu0
        %v872 = vpop.f32.mrb[0].mxu0
        %v873 = vadd.f32 0.0, %v872
        %v874 = vpop.f32.mrb[0].mxu0
        %875 = vmatprep.mubr.bf16.mxu0 %v597
        %876 = vmatmul.mubr.bf16.gmra.mrb[0].mxu0 %v596
        %v877 = vpop.f32.mrb[0].mxu0
        %v878 = vadd.f32 0.0, %v877
        %v879 = vpop.f32.mrb[0].mxu0
        %v880 = vpop.f32.mrb[0].mxu0
        %v881 = vadd.f32 0.0, %v880
        %v882 = vpop.f32.mrb[0].mxu0
        %883 = vmatprep.mubr.bf16.mxu0 %v600
        %884 = vmatmul.mubr.bf16.gmra.mrb[0].mxu0 %v599
        %v885 = vpop.f32.mrb[0].mxu0
        %v886 = vadd.f32 0.0, %v885
        %v887 = vpop.f32.mrb[0].mxu0
        %v888 = vpop.f32.mrb[0].mxu0
        %v889 = vadd.f32 0.0, %v888
        %v890 = vpop.f32.mrb[0].mxu0
        %891 = vmatprep.mubr.bf16.mxu0 %v603
        %892 = vmatmul.mubr.bf16.gmra.mrb[0].mxu0 %v602
        %v893 = vpop.f32.mrb[0].mxu0
        %v894 = vadd.f32 0.0, %v893
        %v895 = vpop.f32.mrb[0].mxu0
        %v896 = vpop.f32.mrb[0].mxu0
        %v897 = vadd.f32 0.0, %v896
        %v898 = vpop.f32.mrb[0].mxu0
        %899 = vmatprep.mubr.bf16.mxu0 %v606
        %900 = vmatmul.mubr.bf16.gmra.mrb[0].mxu0 %v605
        %v901 = vpop.f32.mrb[0].mxu0
        %v902 = vadd.f32 0.0, %v901
        %v903 = vpop.f32.mrb[0].mxu0
        %v904 = vpop.f32.mrb[0].mxu0
        %v905 = vadd.f32 0.0, %v904
        %v906 = vpop.f32.mrb[0].mxu0
        %907 = vmatprep.mubr.bf16.mxu0 %v609
        %908 = vmatmul.mubr.bf16.gmra.mrb[0].mxu0 %v608
        %v909 = vpop.f32.mrb[0].mxu0
        %v910 = vadd.f32 0.0, %v909
        %v911 = vpop.f32.mrb[0].mxu0
        %v912 = vpop.f32.mrb[0].mxu0
        %v913 = vadd.f32 0.0, %v912
        %v914 = vpop.f32.mrb[0].mxu0
        %915 = vmatprep.mubr.bf16.mxu0 %v612
        %916 = vmatmul.mubr.bf16.gmra.mrb[0].mxu0 %v611
        %v917 = vpop.f32.mrb[0].mxu0
        %v918 = vadd.f32 0.0, %v917
        %v919 = vpop.f32.mrb[0].mxu0
        %v920 = vpop.f32.mrb[0].mxu0
        %v921 = vadd.f32 0.0, %v920
        %v922 = vpop.f32.mrb[0].mxu0
        %923 = vmatprep.mubr.bf16.mxu0 %v615
        %924 = vmatmul.mubr.bf16.gmra.mrb[0].mxu0 %v614
        %v925 = vpop.f32.mrb[0].mxu0
        %v926 = vadd.f32 0.0, %v925
        %v927 = vpop.f32.mrb[0].mxu0
        %v928 = vpop.f32.mrb[0].mxu0
        %v929 = vadd.f32 0.0, %v928
        %v930 = vpop.f32.mrb[0].mxu0
        %931 = vmatprep.mubr.bf16.mxu0 %v618
        %932 = vmatmul.mubr.bf16.gmra.mrb[0].mxu0 %v617
        %v933 = vpop.f32.mrb[0].mxu0
        %v934 = vadd.f32 0.0, %v933
        %v935 = vpop.f32.mrb[0].mxu0
        %v936 = vpop.f32.mrb[0].mxu0
        %v937 = vadd.f32 0.0, %v936
        %v938 = vpop.f32.mrb[0].mxu0
        %939 = vmatprep.mubr.bf16.mxu0 %v621
        %940 = vmatmul.mubr.bf16.gmra.mrb[0].mxu0 %v620
        %v941 = vpop.f32.mrb[0].mxu0
        %v942 = vadd.f32 0.0, %v941
        %v943 = vpop.f32.mrb[0].mxu0
        %v944 = vpop.f32.mrb[0].mxu0
        %v945 = vadd.f32 0.0, %v944
        %v946 = vpop.f32.mrb[0].mxu0
        %947 = vmatprep.mubr.bf16.mxu0 %v624
        %948 = vmatmul.mubr.bf16.gmra.mrb[0].mxu0 %v623
        %v949 = vpop.f32.mrb[0].mxu0
        %v950 = vadd.f32 0.0, %v949
        %v951 = vpop.f32.mrb[0].mxu0
        %v952 = vpop.f32.mrb[0].mxu0
        %v953 = vadd.f32 0.0, %v952
        %v954 = vpop.f32.mrb[0].mxu0
        %955 = vmatprep.mubr.bf16.mxu0 %v627
        %956 = vmatmul.mubr.bf16.gmra.mrb[0].mxu0 %v626
        %v957 = vpop.f32.mrb[0].mxu0
        %v958 = vadd.f32 0.0, %v957
        %v959 = vpop.f32.mrb[0].mxu0
        %v960 = vpop.f32.mrb[0].mxu0
        %v961 = vadd.f32 0.0, %v960
        %v962 = vpop.f32.mrb[0].mxu0
        %963 = vmatprep.mubr.bf16.mxu0 %v630
        %964 = vmatmul.mubr.bf16.gmra.mrb[0].mxu0 %v629
        %v965 = vpop.f32.mrb[0].mxu0
        %v966 = vadd.f32 0.0, %v965
        %v967 = vpop.f32.mrb[0].mxu0
        %v968 = vpop.f32.mrb[0].mxu0
        %v969 = vadd.f32 0.0, %v968
        %v970 = vpop.f32.mrb[0].mxu0
        %971 = vmatprep.mubr.bf16.mxu0 %v633
        %972 = vmatmul.mubr.bf16.gmra.mrb[0].mxu0 %v632
        %v973 = vpop.f32.mrb[0].mxu0
        %v974 = vadd.f32 0.0, %v973
        %v975 = vpop.f32.mrb[0].mxu0
        %v976 = vpop.f32.mrb[0].mxu0
        %v977 = vadd.f32 0.0, %v976
        %v978 = vpop.f32.mrb[0].mxu0
        %979 = vmatprep.mubr.bf16.mxu0 %v636
        %980 = vmatmul.mubr.bf16.gmra.mrb[0].mxu0 %v635
        %v981 = vpop.f32.mrb[0].mxu0
        %v982 = vadd.f32 0.0, %v981
        %v983 = vpop.f32.mrb[0].mxu0
        %v984 = vpop.f32.mrb[0].mxu0
        %v985 = vadd.f32 0.0, %v984
        %v986 = vpop.f32.mrb[0].mxu0
        %987 = vdwg.mxu0
        %988 = vmatprep.subr.bf16.mxu0 0
        %989 = vmatpush1.bf16.msra.mxu0 %v758
        %990 = vmatprep.subr.bf16.mxu0 0
        %991 = vmatpush1.bf16.msra.mxu0 %v759
        %992 = vmatprep.subr.bf16.mxu0 0
        %993 = vmatpush1.bf16.msra.mxu0 0
        %994 = vmatprep.subr.bf16.mxu0 0
        %995 = vmatpush1.bf16.msra.mxu0 0
        %996 = vmatprep.subr.bf16.mxu0 0
        %997 = vmatpush1.bf16.msra.mxu0 0
        %998 = vmatprep.subr.bf16.mxu0 0
        %999 = vmatpush1.bf16.msra.mxu0 0
        %1000 = vmatprep.subr.bf16.mxu0 0
        %1001 = vmatpush1.bf16.msra.mxu0 0
        %1002 = vmatprep.subr.bf16.mxu0 0
        %1003 = vmatpush1.bf16.msra.mxu0 0
        %1004 = vmatprep.subr.bf16.mxu0 0
        %1005 = vmatpush1.bf16.msra.mxu0 0
        %1006 = vmatprep.subr.bf16.mxu0 0
        %1007 = vmatpush1.bf16.msra.mxu0 0
        %1008 = vmatprep.subr.bf16.mxu0 0
        %1009 = vmatpush1.bf16.msra.mxu0 0
        %1010 = vmatprep.subr.bf16.mxu0 0
        %1011 = vmatpush1.bf16.msra.mxu0 0
        %1012 = vmatprep.subr.bf16.mxu0 0
        %1013 = vmatpush1.bf16.msra.mxu0 0
        %1014 = vmatprep.subr.bf16.mxu0 0
        %1015 = vmatpush1.bf16.msra.mxu0 0
        %1016 = vmatprep.subr.bf16.mxu0 0
        %1017 = vmatpush1.bf16.msra.mxu0 0
        %1018 = vmatprep.subr.bf16.mxu0 0
        %1019 = vmatpush1.bf16.msra.mxu0 0
        %1020 = vmatprep.mubr.bf16.mxu0 0
        %1021 = vmatmul.mubr.bf16.gmra.mrb[0].mxu0 %v780
        %v1022 = vpop.f32.mrb[0].mxu0
        %v1023 = vadd.f32 %v862, %v1022
        %v1024 = vpop.f32.mrb[0].mxu0
        %v1025 = vpop.f32.mrb[0].mxu0
        %v1026 = vadd.f32 %v865, %v1025
        %v1027 = vpop.f32.mrb[0].mxu0
        %1028 = vmatprep.mubr.bf16.mxu0 0
        %1029 = vmatmul.mubr.bf16.gmra.mrb[0].mxu0 %v783
        %v1030 = vpop.f32.mrb[0].mxu0
        %v1031 = vadd.f32 %v870, %v1030
        %v1032 = vpop.f32.mrb[0].mxu0
        %v1033 = vpop.f32.mrb[0].mxu0
        %v1034 = vadd.f32 %v873, %v1033
        %v1035 = vpop.f32.mrb[0].mxu0
        %1036 = vmatprep.mubr.bf16.mxu0 0
        %1037 = vmatmul.mubr.bf16.gmra.mrb[0].mxu0 %v786
        %v1038 = vpop.f32.mrb[0].mxu0
        %v1039 = vadd.f32 %v878, %v1038
        %v1040 = vpop.f32.mrb[0].mxu0
        %v1041 = vpop.f32.mrb[0].mxu0
        %v1042 = vadd.f32 %v881, %v1041
        %v1043 = vpop.f32.mrb[0].mxu0
        %1044 = vmatprep.mubr.bf16.mxu0 0
        %1045 = vmatmul.mubr.bf16.gmra.mrb[0].mxu0 %v789
        %v1046 = vpop.f32.mrb[0].mxu0
        %v1047 = vadd.f32 %v886, %v1046
        %v1048 = vpop.f32.mrb[0].mxu0
        %v1049 = vpop.f32.mrb[0].mxu0
        %v1050 = vadd.f32 %v889, %v1049
        %v1051 = vpop.f32.mrb[0].mxu0
        %1052 = vmatprep.mubr.bf16.mxu0 0
        %1053 = vmatmul.mubr.bf16.gmra.mrb[0].mxu0 %v792
        %v1054 = vpop.f32.mrb[0].mxu0
        %v1055 = vadd.f32 %v894, %v1054
        %v1056 = vpop.f32.mrb[0].mxu0
        %v1057 = vpop.f32.mrb[0].mxu0
        %v1058 = vadd.f32 %v897, %v1057
        %v1059 = vpop.f32.mrb[0].mxu0
        %1060 = vmatprep.mubr.bf16.mxu0 0
        %1061 = vmatmul.mubr.bf16.gmra.mrb[0].mxu0 %v795
        %v1062 = vpop.f32.mrb[0].mxu0
        %v1063 = vadd.f32 %v902, %v1062
        %v1064 = vpop.f32.mrb[0].mxu0
        %v1065 = vpop.f32.mrb[0].mxu0
        %v1066 = vadd.f32 %v905, %v1065
        %v1067 = vpop.f32.mrb[0].mxu0
        %1068 = vmatprep.mubr.bf16.mxu0 0
        %1069 = vmatmul.mubr.bf16.gmra.mrb[0].mxu0 %v798
        %v1070 = vpop.f32.mrb[0].mxu0
        %v1071 = vadd.f32 %v910, %v1070
        %v1072 = vpop.f32.mrb[0].mxu0
        %v1073 = vpop.f32.mrb[0].mxu0
        %v1074 = vadd.f32 %v913, %v1073
        %v1075 = vpop.f32.mrb[0].mxu0
        %1076 = vmatprep.mubr.bf16.mxu0 0
        %1077 = vmatmul.mubr.bf16.gmra.mrb[0].mxu0 %v801
        %v1078 = vpop.f32.mrb[0].mxu0
        %v1079 = vadd.f32 %v918, %v1078
        %v1080 = vpop.f32.mrb[0].mxu0
        %v1081 = vpop.f32.mrb[0].mxu0
        %v1082 = vadd.f32 %v921, %v1081
        %v1083 = vpop.f32.mrb[0].mxu0
        %1084 = vmatprep.mubr.bf16.mxu0 0
        %1085 = vmatmul.mubr.bf16.gmra.mrb[0].mxu0 %v804
        %v1086 = vpop.f32.mrb[0].mxu0
        %v1087 = vadd.f32 %v926, %v1086
        %v1088 = vpop.f32.mrb[0].mxu0
        %v1089 = vpop.f32.mrb[0].mxu0
        %v1090 = vadd.f32 %v929, %v1089
        %v1091 = vpop.f32.mrb[0].mxu0
        %1092 = vmatprep.mubr.bf16.mxu0 0
        %1093 = vmatmul.mubr.bf16.gmra.mrb[0].mxu0 %v807
        %v1094 = vpop.f32.mrb[0].mxu0
        %v1095 = vadd.f32 %v934, %v1094
        %v1096 = vpop.f32.mrb[0].mxu0
        %v1097 = vpop.f32.mrb[0].mxu0
        %v1098 = vadd.f32 %v937, %v1097
        %v1099 = vpop.f32.mrb[0].mxu0
        %1100 = vmatprep.mubr.bf16.mxu0 0
        %1101 = vmatmul.mubr.bf16.gmra.mrb[0].mxu0 %v810
        %v1102 = vpop.f32.mrb[0].mxu0
        %v1103 = vadd.f32 %v942, %v1102
        %v1104 = vpop.f32.mrb[0].mxu0
        %v1105 = vpop.f32.mrb[0].mxu0
        %v1106 = vadd.f32 %v945, %v1105
        %v1107 = vpop.f32.mrb[0].mxu0
        %1108 = vmatprep.mubr.bf16.mxu0 0
        %1109 = vmatmul.mubr.bf16.gmra.mrb[0].mxu0 %v813
        %v1110 = vpop.f32.mrb[0].mxu0
        %v1111 = vadd.f32 %v950, %v1110
        %v1112 = vpop.f32.mrb[0].mxu0
        %v1113 = vpop.f32.mrb[0].mxu0
        %v1114 = vadd.f32 %v953, %v1113
        %v1115 = vpop.f32.mrb[0].mxu0
        %1116 = vmatprep.mubr.bf16.mxu0 0
        %1117 = vmatmul.mubr.bf16.gmra.mrb[0].mxu0 %v816
        %v1118 = vpop.f32.mrb[0].mxu0
        %v1119 = vadd.f32 %v958, %v1118
        %v1120 = vpop.f32.mrb[0].mxu0
        %v1121 = vpop.f32.mrb[0].mxu0
        %v1122 = vadd.f32 %v961, %v1121
        %v1123 = vpop.f32.mrb[0].mxu0
        %1124 = vmatprep.mubr.bf16.mxu0 0
        %1125 = vmatmul.mubr.bf16.gmra.mrb[0].mxu0 %v819
        %v1126 = vpop.f32.mrb[0].mxu0
        %v1127 = vadd.f32 %v966, %v1126
        %v1128 = vpop.f32.mrb[0].mxu0
        %v1129 = vpop.f32.mrb[0].mxu0
        %v1130 = vadd.f32 %v969, %v1129
        %v1131 = vpop.f32.mrb[0].mxu0
        %1132 = vmatprep.mubr.bf16.mxu0 0
        %1133 = vmatmul.mubr.bf16.gmra.mrb[0].mxu0 %v822
        %v1134 = vpop.f32.mrb[0].mxu0
        %v1135 = vadd.f32 %v974, %v1134
        %v1136 = vpop.f32.mrb[0].mxu0
        %v1137 = vpop.f32.mrb[0].mxu0
        %v1138 = vadd.f32 %v977, %v1137
        %v1139 = vpop.f32.mrb[0].mxu0
        %1140 = vmatprep.mubr.bf16.mxu0 0
        %1141 = vmatmul.mubr.bf16.gmra.mrb[0].mxu0 %v825
        %v1142 = vpop.f32.mrb[0].mxu0
        %v1143 = vadd.f32 %v982, %v1142
        %v1144 = vpop.f32.mrb[0].mxu0
        %v1145 = vpop.f32.mrb[0].mxu0
        %v1146 = vadd.f32 %v985, %v1145
        %v1147 = vpop.f32.mrb[0].mxu0
        %1148 = vdwg.mxu0
        %v1149 = vmax.f32 %v1023, %v1055
        %v1150 = vmax.f32 %v1149, %v1087
        %v1151 = vmax.f32 %v1150, %v1119
        %v1152 = vmax.f32 %v1026, %v1058
        %v1153 = vmax.f32 %v1152, %v1090
        %v1154 = vmax.f32 %v1153, %v1122
        %v1155 = vmax.f32 %v1031, %v1063
        %v1156 = vmax.f32 %v1155, %v1095
        %v1157 = vmax.f32 %v1156, %v1127
        %v1158 = vmax.f32 %v1034, %v1066
        %v1159 = vmax.f32 %v1158, %v1098
        %v1160 = vmax.f32 %v1159, %v1130
        %v1161 = vmax.f32 %v1039, %v1071
        %v1162 = vmax.f32 %v1161, %v1103
        %v1163 = vmax.f32 %v1162, %v1135
        %v1164 = vmax.f32 %v1042, %v1074
        %v1165 = vmax.f32 %v1164, %v1106
        %v1166 = vmax.f32 %v1165, %v1138
        %v1167 = vmax.f32 %v1047, %v1079
        %v1168 = vmax.f32 %v1167, %v1111
        %v1169 = vmax.f32 %v1168, %v1143
        %v1170 = vmax.f32 %v1050, %v1082
        %v1171 = vmax.f32 %v1170, %v1114
        %v1172 = vmax.f32 %v1171, %v1146
        %v1173 = vld [vmem:[%s2] sm:$0x1]
        %v1175 = vlaneseq
        %v1176 = vshrl.u32 %v1175, 7
        %v1177 = vsub.s32 0, %v1176
        %v1178 = vrot.slane %v1173, %v1177
        %v1180 = vadd.f32 %v1151, %v1178
        %v1181 = vadd.f32 %v1154, %v1178
        %v1182 = vadd.f32 %v1157, %v1178
        %v1183 = vadd.f32 %v1160, %v1178
        %v1184 = vadd.f32 %v1163, %v1178
        %v1185 = vadd.f32 %v1166, %v1178
        %v1186 = vadd.f32 %v1169, %v1178
        %v1187 = vadd.f32 %v1172, %v1178
        %v1188 = vmax.f32 %v1180, 0.0
        %v1189 = vmax.f32 %v1181, 0.0
        %v1190 = vmax.f32 %v1182, 0.0
        %v1191 = vmax.f32 %v1183, 0.0
        %v1192 = vmax.f32 %v1184, 0.0
        %v1193 = vmax.f32 %v1185, 0.0
        %v1194 = vmax.f32 %v1186, 0.0
        %v1195 = vmax.f32 %v1187, 0.0
        %v1196 = vpack.c.bf16 %v1189, %v1188
        %v1197 = vpack.c.bf16 %v1191, %v1190
        %v1198 = vpack.c.bf16 %v1193, %v1192
        %v1199 = vpack.c.bf16 %v1195, %v1194
        %v1204 = vunpack.c.l.b16 %v1196
        %v1205 = vunpack.c.h.b16 %v1196
        %v1206 = vunpack.c.l.b16 %v1197
        %v1207 = vunpack.c.h.b16 %v1197
        %v1208 = vunpack.c.l.b16 %v1198
        %v1209 = vunpack.c.h.b16 %v1198
        %v1210 = vunpack.c.l.b16 %v1199
        %v1211 = vunpack.c.h.b16 %v1199
        %v1212 = vpack.c.b16 %v1204, %v1204
        %v1213 = vpack.c.b16 %v1205, %v1205
        %v1214 = vpack.c.b16 %v1206, %v1206
        %v1215 = vpack.c.b16 %v1207, %v1207
        %v1216 = vpack.c.b16 %v1208, %v1208
        %v1217 = vpack.c.b16 %v1209, %v1209
        %v1218 = vpack.c.b16 %v1210, %v1210
        %v1219 = vpack.c.b16 %v1211, %v1211
        %1228 = vst [vmem:[%s327] sm:$0xf] %v1212
        %1229 = vst [vmem:[%s327 + $0x4] sm:$0xf] %v1213
        %1230 = vst [vmem:[%s327 + $0x8] sm:$0xf] %v1214
        %1231 = vst [vmem:[%s327 + $0xc] sm:$0xf] %v1215
        %1232 = vst [vmem:[%s327 + $0x10] sm:$0xf] %v1216
        %1233 = vst [vmem:[%s327 + $0x14] sm:$0xf] %v1217
        %1234 = vst [vmem:[%s327 + $0x18] sm:$0xf] %v1218
        %1235 = vst [vmem:[%s327 + $0x1c] sm:$0xf] %v1219
        %s1236 = smul.u32 8, %s14
        %p1237 = scmp.lt.s32.totalorder %s1236, 15
        %s1238 = scalar_select %p1237, %s1236, 15
        %s1239 = smul.addr %s1238, 4
        %s1240 = scalar_lea.vmem %s3, %s1239
        // Predicated region
        $region59: #{simple_cnn_forward.4} parent=53 // pred_check
          %p1241 = pneg %p100
        $region60: #{simple_cnn_forward.4} parent=53 // pred_check_branch
          %1243 = sbr.rel (%p1241) target = $region62
        $region61: #{simple_cnn_forward.4} parent=53 // pred_region
          %s1244 = smul.u32 8, %s14
        $region62: #{simple_cnn_forward.4} parent=53 // pred_fallthru
          _
      $region54: #{simple_cnn_forward.4} parent=5 // pred_fallthru
        _
      %p1245 = scmp.le.s32.totalorder 2, %s9
      // Predicated region
      $region63: #{simple_cnn_forward.4} parent=5 // pred_check
        %p1246 = pneg %p1245
      $region64: #{simple_cnn_forward.4} parent=5 // pred_check_branch
        %1248 = sbr.rel (%p1246) target = $region66
      $region65: #{simple_cnn_forward.4} parent=5 // pred_region
        %s1249 = ssub.s32 %s9, 2
        // Predicated region
        $region67: #{simple_cnn_forward.4} parent=65 // pred_check
          %p1250 = pneg %p106
        $region68: #{simple_cnn_forward.4} parent=65 // pred_check_branch
          %1252 = sbr.rel (%p1250) target = $region70
        $region69: #{simple_cnn_forward.4} parent=65 // pred_region
          %s1253 = smul.u32 8, %s15
          %p1254 = scmp.lt.s32.totalorder %s1253, 15
          %s1255 = scalar_select %p1254, %s1253, 15
          %s1256 = smul.addr %s1255, 4
          %s1257 = scalar_lea.vmem %s3, %s1256
        $region70: #{simple_cnn_forward.4} parent=65 // pred_fallthru
          _
      $region66: #{simple_cnn_forward.4} parent=5 // pred_fallthru
        _
    $region6: #{simple_cnn_forward.4} parent=1 // loop_footer
      %s13 = sadd.s32 1, %s9
    $region7: #{simple_cnn_forward.4} parent=1 // loop_footer_branch
      %8 = sbr.rel target = $region3
    $region8: #{simple_cnn_forward.4} parent=1 // loop_exit
      _

// kernel: simple_cnn_forward.5
$region0: #{simple_cnn_forward.5}
  #allocation0 [shape = 'u32[]', space=smem, size = 0x4, offset = 0x4, fixed_abs, tag = 'smem constant byte address 0x4 - core index']
  #allocation1 [shape = 'u32[144,128]{1,0:T(1,128)}', space=vmem, size = 0x12000, scoped, tag = 'internal scratch']
  #allocation2 [shape = 'f32[2,128]{1,0:T(2,128)}', space=vmem, size = 0x400, scoped, tag = 'scratch operand']
  #allocation3 [shape = 'f32[1,1]{1,0:T(1,128)S(1)}', space=vmem, size = 0x200, scoped, tag = 'scoped memory for simple_cnn_forward.5']
  %s0 = inlined_call_operand.vmem [shape: bf16[2,4096], index: 0, kind: input, shape index: {}]
  %s1 = inlined_call_operand.vmem [shape: bf16[4096,128], index: 1, kind: input, shape index: {}]
  %s2 = inlined_call_operand.vmem [shape: f32[1,128], index: 2, kind: input, shape index: {}]
  %s3 = inlined_call_operand.vmem [shape: f32[1,128], index: 3, kind: input, shape index: {}]
  %s4 = inlined_call_operand.<no memory space> [shape: f32[1,1], index: 4, kind: input, shape index: {}]
  %s5 = inlined_call_operand.vmem [shape: f32[2,1], index: 5, kind: output, shape index: {}]
  %s6 = sld [smem:[#allocation0]]
  $region61: #{simple_cnn_forward.5} parent=0
    _
  %s8 = ssub.s32 1, %s6
  %s9 = scalar_select 0, %s8, %s6
  %v10 = vstv %s4
  %11 = vst [vmem:[#allocation3] sm:$0x1] %v10
  loop: start=0, step=1, limit=6
  $region2: #{simple_cnn_forward.5} parent=0 // loop_pre_header
    _
  $region3: #{simple_cnn_forward.5} parent=0 // loop_header
    %s13 = sphi 0, %s17
    %p14 = scmp.ge.s32.totalorder %s13, 6
    %s23 = sphi 0, %s25
    %s26 = sphi 0, %s23
    %s27 = sphi 0, %s26
    %s43 = sphi 0, %s27
    %s49 = sphi 0, %s51
    %s52 = sphi 0, %s49
    %s53 = sphi 0, %s52
    %s69 = sphi 0, %s53
    %s73 = sphi 0, %s73
    %s75 = sphi 0, %s73
    %s76 = sphi 0, %s75
    %s90 = sphi 0, %s76
    %s94 = sphi 0, %s94
    %s96 = sphi 0, %s94
    %s97 = sphi 0, %s96
    %s111 = sphi 0, %s97
    %s115 = sphi 0, %s115
    %s117 = sphi 0, %s115
    %s118 = sphi 0, %s117
    %s132 = sphi 0, %s118
    %s136 = sphi 0, %s136
    %s138 = sphi 0, %s136
    %s139 = sphi 0, %s138
    %s153 = sphi 0, %s139
  $region4: #{simple_cnn_forward.5} parent=0 // loop_header_branch
    %16 = sbr.rel (%p14) target = $region8
  $region5: #{simple_cnn_forward.5} parent=0 // loop_body
    %s18 = ssub.s32 %s13, 1
    %s19 = ssub.s32 %s13, 2
    %s20 = sadd.s32 %s13, 1
    %s21 = ssub.s32 %s13, %s20
    %p22 = scmp.eq.s32.totalorder %s21, 0
    %s24 = sadd.s32 %s23, 1
    %s25 = scalar_select %p22, %s23, %s24
    %p28 = pneg %p22
    %p29 = scmp.eq.s32.totalorder %s13, 3
    %p30 = por %p28, %p29
    %p31 = scmp.ne.s32.totalorder %s23, %s26
    %p32 = scmp.eq.s32.totalorder %s13, 0
    %p33 = por %p31, %p32
    %p34 = scmp.ne.s32.totalorder %s23, %s26
    %p35 = scmp.eq.s32.totalorder %s18, 3
    %p36 = por %p34, %p35
    %p37 = scmp.ne.s32.totalorder %s26, %s27
    %p38 = scmp.eq.s32.totalorder %s18, 0
    %p39 = por %p37, %p38
    %p40 = scmp.ne.s32.totalorder %s26, %s27
    %p41 = scmp.eq.s32.totalorder %s19, 3
    %p42 = por %p40, %p41
    %p44 = scmp.ne.s32.totalorder %s27, %s43
    %p45 = scmp.eq.s32.totalorder %s19, 0
    %p46 = por %p44, %p45
    %s47 = ssub.s32 %s13, %s20
    %p48 = scmp.eq.s32.totalorder %s47, 0
    %s50 = sadd.s32 %s49, 1
    %s51 = scalar_select %p48, %s49, %s50
    %p54 = pneg %p48
    %p55 = scmp.eq.s32.totalorder %s13, 3
    %p56 = por %p54, %p55
    %p57 = scmp.ne.s32.totalorder %s49, %s52
    %p58 = scmp.eq.s32.totalorder %s13, 0
    %p59 = por %p57, %p58
    %p60 = scmp.ne.s32.totalorder %s49, %s52
    %p61 = scmp.eq.s32.totalorder %s18, 3
    %p62 = por %p60, %p61
    %p63 = scmp.ne.s32.totalorder %s52, %s53
    %p64 = scmp.eq.s32.totalorder %s18, 0
    %p65 = por %p63, %p64
    %p66 = scmp.ne.s32.totalorder %s52, %s53
    %p67 = scmp.eq.s32.totalorder %s19, 3
    %p68 = por %p66, %p67
    %p70 = scmp.ne.s32.totalorder %s53, %s69
    %p71 = scmp.eq.s32.totalorder %s19, 0
    %p72 = por %p70, %p71
    %s74 = sadd.s32 %s73, 1
    %p77 = scmp.eq.s32.totalorder %s13, 3
    %p78 = scmp.ne.s32.totalorder %s73, %s75
    %p79 = scmp.eq.s32.totalorder %s13, 0
    %p80 = por %p78, %p79
    %p81 = scmp.ne.s32.totalorder %s73, %s75
    %p82 = scmp.eq.s32.totalorder %s18, 3
    %p83 = por %p81, %p82
    %p84 = scmp.ne.s32.totalorder %s75, %s76
    %p85 = scmp.eq.s32.totalorder %s18, 0
    %p86 = por %p84, %p85
    %p87 = scmp.ne.s32.totalorder %s75, %s76
    %p88 = scmp.eq.s32.totalorder %s19, 3
    %p89 = por %p87, %p88
    %p91 = scmp.ne.s32.totalorder %s76, %s90
    %p92 = scmp.eq.s32.totalorder %s19, 0
    %p93 = por %p91, %p92
    %s95 = sadd.s32 %s94, 1
    %p98 = scmp.eq.s32.totalorder %s13, 3
    %p99 = scmp.ne.s32.totalorder %s94, %s96
    %p100 = scmp.eq.s32.totalorder %s13, 0
    %p101 = por %p99, %p100
    %p102 = scmp.ne.s32.totalorder %s94, %s96
    %p103 = scmp.eq.s32.totalorder %s18, 3
    %p104 = por %p102, %p103
    %p105 = scmp.ne.s32.totalorder %s96, %s97
    %p106 = scmp.eq.s32.totalorder %s18, 0
    %p107 = por %p105, %p106
    %p108 = scmp.ne.s32.totalorder %s96, %s97
    %p109 = scmp.eq.s32.totalorder %s19, 3
    %p110 = por %p108, %p109
    %p112 = scmp.ne.s32.totalorder %s97, %s111
    %p113 = scmp.eq.s32.totalorder %s19, 0
    %p114 = por %p112, %p113
    %s116 = sadd.s32 %s115, 1
    %p119 = scmp.eq.s32.totalorder %s13, 3
    %p120 = scmp.ne.s32.totalorder %s115, %s117
    %p121 = scmp.eq.s32.totalorder %s13, 0
    %p122 = por %p120, %p121
    %p123 = scmp.ne.s32.totalorder %s115, %s117
    %p124 = scmp.eq.s32.totalorder %s18, 3
    %p125 = por %p123, %p124
    %p126 = scmp.ne.s32.totalorder %s117, %s118
    %p127 = scmp.eq.s32.totalorder %s18, 0
    %p128 = por %p126, %p127
    %p129 = scmp.ne.s32.totalorder %s117, %s118
    %p130 = scmp.eq.s32.totalorder %s19, 3
    %p131 = por %p129, %p130
    %p133 = scmp.ne.s32.totalorder %s118, %s132
    %p134 = scmp.eq.s32.totalorder %s19, 0
    %p135 = por %p133, %p134
    %s137 = sadd.s32 %s136, 1
    %p140 = scmp.eq.s32.totalorder %s13, 3
    %p141 = scmp.ne.s32.totalorder %s136, %s138
    %p142 = scmp.eq.s32.totalorder %s13, 0
    %p143 = por %p141, %p142
    %p144 = scmp.ne.s32.totalorder %s136, %s138
    %p145 = scmp.eq.s32.totalorder %s18, 3
    %p146 = por %p144, %p145
    %p147 = scmp.ne.s32.totalorder %s138, %s139
    %p148 = scmp.eq.s32.totalorder %s18, 0
    %p149 = por %p147, %p148
    %p150 = scmp.ne.s32.totalorder %s138, %s139
    %p151 = scmp.eq.s32.totalorder %s19, 3
    %p152 = por %p150, %p151
    %p154 = scmp.ne.s32.totalorder %s139, %s153
    %p155 = scmp.eq.s32.totalorder %s19, 0
    %p156 = por %p154, %p155
    %p157 = scmp.le.s32.totalorder 1, %s13
    %p158 = scmp.lt.s32.totalorder %s13, 5
    %p159 = pnand %p157, %p158
    %p160 = pneg %p159
    // Predicated region
    $region9: #{simple_cnn_forward.5} parent=5 // pred_check
      _
    $region10: #{simple_cnn_forward.5} parent=5 // pred_check_branch
      %162 = sbr.rel (%p159) target = $region12
    $region11: #{simple_cnn_forward.5} parent=5 // pred_region
      %s163 = ssub.s32 %s13, 1
      // Predicated region
      $region13: #{simple_cnn_forward.5} parent=11 // pred_check
        %p164 = pneg %p86
      $region14: #{simple_cnn_forward.5} parent=11 // pred_check_branch
        %166 = sbr.rel (%p164) target = $region16
      $region15: #{simple_cnn_forward.5} parent=11 // pred_region
        _
      $region16: #{simple_cnn_forward.5} parent=11 // pred_fallthru
        _
      // Predicated region
      $region17: #{simple_cnn_forward.5} parent=11 // pred_check
        %p167 = pneg %p107
      $region18: #{simple_cnn_forward.5} parent=11 // pred_check_branch
        %169 = sbr.rel (%p167) target = $region20
      $region19: #{simple_cnn_forward.5} parent=11 // pred_region
        _
      $region20: #{simple_cnn_forward.5} parent=11 // pred_fallthru
        _
      // Predicated region
      $region21: #{simple_cnn_forward.5} parent=11 // pred_check
        %p170 = pneg %p128
      $region22: #{simple_cnn_forward.5} parent=11 // pred_check_branch
        %172 = sbr.rel (%p170) target = $region24
      $region23: #{simple_cnn_forward.5} parent=11 // pred_region
        _
      $region24: #{simple_cnn_forward.5} parent=11 // pred_fallthru
        _
    $region12: #{simple_cnn_forward.5} parent=5 // pred_fallthru
      _
    %p173 = scmp.lt.s32.totalorder %s13, 4
    // Predicated region
    $region25: #{simple_cnn_forward.5} parent=5 // pred_check
      %p174 = pneg %p173
    $region26: #{simple_cnn_forward.5} parent=5 // pred_check_branch
      %176 = sbr.rel (%p174) target = $region28
    $region27: #{simple_cnn_forward.5} parent=5 // pred_region
      // Predicated region
      $region29: #{simple_cnn_forward.5} parent=27 // pred_check
        %p177 = pneg %p33
      $region30: #{simple_cnn_forward.5} parent=27 // pred_check_branch
        %179 = sbr.rel (%p177) target = $region32
      $region31: #{simple_cnn_forward.5} parent=27 // pred_region
        %s180 = smul.u32 8, %s13
        %p181 = scmp.lt.s32.totalorder %s180, 31
        %s182 = scalar_select %p181, %s180, 31
        %s183 = scalar_lea.vmem %s0, %s182
        %s184 = smul.u32 8, %s13
      $region32: #{simple_cnn_forward.5} parent=27 // pred_fallthru
        _
      // Predicated region
      $region33: #{simple_cnn_forward.5} parent=27 // pred_check
        %p185 = pneg %p59
      $region34: #{simple_cnn_forward.5} parent=27 // pred_check_branch
        %187 = sbr.rel (%p185) target = $region36
      $region35: #{simple_cnn_forward.5} parent=27 // pred_region
        %s188 = smul.u32 128, %s13
        %p189 = scmp.lt.s32.totalorder %s188, 511
        %s190 = scalar_select %p189, %s188, 511
        %s191 = smul.addr %s190, 4
        %s192 = scalar_lea.vmem %s1, %s191
        %s193 = smul.u32 128, %s13
      $region36: #{simple_cnn_forward.5} parent=27 // pred_fallthru
        _
    $region28: #{simple_cnn_forward.5} parent=5 // pred_fallthru
      _
    %p194 = scmp.le.s32.totalorder 1, %s13
    %p195 = scmp.lt.s32.totalorder %s13, 5
    %p196 = pnand %p194, %p195
    %p197 = pneg %p196
    // Predicated region
    $region37: #{simple_cnn_forward.5} parent=5 // pred_check
      _
    $region38: #{simple_cnn_forward.5} parent=5 // pred_check_branch
      %199 = sbr.rel (%p196) target = $region40
    $region39: #{simple_cnn_forward.5} parent=5 // pred_region
      %s200 = ssub.s32 %s13, 1
      %s201 = smul.u32 8, %s18
      %p202 = scmp.lt.s32.totalorder %s201, 31
      %s203 = scalar_select %p202, %s201, 31
      %s204 = scalar_lea.vmem %s0, %s203
      %p205 = pneg %p39
      %p206 = pneg %p36
      %s207 = smul.u32 128, %s18
      %p208 = scmp.lt.s32.totalorder %s207, 511
      %s209 = scalar_select %p208, %s207, 511
      %s210 = smul.addr %s209, 4
      %s211 = scalar_lea.vmem %s1, %s210
      %p212 = pneg %p65
      %p213 = pneg %p62
      %p214 = pneg %p86
      %p215 = pneg %p83
      %p216 = pneg %p107
      %p217 = pneg %p104
      %p218 = pneg %p128
      %p219 = pneg %p125
      %p220 = pneg %p149
      %p221 = pneg %p146
      %s222 = smul.u32 8, %s18
      %p223 = scmp.lt.s32.totalorder %s222, 31
      %s224 = scalar_select %p223, %s222, 31
      %s225 = scalar_lea.vmem %s0, %s224
      %s226 = smul.u32 8, %s18
      %s227 = smul.u32 128, %s18
      %p228 = scmp.lt.s32.totalorder %s227, 511
      %s229 = scalar_select %p228, %s227, 511
      %s230 = smul.addr %s229, 4
      %s231 = scalar_lea.vmem %s1, %s230
      %s232 = smul.u32 128, %s18
      %p234 = scmp.eq.s32.totalorder %s18, 0
      // Predicated region
      $region41: #{simple_cnn_forward.5} parent=39 // pred_check
        %p235 = pneg %p234
      $region42: #{simple_cnn_forward.5} parent=39 // pred_check_branch
        %237 = sbr.rel (%p235) target = $region44
      $region43: #{simple_cnn_forward.5} parent=39 // pred_region
        %238 = vst [vmem:[#allocation2] sm:$0x3] 0.0
      $region44: #{simple_cnn_forward.5} parent=39 // pred_fallthru
        _
      %v239 = vld [vmem:[#allocation2] sm:$0x3]
      %v240 = vld [vmem:[%s225] sm:$0xff]
      %v241 = vld [vmem:[%s231] sm:$0xf]
      %v242 = vld [vmem:[%s231 + $0x4] sm:$0xf]
      %v243 = vld [vmem:[%s231 + $0x8] sm:$0xf]
      %v244 = vld [vmem:[%s231 + $0xc] sm:$0xf]
      %v245 = vld [vmem:[%s231 + $0x10] sm:$0xf]
      %v246 = vld [vmem:[%s231 + $0x14] sm:$0xf]
      %v247 = vld [vmem:[%s231 + $0x18] sm:$0xf]
      %v248 = vld [vmem:[%s231 + $0x1c] sm:$0xf]
      %v249 = vld [vmem:[%s231 + $0x20] sm:$0xf]
      %v250 = vld [vmem:[%s231 + $0x24] sm:$0xf]
      %v251 = vld [vmem:[%s231 + $0x28] sm:$0xf]
      %v252 = vld [vmem:[%s231 + $0x2c] sm:$0xf]
      %v253 = vld [vmem:[%s231 + $0x30] sm:$0xf]
      %v254 = vld [vmem:[%s231 + $0x34] sm:$0xf]
      %v255 = vld [vmem:[%s231 + $0x38] sm:$0xf]
      %v256 = vld [vmem:[%s231 + $0x3c] sm:$0xf]
      %v257 = vld [vmem:[%s231 + $0x40] sm:$0xf]
      %v258 = vld [vmem:[%s231 + $0x44] sm:$0xf]
      %v259 = vld [vmem:[%s231 + $0x48] sm:$0xf]
      %v260 = vld [vmem:[%s231 + $0x4c] sm:$0xf]
      %v261 = vld [vmem:[%s231 + $0x50] sm:$0xf]
      %v262 = vld [vmem:[%s231 + $0x54] sm:$0xf]
      %v263 = vld [vmem:[%s231 + $0x58] sm:$0xf]
      %v264 = vld [vmem:[%s231 + $0x5c] sm:$0xf]
      %v265 = vld [vmem:[%s231 + $0x60] sm:$0xf]
      %v266 = vld [vmem:[%s231 + $0x64] sm:$0xf]
      %v267 = vld [vmem:[%s231 + $0x68] sm:$0xf]
      %v268 = vld [vmem:[%s231 + $0x6c] sm:$0xf]
      %v269 = vld [vmem:[%s231 + $0x70] sm:$0xf]
      %v270 = vld [vmem:[%s231 + $0x74] sm:$0xf]
      %v271 = vld [vmem:[%s231 + $0x78] sm:$0xf]
      %v272 = vld [vmem:[%s231 + $0x7c] sm:$0xf]
      %v273 = vld [vmem:[%s231 + $0x80] sm:$0xf]
      %v274 = vld [vmem:[%s231 + $0x84] sm:$0xf]
      %v275 = vld [vmem:[%s231 + $0x88] sm:$0xf]
      %v276 = vld [vmem:[%s231 + $0x8c] sm:$0xf]
      %v277 = vld [vmem:[%s231 + $0x90] sm:$0xf]
      %v278 = vld [vmem:[%s231 + $0x94] sm:$0xf]
      %v279 = vld [vmem:[%s231 + $0x98] sm:$0xf]
      %v280 = vld [vmem:[%s231 + $0x9c] sm:$0xf]
      %v281 = vld [vmem:[%s231 + $0xa0] sm:$0xf]
      %v282 = vld [vmem:[%s231 + $0xa4] sm:$0xf]
      %v283 = vld [vmem:[%s231 + $0xa8] sm:$0xf]
      %v284 = vld [vmem:[%s231 + $0xac] sm:$0xf]
      %v285 = vld [vmem:[%s231 + $0xb0] sm:$0xf]
      %v286 = vld [vmem:[%s231 + $0xb4] sm:$0xf]
      %v287 = vld [vmem:[%s231 + $0xb8] sm:$0xf]
      %v288 = vld [vmem:[%s231 + $0xbc] sm:$0xf]
      %v289 = vld [vmem:[%s231 + $0xc0] sm:$0xf]
      %v290 = vld [vmem:[%s231 + $0xc4] sm:$0xf]
      %v291 = vld [vmem:[%s231 + $0xc8] sm:$0xf]
      %v292 = vld [vmem:[%s231 + $0xcc] sm:$0xf]
      %v293 = vld [vmem:[%s231 + $0xd0] sm:$0xf]
      %v294 = vld [vmem:[%s231 + $0xd4] sm:$0xf]
      %v295 = vld [vmem:[%s231 + $0xd8] sm:$0xf]
      %v296 = vld [vmem:[%s231 + $0xdc] sm:$0xf]
      %v297 = vld [vmem:[%s231 + $0xe0] sm:$0xf]
      %v298 = vld [vmem:[%s231 + $0xe4] sm:$0xf]
      %v299 = vld [vmem:[%s231 + $0xe8] sm:$0xf]
      %v300 = vld [vmem:[%s231 + $0xec] sm:$0xf]
      %v301 = vld [vmem:[%s231 + $0xf0] sm:$0xf]
      %v302 = vld [vmem:[%s231 + $0xf4] sm:$0xf]
      %v303 = vld [vmem:[%s231 + $0xf8] sm:$0xf]
      %v304 = vld [vmem:[%s231 + $0xfc] sm:$0xf]
      %v305 = vld [vmem:[%s231 + $0x100] sm:$0xf]
      %v306 = vld [vmem:[%s231 + $0x104] sm:$0xf]
      %v307 = vld [vmem:[%s231 + $0x108] sm:$0xf]
      %v308 = vld [vmem:[%s231 + $0x10c] sm:$0xf]
      %v309 = vld [vmem:[%s231 + $0x110] sm:$0xf]
      %v310 = vld [vmem:[%s231 + $0x114] sm:$0xf]
      %v311 = vld [vmem:[%s231 + $0x118] sm:$0xf]
      %v312 = vld [vmem:[%s231 + $0x11c] sm:$0xf]
      %v313 = vld [vmem:[%s231 + $0x120] sm:$0xf]
      %v314 = vld [vmem:[%s231 + $0x124] sm:$0xf]
      %v315 = vld [vmem:[%s231 + $0x128] sm:$0xf]
      %v316 = vld [vmem:[%s231 + $0x12c] sm:$0xf]
      %v317 = vld [vmem:[%s231 + $0x130] sm:$0xf]
      %v318 = vld [vmem:[%s231 + $0x134] sm:$0xf]
      %v319 = vld [vmem:[%s231 + $0x138] sm:$0xf]
      %v320 = vld [vmem:[%s231 + $0x13c] sm:$0xf]
      %v321 = vld [vmem:[%s231 + $0x140] sm:$0xf]
      %v322 = vld [vmem:[%s231 + $0x144] sm:$0xf]
      %v323 = vld [vmem:[%s231 + $0x148] sm:$0xf]
      %v324 = vld [vmem:[%s231 + $0x14c] sm:$0xf]
      %v325 = vld [vmem:[%s231 + $0x150] sm:$0xf]
      %v326 = vld [vmem:[%s231 + $0x154] sm:$0xf]
      %v327 = vld [vmem:[%s231 + $0x158] sm:$0xf]
      %v328 = vld [vmem:[%s231 + $0x15c] sm:$0xf]
      %v329 = vld [vmem:[%s231 + $0x160] sm:$0xf]
      %v330 = vld [vmem:[%s231 + $0x164] sm:$0xf]
      %v331 = vld [vmem:[%s231 + $0x168] sm:$0xf]
      %v332 = vld [vmem:[%s231 + $0x16c] sm:$0xf]
      %v333 = vld [vmem:[%s231 + $0x170] sm:$0xf]
      %v334 = vld [vmem:[%s231 + $0x174] sm:$0xf]
      %v335 = vld [vmem:[%s231 + $0x178] sm:$0xf]
      %v336 = vld [vmem:[%s231 + $0x17c] sm:$0xf]
      %v337 = vld [vmem:[%s231 + $0x180] sm:$0xf]
      %v338 = vld [vmem:[%s231 + $0x184] sm:$0xf]
      %v339 = vld [vmem:[%s231 + $0x188] sm:$0xf]
      %v340 = vld [vmem:[%s231 + $0x18c] sm:$0xf]
      %v341 = vld [vmem:[%s231 + $0x190] sm:$0xf]
      %v342 = vld [vmem:[%s231 + $0x194] sm:$0xf]
      %v343 = vld [vmem:[%s231 + $0x198] sm:$0xf]
      %v344 = vld [vmem:[%s231 + $0x19c] sm:$0xf]
      %v345 = vld [vmem:[%s231 + $0x1a0] sm:$0xf]
      %v346 = vld [vmem:[%s231 + $0x1a4] sm:$0xf]
      %v347 = vld [vmem:[%s231 + $0x1a8] sm:$0xf]
      %v348 = vld [vmem:[%s231 + $0x1ac] sm:$0xf]
      %v349 = vld [vmem:[%s231 + $0x1b0] sm:$0xf]
      %v350 = vld [vmem:[%s231 + $0x1b4] sm:$0xf]
      %v351 = vld [vmem:[%s231 + $0x1b8] sm:$0xf]
      %v352 = vld [vmem:[%s231 + $0x1bc] sm:$0xf]
      %v353 = vld [vmem:[%s231 + $0x1c0] sm:$0xf]
      %v354 = vld [vmem:[%s231 + $0x1c4] sm:$0xf]
      %v355 = vld [vmem:[%s231 + $0x1c8] sm:$0xf]
      %v356 = vld [vmem:[%s231 + $0x1cc] sm:$0xf]
      %v357 = vld [vmem:[%s231 + $0x1d0] sm:$0xf]
      %v358 = vld [vmem:[%s231 + $0x1d4] sm:$0xf]
      %v359 = vld [vmem:[%s231 + $0x1d8] sm:$0xf]
      %v360 = vld [vmem:[%s231 + $0x1dc] sm:$0xf]
      %v361 = vld [vmem:[%s231 + $0x1e0] sm:$0xf]
      %v362 = vld [vmem:[%s231 + $0x1e4] sm:$0xf]
      %v363 = vld [vmem:[%s231 + $0x1e8] sm:$0xf]
      %v364 = vld [vmem:[%s231 + $0x1ec] sm:$0xf]
      %v365 = vld [vmem:[%s231 + $0x1f0] sm:$0xf]
      %v366 = vld [vmem:[%s231 + $0x1f4] sm:$0xf]
      %v367 = vld [vmem:[%s231 + $0x1f8] sm:$0xf]
      %v368 = vld [vmem:[%s231 + $0x1fc] sm:$0xf]
      %v370 = vcombine.high %v240, %v240
      %v372 = vunpack.c.l.s4 1966171168
      %v373 = vunpack.c.0.s8 %v372
      %v374 = vlaneseq
      %v375 = vshrl.u32 %v374, 7
      %v376 = vsub.s32 %v373, %v375
      %v377 = vrot.slane %v240, %v376
      %v379 = vunpack.c.l.s4 1966171168
      %v380 = vunpack.c.0.s8 %v379
      %v381 = vlaneseq
      %v382 = vshrl.u32 %v381, 7
      %v383 = vsub.s32 %v380, %v382
      %v384 = vrot.slane %v370, %v383
      %v385 = vcombine.high %v377, %v377
      %v386 = vcombine.high %v384, %v384
      %v388 = vunpack.c.l.s4 1966171168
      %v389 = vunpack.c.0.s8 %v388
      %v390 = vlaneseq
      %v391 = vshrl.u32 %v390, 7
      %v392 = vsub.s32 %v389, %v391
      %v393 = vrot.slane %v377, %v392
      %v395 = vunpack.c.l.s4 1966171168
      %v396 = vunpack.c.0.s8 %v395
      %v397 = vlaneseq
      %v398 = vshrl.u32 %v397, 7
      %v399 = vsub.s32 %v396, %v398
      %v400 = vrot.slane %v384, %v399
      %v402 = vunpack.c.l.s4 1966171168
      %v403 = vunpack.c.0.s8 %v402
      %v404 = vlaneseq
      %v405 = vshrl.u32 %v404, 7
      %v406 = vsub.s32 %v403, %v405
      %v407 = vrot.slane %v385, %v406
      %v409 = vunpack.c.l.s4 1966171168
      %v410 = vunpack.c.0.s8 %v409
      %v411 = vlaneseq
      %v412 = vshrl.u32 %v411, 7
      %v413 = vsub.s32 %v410, %v412
      %v414 = vrot.slane %v386, %v413
      %v415 = vcombine.high %v393, %v393
      %v416 = vcombine.high %v400, %v400
      %v417 = vcombine.high %v407, %v407
      %v418 = vcombine.high %v414, %v414
      %v555 = vunpack.c.l.b16 %v241
      %v556 = vunpack.c.l.b16 %v242
      %v557 = vunpack.c.l.b16 %v243
      %v558 = vunpack.c.l.b16 %v244
      %v559 = vunpack.c.l.b16 %v245
      %v560 = vunpack.c.l.b16 %v246
      %v561 = vunpack.c.l.b16 %v247
      %v562 = vunpack.c.l.b16 %v248
      %v563 = vunpack.c.l.b16 %v249
      %v564 = vunpack.c.l.b16 %v250
      %v565 = vunpack.c.l.b16 %v251
      %v566 = vunpack.c.l.b16 %v252
      %v567 = vunpack.c.l.b16 %v253
      %v568 = vunpack.c.l.b16 %v254
      %v569 = vunpack.c.l.b16 %v255
      %v570 = vunpack.c.l.b16 %v256
      %v571 = vunpack.c.l.b16 %v257
      %v572 = vunpack.c.l.b16 %v258
      %v573 = vunpack.c.l.b16 %v259
      %v574 = vunpack.c.l.b16 %v260
      %v575 = vunpack.c.l.b16 %v261
      %v576 = vunpack.c.l.b16 %v262
      %v577 = vunpack.c.l.b16 %v263
      %v578 = vunpack.c.l.b16 %v264
      %v579 = vunpack.c.l.b16 %v265
      %v580 = vunpack.c.l.b16 %v266
      %v581 = vunpack.c.l.b16 %v267
      %v582 = vunpack.c.l.b16 %v268
      %v583 = vunpack.c.l.b16 %v269
      %v584 = vunpack.c.l.b16 %v270
      %v585 = vunpack.c.l.b16 %v271
      %v586 = vunpack.c.l.b16 %v272
      %v587 = vunpack.c.l.b16 %v273
      %v588 = vunpack.c.l.b16 %v274
      %v589 = vunpack.c.l.b16 %v275
      %v590 = vunpack.c.l.b16 %v276
      %v591 = vunpack.c.l.b16 %v277
      %v592 = vunpack.c.l.b16 %v278
      %v593 = vunpack.c.l.b16 %v279
      %v594 = vunpack.c.l.b16 %v280
      %v595 = vunpack.c.l.b16 %v281
      %v596 = vunpack.c.l.b16 %v282
      %v597 = vunpack.c.l.b16 %v283
      %v598 = vunpack.c.l.b16 %v284
      %v599 = vunpack.c.l.b16 %v285
      %v600 = vunpack.c.l.b16 %v286
      %v601 = vunpack.c.l.b16 %v287
      %v602 = vunpack.c.l.b16 %v288
      %v603 = vunpack.c.l.b16 %v289
      %v604 = vunpack.c.l.b16 %v290
      %v605 = vunpack.c.l.b16 %v291
      %v606 = vunpack.c.l.b16 %v292
      %v607 = vunpack.c.l.b16 %v293
      %v608 = vunpack.c.l.b16 %v294
      %v609 = vunpack.c.l.b16 %v295
      %v610 = vunpack.c.l.b16 %v296
      %v611 = vunpack.c.l.b16 %v297
      %v612 = vunpack.c.l.b16 %v298
      %v613 = vunpack.c.l.b16 %v299
      %v614 = vunpack.c.l.b16 %v300
      %v615 = vunpack.c.l.b16 %v301
      %v616 = vunpack.c.l.b16 %v302
      %v617 = vunpack.c.l.b16 %v303
      %v618 = vunpack.c.l.b16 %v304
      %v619 = vunpack.c.l.b16 %v305
      %v620 = vunpack.c.l.b16 %v306
      %v621 = vunpack.c.l.b16 %v307
      %v622 = vunpack.c.l.b16 %v308
      %v623 = vunpack.c.l.b16 %v309
      %v624 = vunpack.c.l.b16 %v310
      %v625 = vunpack.c.l.b16 %v311
      %v626 = vunpack.c.l.b16 %v312
      %v627 = vunpack.c.l.b16 %v313
      %v628 = vunpack.c.l.b16 %v314
      %v629 = vunpack.c.l.b16 %v315
      %v630 = vunpack.c.l.b16 %v316
      %v631 = vunpack.c.l.b16 %v317
      %v632 = vunpack.c.l.b16 %v318
      %v633 = vunpack.c.l.b16 %v319
      %v634 = vunpack.c.l.b16 %v320
      %v635 = vunpack.c.l.b16 %v321
      %v636 = vunpack.c.l.b16 %v322
      %v637 = vunpack.c.l.b16 %v323
      %v638 = vunpack.c.l.b16 %v324
      %v639 = vunpack.c.l.b16 %v325
      %v640 = vunpack.c.l.b16 %v326
      %v641 = vunpack.c.l.b16 %v327
      %v642 = vunpack.c.l.b16 %v328
      %v643 = vunpack.c.l.b16 %v329
      %v644 = vunpack.c.l.b16 %v330
      %v645 = vunpack.c.l.b16 %v331
      %v646 = vunpack.c.l.b16 %v332
      %v647 = vunpack.c.l.b16 %v333
      %v648 = vunpack.c.l.b16 %v334
      %v649 = vunpack.c.l.b16 %v335
      %v650 = vunpack.c.l.b16 %v336
      %v651 = vunpack.c.l.b16 %v337
      %v652 = vunpack.c.l.b16 %v338
      %v653 = vunpack.c.l.b16 %v339
      %v654 = vunpack.c.l.b16 %v340
      %v655 = vunpack.c.l.b16 %v341
      %v656 = vunpack.c.l.b16 %v342
      %v657 = vunpack.c.l.b16 %v343
      %v658 = vunpack.c.l.b16 %v344
      %v659 = vunpack.c.l.b16 %v345
      %v660 = vunpack.c.l.b16 %v346
      %v661 = vunpack.c.l.b16 %v347
      %v662 = vunpack.c.l.b16 %v348
      %v663 = vunpack.c.l.b16 %v349
      %v664 = vunpack.c.l.b16 %v350
      %v665 = vunpack.c.l.b16 %v351
      %v666 = vunpack.c.l.b16 %v352
      %v667 = vunpack.c.l.b16 %v353
      %v668 = vunpack.c.l.b16 %v354
      %v669 = vunpack.c.l.b16 %v355
      %v670 = vunpack.c.l.b16 %v356
      %v671 = vunpack.c.l.b16 %v357
      %v672 = vunpack.c.l.b16 %v358
      %v673 = vunpack.c.l.b16 %v359
      %v674 = vunpack.c.l.b16 %v360
      %v675 = vunpack.c.l.b16 %v361
      %v676 = vunpack.c.l.b16 %v362
      %v677 = vunpack.c.l.b16 %v363
      %v678 = vunpack.c.l.b16 %v364
      %v679 = vunpack.c.l.b16 %v365
      %v680 = vunpack.c.l.b16 %v366
      %v681 = vunpack.c.l.b16 %v367
      %v682 = vunpack.c.l.b16 %v368
      %v683 = vpack.c.b16 %v556, %v555
      %v684 = vpack.c.b16 %v558, %v557
      %v685 = vpack.c.b16 %v560, %v559
      %v686 = vpack.c.b16 %v562, %v561
      %v687 = vpack.c.b16 %v564, %v563
      %v688 = vpack.c.b16 %v566, %v565
      %v689 = vpack.c.b16 %v568, %v567
      %v690 = vpack.c.b16 %v570, %v569
      %v691 = vpack.c.b16 %v572, %v571
      %v692 = vpack.c.b16 %v574, %v573
      %v693 = vpack.c.b16 %v576, %v575
      %v694 = vpack.c.b16 %v578, %v577
      %v695 = vpack.c.b16 %v580, %v579
      %v696 = vpack.c.b16 %v582, %v581
      %v697 = vpack.c.b16 %v584, %v583
      %v698 = vpack.c.b16 %v586, %v585
      %v699 = vpack.c.b16 %v588, %v587
      %v700 = vpack.c.b16 %v590, %v589
      %v701 = vpack.c.b16 %v592, %v591
      %v702 = vpack.c.b16 %v594, %v593
      %v703 = vpack.c.b16 %v596, %v595
      %v704 = vpack.c.b16 %v598, %v597
      %v705 = vpack.c.b16 %v600, %v599
      %v706 = vpack.c.b16 %v602, %v601
      %v707 = vpack.c.b16 %v604, %v603
      %v708 = vpack.c.b16 %v606, %v605
      %v709 = vpack.c.b16 %v608, %v607
      %v710 = vpack.c.b16 %v610, %v609
      %v711 = vpack.c.b16 %v612, %v611
      %v712 = vpack.c.b16 %v614, %v613
      %v713 = vpack.c.b16 %v616, %v615
      %v714 = vpack.c.b16 %v618, %v617
      %v715 = vpack.c.b16 %v620, %v619
      %v716 = vpack.c.b16 %v622, %v621
      %v717 = vpack.c.b16 %v624, %v623
      %v718 = vpack.c.b16 %v626, %v625
      %v719 = vpack.c.b16 %v628, %v627
      %v720 = vpack.c.b16 %v630, %v629
      %v721 = vpack.c.b16 %v632, %v631
      %v722 = vpack.c.b16 %v634, %v633
      %v723 = vpack.c.b16 %v636, %v635
      %v724 = vpack.c.b16 %v638, %v637
      %v725 = vpack.c.b16 %v640, %v639
      %v726 = vpack.c.b16 %v642, %v641
      %v727 = vpack.c.b16 %v644, %v643
      %v728 = vpack.c.b16 %v646, %v645
      %v729 = vpack.c.b16 %v648, %v647
      %v730 = vpack.c.b16 %v650, %v649
      %v731 = vpack.c.b16 %v652, %v651
      %v732 = vpack.c.b16 %v654, %v653
      %v733 = vpack.c.b16 %v656, %v655
      %v734 = vpack.c.b16 %v658, %v657
      %v735 = vpack.c.b16 %v660, %v659
      %v736 = vpack.c.b16 %v662, %v661
      %v737 = vpack.c.b16 %v664, %v663
      %v738 = vpack.c.b16 %v666, %v665
      %v739 = vpack.c.b16 %v668, %v667
      %v740 = vpack.c.b16 %v670, %v669
      %v741 = vpack.c.b16 %v672, %v671
      %v742 = vpack.c.b16 %v674, %v673
      %v743 = vpack.c.b16 %v676, %v675
      %v744 = vpack.c.b16 %v678, %v677
      %v745 = vpack.c.b16 %v680, %v679
      %v746 = vpack.c.b16 %v682, %v681
      %811 = vmatprep.subr.bf16.mxu0 0
      %812 = vmatpush1.bf16.msra.mxu0 %v683
      %813 = vmatprep.subr.bf16.mxu0 0
      %814 = vmatpush1.bf16.msra.mxu0 %v684
      %815 = vmatprep.subr.bf16.mxu0 0
      %816 = vmatpush1.bf16.msra.mxu0 %v685
      %817 = vmatprep.subr.bf16.mxu0 0
      %818 = vmatpush1.bf16.msra.mxu0 %v686
      %819 = vmatprep.subr.bf16.mxu0 0
      %820 = vmatpush1.bf16.msra.mxu0 %v687
      %821 = vmatprep.subr.bf16.mxu0 0
      %822 = vmatpush1.bf16.msra.mxu0 %v688
      %823 = vmatprep.subr.bf16.mxu0 0
      %824 = vmatpush1.bf16.msra.mxu0 %v689
      %825 = vmatprep.subr.bf16.mxu0 0
      %826 = vmatpush1.bf16.msra.mxu0 %v690
      %827 = vmatprep.subr.bf16.mxu0 0
      %828 = vmatpush1.bf16.msra.mxu0 %v691
      %829 = vmatprep.subr.bf16.mxu0 0
      %830 = vmatpush1.bf16.msra.mxu0 %v692
      %831 = vmatprep.subr.bf16.mxu0 0
      %832 = vmatpush1.bf16.msra.mxu0 %v693
      %833 = vmatprep.subr.bf16.mxu0 0
      %834 = vmatpush1.bf16.msra.mxu0 %v694
      %835 = vmatprep.subr.bf16.mxu0 0
      %836 = vmatpush1.bf16.msra.mxu0 %v695
      %837 = vmatprep.subr.bf16.mxu0 0
      %838 = vmatpush1.bf16.msra.mxu0 %v696
      %839 = vmatprep.subr.bf16.mxu0 0
      %840 = vmatpush1.bf16.msra.mxu0 %v697
      %841 = vmatprep.subr.bf16.mxu0 0
      %842 = vmatpush1.bf16.msra.mxu0 %v698
      %843 = vmatprep.mubr.bf16.mxu0 %v407
      %844 = vmatmul.mubr.bf16.gmra.mrb[0].mxu0 %v393
      %v845 = vpop.f32.mrb[0].mxu0
      %v846 = vadd.f32 0.0, %v845
      %v847 = vpop.f32.mrb[0].mxu0
      %v848 = vpop.f32.mrb[0].mxu0
      %v849 = vpop.f32.mrb[0].mxu0
      %850 = vdwg.mxu0
      %851 = vmatprep.subr.bf16.mxu0 0
      %852 = vmatpush1.bf16.msra.mxu0 %v699
      %853 = vmatprep.subr.bf16.mxu0 0
      %854 = vmatpush1.bf16.msra.mxu0 %v700
      %855 = vmatprep.subr.bf16.mxu0 0
      %856 = vmatpush1.bf16.msra.mxu0 %v701
      %857 = vmatprep.subr.bf16.mxu0 0
      %858 = vmatpush1.bf16.msra.mxu0 %v702
      %859 = vmatprep.subr.bf16.mxu0 0
      %860 = vmatpush1.bf16.msra.mxu0 %v703
      %861 = vmatprep.subr.bf16.mxu0 0
      %862 = vmatpush1.bf16.msra.mxu0 %v704
      %863 = vmatprep.subr.bf16.mxu0 0
      %864 = vmatpush1.bf16.msra.mxu0 %v705
      %865 = vmatprep.subr.bf16.mxu0 0
      %866 = vmatpush1.bf16.msra.mxu0 %v706
      %867 = vmatprep.subr.bf16.mxu0 0
      %868 = vmatpush1.bf16.msra.mxu0 %v707
      %869 = vmatprep.subr.bf16.mxu0 0
      %870 = vmatpush1.bf16.msra.mxu0 %v708
      %871 = vmatprep.subr.bf16.mxu0 0
      %872 = vmatpush1.bf16.msra.mxu0 %v709
      %873 = vmatprep.subr.bf16.mxu0 0
      %874 = vmatpush1.bf16.msra.mxu0 %v710
      %875 = vmatprep.subr.bf16.mxu0 0
      %876 = vmatpush1.bf16.msra.mxu0 %v711
      %877 = vmatprep.subr.bf16.mxu0 0
      %878 = vmatpush1.bf16.msra.mxu0 %v712
      %879 = vmatprep.subr.bf16.mxu0 0
      %880 = vmatpush1.bf16.msra.mxu0 %v713
      %881 = vmatprep.subr.bf16.mxu0 0
      %882 = vmatpush1.bf16.msra.mxu0 %v714
      %883 = vmatprep.mubr.bf16.mxu0 %v417
      %884 = vmatmul.mubr.bf16.gmra.mrb[0].mxu0 %v415
      %v885 = vpop.f32.mrb[0].mxu0
      %v886 = vadd.f32 %v846, %v885
      %v887 = vpop.f32.mrb[0].mxu0
      %v888 = vpop.f32.mrb[0].mxu0
      %v889 = vpop.f32.mrb[0].mxu0
      %890 = vdwg.mxu0
      %891 = vmatprep.subr.bf16.mxu0 0
      %892 = vmatpush1.bf16.msra.mxu0 %v715
      %893 = vmatprep.subr.bf16.mxu0 0
      %894 = vmatpush1.bf16.msra.mxu0 %v716
      %895 = vmatprep.subr.bf16.mxu0 0
      %896 = vmatpush1.bf16.msra.mxu0 %v717
      %897 = vmatprep.subr.bf16.mxu0 0
      %898 = vmatpush1.bf16.msra.mxu0 %v718
      %899 = vmatprep.subr.bf16.mxu0 0
      %900 = vmatpush1.bf16.msra.mxu0 %v719
      %901 = vmatprep.subr.bf16.mxu0 0
      %902 = vmatpush1.bf16.msra.mxu0 %v720
      %903 = vmatprep.subr.bf16.mxu0 0
      %904 = vmatpush1.bf16.msra.mxu0 %v721
      %905 = vmatprep.subr.bf16.mxu0 0
      %906 = vmatpush1.bf16.msra.mxu0 %v722
      %907 = vmatprep.subr.bf16.mxu0 0
      %908 = vmatpush1.bf16.msra.mxu0 %v723
      %909 = vmatprep.subr.bf16.mxu0 0
      %910 = vmatpush1.bf16.msra.mxu0 %v724
      %911 = vmatprep.subr.bf16.mxu0 0
      %912 = vmatpush1.bf16.msra.mxu0 %v725
      %913 = vmatprep.subr.bf16.mxu0 0
      %914 = vmatpush1.bf16.msra.mxu0 %v726
      %915 = vmatprep.subr.bf16.mxu0 0
      %916 = vmatpush1.bf16.msra.mxu0 %v727
      %917 = vmatprep.subr.bf16.mxu0 0
      %918 = vmatpush1.bf16.msra.mxu0 %v728
      %919 = vmatprep.subr.bf16.mxu0 0
      %920 = vmatpush1.bf16.msra.mxu0 %v729
      %921 = vmatprep.subr.bf16.mxu0 0
      %922 = vmatpush1.bf16.msra.mxu0 %v730
      %923 = vmatprep.mubr.bf16.mxu0 %v414
      %924 = vmatmul.mubr.bf16.gmra.mrb[0].mxu0 %v400
      %v925 = vpop.f32.mrb[0].mxu0
      %v926 = vadd.f32 %v886, %v925
      %v927 = vpop.f32.mrb[0].mxu0
      %v928 = vpop.f32.mrb[0].mxu0
      %v929 = vpop.f32.mrb[0].mxu0
      %930 = vdwg.mxu0
      %931 = vmatprep.subr.bf16.mxu0 0
      %932 = vmatpush1.bf16.msra.mxu0 %v731
      %933 = vmatprep.subr.bf16.mxu0 0
      %934 = vmatpush1.bf16.msra.mxu0 %v732
      %935 = vmatprep.subr.bf16.mxu0 0
      %936 = vmatpush1.bf16.msra.mxu0 %v733
      %937 = vmatprep.subr.bf16.mxu0 0
      %938 = vmatpush1.bf16.msra.mxu0 %v734
      %939 = vmatprep.subr.bf16.mxu0 0
      %940 = vmatpush1.bf16.msra.mxu0 %v735
      %941 = vmatprep.subr.bf16.mxu0 0
      %942 = vmatpush1.bf16.msra.mxu0 %v736
      %943 = vmatprep.subr.bf16.mxu0 0
      %944 = vmatpush1.bf16.msra.mxu0 %v737
      %945 = vmatprep.subr.bf16.mxu0 0
      %946 = vmatpush1.bf16.msra.mxu0 %v738
      %947 = vmatprep.subr.bf16.mxu0 0
      %948 = vmatpush1.bf16.msra.mxu0 %v739
      %949 = vmatprep.subr.bf16.mxu0 0
      %950 = vmatpush1.bf16.msra.mxu0 %v740
      %951 = vmatprep.subr.bf16.mxu0 0
      %952 = vmatpush1.bf16.msra.mxu0 %v741
      %953 = vmatprep.subr.bf16.mxu0 0
      %954 = vmatpush1.bf16.msra.mxu0 %v742
      %955 = vmatprep.subr.bf16.mxu0 0
      %956 = vmatpush1.bf16.msra.mxu0 %v743
      %957 = vmatprep.subr.bf16.mxu0 0
      %958 = vmatpush1.bf16.msra.mxu0 %v744
      %959 = vmatprep.subr.bf16.mxu0 0
      %960 = vmatpush1.bf16.msra.mxu0 %v745
      %961 = vmatprep.subr.bf16.mxu0 0
      %962 = vmatpush1.bf16.msra.mxu0 %v746
      %963 = vmatprep.mubr.bf16.mxu0 %v418
      %964 = vmatmul.mubr.bf16.gmra.mrb[0].mxu0 %v416
      %v965 = vpop.f32.mrb[0].mxu0
      %v966 = vadd.f32 %v926, %v965
      %v967 = vpop.f32.mrb[0].mxu0
      %v968 = vpop.f32.mrb[0].mxu0
      %v969 = vpop.f32.mrb[0].mxu0
      %970 = vdwg.mxu0
      %v971 = vadd.f32 %v239, %v966
      %972 = vst [vmem:[#allocation2] sm:$0x3] %v971
      %p973 = scmp.eq.s32.totalorder %s18, 3
      // Predicated region
      $region45: #{simple_cnn_forward.5} parent=39 // pred_check
        %p974 = pneg %p973
      $region46: #{simple_cnn_forward.5} parent=39 // pred_check_branch
        %976 = sbr.rel (%p974) target = $region48
      $region47: #{simple_cnn_forward.5} parent=39 // pred_region
        %v977 = vld [vmem:[#allocation2] sm:$0x3]
        %v978 = vld [vmem:[%s2] sm:$0x1]
        %v980 = vlaneseq
        %v981 = vshrl.u32 %v980, 7
        %v982 = vsub.s32 0, %v981
        %v983 = vrot.slane %v978, %v982
        %v985 = vadd.f32 %v977, %v983
        %v986 = vmax.f32 %v985, 0.0
        %v987 = vld [vmem:[%s3] sm:$0x1]
        %v989 = vlaneseq
        %v990 = vshrl.u32 %v989, 7
        %v991 = vsub.s32 0, %v990
        %v992 = vrot.slane %v987, %v991
        %v994 = vmul.f32 %v986, %v992
        %vm995 = vcmask 1041408
        %v996 = vsel %vm995, %v994, 0.0
        %997 = vadd.xlane.f32.xlu0 %v996
        %v998 = vpop.xlane.xlu0 %997
        %v999 = vld [vmem:[#allocation3] sm:$0x1]
        %v1001 = vlaneseq
        %v1002 = vshrl.u32 %v1001, 7
        %v1003 = vsub.s32 0, %v1002
        %v1004 = vrot.slane %v999, %v1003
        %v1006 = vadd.f32 %v998, %v1004
        %vm1007 = vcmask 1024
        %1008 = vst.msk [vmem:[%s5] sm:$0x3] %vm1007, %v1006
      $region48: #{simple_cnn_forward.5} parent=39 // pred_fallthru
        _
      // Predicated region
      $region49: #{simple_cnn_forward.5} parent=39 // pred_check
        %p1009 = pneg %p146
      $region50: #{simple_cnn_forward.5} parent=39 // pred_check_branch
        %1011 = sbr.rel (%p1009) target = $region52
      $region51: #{simple_cnn_forward.5} parent=39 // pred_region
        _
      $region52: #{simple_cnn_forward.5} parent=39 // pred_fallthru
        _
      // Predicated region
      $region53: #{simple_cnn_forward.5} parent=39 // pred_check
        %p1012 = pneg %p146
      $region54: #{simple_cnn_forward.5} parent=39 // pred_check_branch
        %1014 = sbr.rel (%p1012) target = $region56
      $region55: #{simple_cnn_forward.5} parent=39 // pred_region
        _
      $region56: #{simple_cnn_forward.5} parent=39 // pred_fallthru
        _
    $region40: #{simple_cnn_forward.5} parent=5 // pred_fallthru
      _
    %p1015 = scmp.le.s32.totalorder 2, %s13
    // Predicated region
    $region57: #{simple_cnn_forward.5} parent=5 // pred_check
      %p1016 = pneg %p1015
    $region58: #{simple_cnn_forward.5} parent=5 // pred_check_branch
      %1018 = sbr.rel (%p1016) target = $region60
    $region59: #{simple_cnn_forward.5} parent=5 // pred_region
      %s1019 = ssub.s32 %s13, 2
    $region60: #{simple_cnn_forward.5} parent=5 // pred_fallthru
      _
  $region6: #{simple_cnn_forward.5} parent=0 // loop_footer
    %s17 = sadd.s32 1, %s13
  $region7: #{simple_cnn_forward.5} parent=0 // loop_footer_branch
    %12 = sbr.rel target = $region3
  $region8: #{simple_cnn_forward.5} parent=0 // loop_exit
    _

</llo_original>
